<compile_context>
chip_gen: v6e
topology: v6e:2x2x1
jax: 0.10.0
libtpu: 0.0.40
codegen_flags: <defaults>
</compile_context>

<pallas_src>
import functools

import jax
import jax.numpy as jnp
from jax.experimental import pallas as pl
from jax.experimental.pallas import tpu as pltpu

C_IN = 3
C_OUT = 16
KH = KW = 3
DIL_H, DIL_W = 2, 3
PAD_H, PAD_W = 0, 1
K_RAW = C_IN * KH * KW          # 27 taps, order (c_in, kh, kw)
CO_BLK = 8                      # output channels per grid step (2 groups of 8)


def _conv_sigmoid_kernel(x_ref, w_ref, b_ref, o_ref, tap_ref, *, h_out, w_out):
    """Direct dilated conv + sigmoid for one image / one output-channel group.

    x_ref  : [C_IN, H, W_pad]        VMEM  (one image, width already padded)
    w_ref  : [C_OUT, K_RAW]          SMEM  (scalar weights, tap order (c,kh,kw))
    b_ref  : [C_OUT]                 SMEM
    o_ref  : [CO_BLK, h_out, w_out]  VMEM  (one image, one channel group)
    tap_ref: [K_RAW, h_out, w_out]   VMEM scratch (pre-shifted input taps)
    """
    co0 = pl.program_id(1) * CO_BLK

    # Build the 27 dilation-shifted input planes once; all channels reuse them.
    tap = 0
    for c in range(C_IN):
        for kh in range(KH):
            for kw in range(KW):
                tap_ref[tap] = x_ref[c,
                                     kh * DIL_H: kh * DIL_H + h_out,
                                     kw * DIL_W: kw * DIL_W + w_out]
                tap += 1

    # 27 scalar-vector MACs per output channel on the VPU, then fused sigmoid.
    for co in range(CO_BLK):
        cg = co0 + co
        acc = jnp.zeros((h_out, w_out), jnp.float32)
        for t in range(K_RAW):
            acc = acc + w_ref[cg, t] * tap_ref[t]
        o_ref[co] = jax.nn.sigmoid(acc + b_ref[cg])


def conv2d_sigmoid(x, weight, bias):
    """x: [N, C_in, H, W] (NCHW), weight: [C_out, C_in, KH, KW], bias: [C_out].

    Returns sigmoid(conv2d(x, weight, bias)) with padding=(0,1), dilation=(2,3),
    stride 1, as [N, C_out, H_out, W_out].
    """
    n, c_in, h, w = x.shape
    assert c_in == C_IN
    h_out = h + 2 * PAD_H - DIL_H * (KH - 1)
    w_out = w + 2 * PAD_W - DIL_W * (KW - 1)
    assert h_out > 0 and w_out > 0, "input too small for dilated kernel"

    # Width padding only (PAD_H == 0).  One cheap copy of x; read once by the kernel.
    x_pad = jnp.pad(x.astype(jnp.float32),
                    ((0, 0), (0, 0), (PAD_H, PAD_H), (PAD_W, PAD_W)))
    h_pad, w_pad = h + 2 * PAD_H, w + 2 * PAD_W

    w2 = weight.reshape(C_OUT, K_RAW).astype(jnp.float32)   # tap order (c, kh, kw)
    b = bias.astype(jnp.float32)

    kernel = functools.partial(_conv_sigmoid_kernel, h_out=h_out, w_out=w_out)
    n_groups = C_OUT // CO_BLK   # 2 -> >=2 grid steps even for a single image

    out = pl.pallas_call(
        kernel,
        out_shape=jax.ShapeDtypeStruct((n, C_OUT, h_out, w_out), jnp.float32),
        grid=(n, n_groups),
        in_specs=[
            # one whole (padded) image per step; reused across the channel axis
            pl.BlockSpec((None, C_IN, h_pad, w_pad), lambda i, j: (i, 0, 0, 0)),
            # small scalar tables live in SMEM
            pl.BlockSpec(memory_space=pltpu.MemorySpace.SMEM),   # weights [16, 27]
            pl.BlockSpec(memory_space=pltpu.MemorySpace.SMEM),   # bias    [16]
        ],
        out_specs=pl.BlockSpec((None, CO_BLK, h_out, w_out),
                               lambda i, j: (i, j, 0, 0)),
        scratch_shapes=[pltpu.VMEM((K_RAW, h_out, w_out), jnp.float32)],
        compiler_params=pltpu.CompilerParams(
            dimension_semantics=("parallel", "parallel")),
    )(x_pad, w2, b)
    return out


def init_params(key):
    # PyTorch Conv2d default init: uniform(-1/sqrt(fan_in), 1/sqrt(fan_in))
    kw_key, kb_key = jax.random.split(key)
    fan_in = C_IN * KH * KW
    bound = 1.0 / jnp.sqrt(float(fan_in))
    weight = jax.random.uniform(kw_key, (C_OUT, C_IN, KH, KW),
                                minval=-bound, maxval=bound, dtype=jnp.float32)
    bias = jax.random.uniform(kb_key, (C_OUT,),
                              minval=-bound, maxval=bound, dtype=jnp.float32)
    return weight, bias


if __name__ == "__main__":
    key = jax.random.PRNGKey(0)
    k_x, k_p = jax.random.split(key)

    # small NCHW input consistent with the module (original x1 was 1x3x64x64)
    x1 = jax.random.normal(k_x, (2, 3, 16, 16), dtype=jnp.float32)
    weight, bias = init_params(k_p)

    y = conv2d_sigmoid(x1, weight, bias)
    jax.block_until_ready(y)

    # shape check: H_out = 16 - 2*2 = 12, W_out = 16 + 2 - 3*2 = 12
    assert y.shape == (2, C_OUT, 12, 12), y.shape

    # cross-check against plain-JAX reference conv + sigmoid
    ref = jax.lax.conv_general_dilated(
        x1, weight, window_strides=(1, 1),
        padding=((PAD_H, PAD_H), (PAD_W, PAD_W)),
        rhs_dilation=(DIL_H, DIL_W),
        dimension_numbers=("NCHW", "OIHW", "NCHW"))
    ref = jax.nn.sigmoid(ref + bias[None, :, None, None])
    assert bool(jnp.max(jnp.abs(y - ref)) < 1e-5)

    print("KERNEL_OK")
</pallas_src>

<mosaic_0001>
module attributes {stable_mosaic.version = 11 : i64} {
  func.func @_conv_sigmoid_kernel(%arg0: i32, %arg1: i32, %arg2: memref<1x3x16x18xf32, #tpu.memory_space<vmem>>, %arg3: memref<16x27xf32, #tpu.memory_space<smem>>, %arg4: memref<16xf32, #tpu.memory_space<smem>>, %arg5: memref<1x8x12x12xf32, #tpu.memory_space<vmem>>, %arg6: memref<27x12x12xf32, #tpu.memory_space<vmem>>) attributes {dimension_semantics = [#tpu.dimension_semantics<parallel>, #tpu.dimension_semantics<parallel>], iteration_bounds = array<i64: 2, 2>, scalar_prefetch = 0 : i64, scratch_operands = 1 : i64, tpu.core_type = #tpu.core_type<tc>, window_params = [{transform_indices = @transform_0, window_bounds = array<i64: 1, 3, 16, 18>}, {transform_indices = @transform_1, window_bounds = array<i64: 16, 27>}, {transform_indices = @transform_2, window_bounds = array<i64: 16>}, {transform_indices = @transform_3, window_bounds = array<i64: 1, 8, 12, 12>}]} {
    %c8_i32 = arith.constant 8 : i32
    %0 = arith.muli %arg1, %c8_i32 : i32
    %c0 = arith.constant 0 : index
    %c0_0 = arith.constant 0 : index
    %c0_1 = arith.constant 0 : index
    %c0_2 = arith.constant 0 : index
    %1 = vector.load %arg2[%c0, %c0_0, %c0_1, %c0_2] : memref<1x3x16x18xf32, #tpu.memory_space<vmem>>, vector<1x1x12x12xf32>
    %2 = vector.shape_cast %1 : vector<1x1x12x12xf32> to vector<12x12xf32>
    %c0_3 = arith.constant 0 : index
    %c0_4 = arith.constant 0 : index
    %c0_5 = arith.constant 0 : index
    %3 = vector.load %arg6[%c0_3, %c0_4, %c0_5] : memref<27x12x12xf32, #tpu.memory_space<vmem>>, vector<1x12x12xf32>
    %4 = vector.shape_cast %3 : vector<1x12x12xf32> to vector<12x12xf32>
    %5 = vector.shape_cast %2 : vector<12x12xf32> to vector<1x12x12xf32>
    tpu.vector_store %arg6[%c0_3, %c0_4, %c0_5], %5 {strides = array<i32>} : memref<27x12x12xf32, #tpu.memory_space<vmem>>, vector<1x12x12xf32>,
    %c0_6 = arith.constant 0 : index
    %c0_7 = arith.constant 0 : index
    %c0_8 = arith.constant 0 : index
    %c3 = arith.constant 3 : index
    %6 = vector.load %arg2[%c0_6, %c0_7, %c0_8, %c3] : memref<1x3x16x18xf32, #tpu.memory_space<vmem>>, vector<1x1x12x12xf32>
    %7 = vector.shape_cast %6 : vector<1x1x12x12xf32> to vector<12x12xf32>
    %c1 = arith.constant 1 : index
    %c0_9 = arith.constant 0 : index
    %c0_10 = arith.constant 0 : index
    %8 = vector.load %arg6[%c1, %c0_9, %c0_10] : memref<27x12x12xf32, #tpu.memory_space<vmem>>, vector<1x12x12xf32>
    %9 = vector.shape_cast %8 : vector<1x12x12xf32> to vector<12x12xf32>
    %10 = vector.shape_cast %7 : vector<12x12xf32> to vector<1x12x12xf32>
    tpu.vector_store %arg6[%c1, %c0_9, %c0_10], %10 {strides = array<i32>} : memref<27x12x12xf32, #tpu.memory_space<vmem>>, vector<1x12x12xf32>,
    %c0_11 = arith.constant 0 : index
    %c0_12 = arith.constant 0 : index
    %c0_13 = arith.constant 0 : index
    %c6 = arith.constant 6 : index
    %11 = vector.load %arg2[%c0_11, %c0_12, %c0_13, %c6] : memref<1x3x16x18xf32, #tpu.memory_space<vmem>>, vector<1x1x12x12xf32>
    %12 = vector.shape_cast %11 : vector<1x1x12x12xf32> to vector<12x12xf32>
    %c2 = arith.constant 2 : index
    %c0_14 = arith.constant 0 : index
    %c0_15 = arith.constant 0 : index
    %13 = vector.load %arg6[%c2, %c0_14, %c0_15] : memref<27x12x12xf32, #tpu.memory_space<vmem>>, vector<1x12x12xf32>
    %14 = vector.shape_cast %13 : vector<1x12x12xf32> to vector<12x12xf32>
    %15 = vector.shape_cast %12 : vector<12x12xf32> to vector<1x12x12xf32>
    tpu.vector_store %arg6[%c2, %c0_14, %c0_15], %15 {strides = array<i32>} : memref<27x12x12xf32, #tpu.memory_space<vmem>>, vector<1x12x12xf32>,
    %c0_16 = arith.constant 0 : index
    %c0_17 = arith.constant 0 : index
    %c2_18 = arith.constant 2 : index
    %c0_19 = arith.constant 0 : index
    %16 = vector.load %arg2[%c0_16, %c0_17, %c2_18, %c0_19] : memref<1x3x16x18xf32, #tpu.memory_space<vmem>>, vector<1x1x12x12xf32>
    %17 = vector.shape_cast %16 : vector<1x1x12x12xf32> to vector<12x12xf32>
    %c3_20 = arith.constant 3 : index
    %c0_21 = arith.constant 0 : index
    %c0_22 = arith.constant 0 : index
    %18 = vector.load %arg6[%c3_20, %c0_21, %c0_22] : memref<27x12x12xf32, #tpu.memory_space<vmem>>, vector<1x12x12xf32>
    %19 = vector.shape_cast %18 : vector<1x12x12xf32> to vector<12x12xf32>
    %20 = vector.shape_cast %17 : vector<12x12xf32> to vector<1x12x12xf32>
    tpu.vector_store %arg6[%c3_20, %c0_21, %c0_22], %20 {strides = array<i32>} : memref<27x12x12xf32, #tpu.memory_space<vmem>>, vector<1x12x12xf32>,
    %c0_23 = arith.constant 0 : index
    %c0_24 = arith.constant 0 : index
    %c2_25 = arith.constant 2 : index
    %c3_26 = arith.constant 3 : index
    %21 = vector.load %arg2[%c0_23, %c0_24, %c2_25, %c3_26] : memref<1x3x16x18xf32, #tpu.memory_space<vmem>>, vector<1x1x12x12xf32>
    %22 = vector.shape_cast %21 : vector<1x1x12x12xf32> to vector<12x12xf32>
    %c4 = arith.constant 4 : index
    %c0_27 = arith.constant 0 : index
    %c0_28 = arith.constant 0 : index
    %23 = vector.load %arg6[%c4, %c0_27, %c0_28] : memref<27x12x12xf32, #tpu.memory_space<vmem>>, vector<1x12x12xf32>
    %24 = vector.shape_cast %23 : vector<1x12x12xf32> to vector<12x12xf32>
    %25 = vector.shape_cast %22 : vector<12x12xf32> to vector<1x12x12xf32>
    tpu.vector_store %arg6[%c4, %c0_27, %c0_28], %25 {strides = array<i32>} : memref<27x12x12xf32, #tpu.memory_space<vmem>>, vector<1x12x12xf32>,
    %c0_29 = arith.constant 0 : index
    %c0_30 = arith.constant 0 : index
    %c2_31 = arith.constant 2 : index
    %c6_32 = arith.constant 6 : index
    %26 = vector.load %arg2[%c0_29, %c0_30, %c2_31, %c6_32] : memref<1x3x16x18xf32, #tpu.memory_space<vmem>>, vector<1x1x12x12xf32>
    %27 = vector.shape_cast %26 : vector<1x1x12x12xf32> to vector<12x12xf32>
    %c5 = arith.constant 5 : index
    %c0_33 = arith.constant 0 : index
    %c0_34 = arith.constant 0 : index
    %28 = vector.load %arg6[%c5, %c0_33, %c0_34] : memref<27x12x12xf32, #tpu.memory_space<vmem>>, vector<1x12x12xf32>
    %29 = vector.shape_cast %28 : vector<1x12x12xf32> to vector<12x12xf32>
    %30 = vector.shape_cast %27 : vector<12x12xf32> to vector<1x12x12xf32>
    tpu.vector_store %arg6[%c5, %c0_33, %c0_34], %30 {strides = array<i32>} : memref<27x12x12xf32, #tpu.memory_space<vmem>>, vector<1x12x12xf32>,
    %c0_35 = arith.constant 0 : index
    %c0_36 = arith.constant 0 : index
    %c4_37 = arith.constant 4 : index
    %c0_38 = arith.constant 0 : index
    %31 = vector.load %arg2[%c0_35, %c0_36, %c4_37, %c0_38] : memref<1x3x16x18xf32, #tpu.memory_space<vmem>>, vector<1x1x12x12xf32>
    %32 = vector.shape_cast %31 : vector<1x1x12x12xf32> to vector<12x12xf32>
    %c6_39 = arith.constant 6 : index
    %c0_40 = arith.constant 0 : index
    %c0_41 = arith.constant 0 : index
    %33 = vector.load %arg6[%c6_39, %c0_40, %c0_41] : memref<27x12x12xf32, #tpu.memory_space<vmem>>, vector<1x12x12xf32>
    %34 = vector.shape_cast %33 : vector<1x12x12xf32> to vector<12x12xf32>
    %35 = vector.shape_cast %32 : vector<12x12xf32> to vector<1x12x12xf32>
    tpu.vector_store %arg6[%c6_39, %c0_40, %c0_41], %35 {strides = array<i32>} : memref<27x12x12xf32, #tpu.memory_space<vmem>>, vector<1x12x12xf32>,
    %c0_42 = arith.constant 0 : index
    %c0_43 = arith.constant 0 : index
    %c4_44 = arith.constant 4 : index
    %c3_45 = arith.constant 3 : index
    %36 = vector.load %arg2[%c0_42, %c0_43, %c4_44, %c3_45] : memref<1x3x16x18xf32, #tpu.memory_space<vmem>>, vector<1x1x12x12xf32>
    %37 = vector.shape_cast %36 : vector<1x1x12x12xf32> to vector<12x12xf32>
    %c7 = arith.constant 7 : index
    %c0_46 = arith.constant 0 : index
    %c0_47 = arith.constant 0 : index
    %38 = vector.load %arg6[%c7, %c0_46, %c0_47] : memref<27x12x12xf32, #tpu.memory_space<vmem>>, vector<1x12x12xf32>
    %39 = vector.shape_cast %38 : vector<1x12x12xf32> to vector<12x12xf32>
    %40 = vector.shape_cast %37 : vector<12x12xf32> to vector<1x12x12xf32>
    tpu.vector_store %arg6[%c7, %c0_46, %c0_47], %40 {strides = array<i32>} : memref<27x12x12xf32, #tpu.memory_space<vmem>>, vector<1x12x12xf32>,
    %c0_48 = arith.constant 0 : index
    %c0_49 = arith.constant 0 : index
    %c4_50 = arith.constant 4 : index
    %c6_51 = arith.constant 6 : index
    %41 = vector.load %arg2[%c0_48, %c0_49, %c4_50, %c6_51] : memref<1x3x16x18xf32, #tpu.memory_space<vmem>>, vector<1x1x12x12xf32>
    %42 = vector.shape_cast %41 : vector<1x1x12x12xf32> to vector<12x12xf32>
    %c8 = arith.constant 8 : index
    %c0_52 = arith.constant 0 : index
    %c0_53 = arith.constant 0 : index
    %43 = vector.load %arg6[%c8, %c0_52, %c0_53] : memref<27x12x12xf32, #tpu.memory_space<vmem>>, vector<1x12x12xf32>
    %44 = vector.shape_cast %43 : vector<1x12x12xf32> to vector<12x12xf32>
    %45 = vector.shape_cast %42 : vector<12x12xf32> to vector<1x12x12xf32>
    tpu.vector_store %arg6[%c8, %c0_52, %c0_53], %45 {strides = array<i32>} : memref<27x12x12xf32, #tpu.memory_space<vmem>>, vector<1x12x12xf32>,
    %c0_54 = arith.constant 0 : index
    %c1_55 = arith.constant 1 : index
    %c0_56 = arith.constant 0 : index
    %c0_57 = arith.constant 0 : index
    %46 = vector.load %arg2[%c0_54, %c1_55, %c0_56, %c0_57] : memref<1x3x16x18xf32, #tpu.memory_space<vmem>>, vector<1x1x12x12xf32>
    %47 = vector.shape_cast %46 : vector<1x1x12x12xf32> to vector<12x12xf32>
    %c9 = arith.constant 9 : index
    %c0_58 = arith.constant 0 : index
    %c0_59 = arith.constant 0 : index
    %48 = vector.load %arg6[%c9, %c0_58, %c0_59] : memref<27x12x12xf32, #tpu.memory_space<vmem>>, vector<1x12x12xf32>
    %49 = vector.shape_cast %48 : vector<1x12x12xf32> to vector<12x12xf32>
    %50 = vector.shape_cast %47 : vector<12x12xf32> to vector<1x12x12xf32>
    tpu.vector_store %arg6[%c9, %c0_58, %c0_59], %50 {strides = array<i32>} : memref<27x12x12xf32, #tpu.memory_space<vmem>>, vector<1x12x12xf32>,
    %c0_60 = arith.constant 0 : index
    %c1_61 = arith.constant 1 : index
    %c0_62 = arith.constant 0 : index
    %c3_63 = arith.constant 3 : index
    %51 = vector.load %arg2[%c0_60, %c1_61, %c0_62, %c3_63] : memref<1x3x16x18xf32, #tpu.memory_space<vmem>>, vector<1x1x12x12xf32>
    %52 = vector.shape_cast %51 : vector<1x1x12x12xf32> to vector<12x12xf32>
    %c10 = arith.constant 10 : index
    %c0_64 = arith.constant 0 : index
    %c0_65 = arith.constant 0 : index
    %53 = vector.load %arg6[%c10, %c0_64, %c0_65] : memref<27x12x12xf32, #tpu.memory_space<vmem>>, vector<1x12x12xf32>
    %54 = vector.shape_cast %53 : vector<1x12x12xf32> to vector<12x12xf32>
    %55 = vector.shape_cast %52 : vector<12x12xf32> to vector<1x12x12xf32>
    tpu.vector_store %arg6[%c10, %c0_64, %c0_65], %55 {strides = array<i32>} : memref<27x12x12xf32, #tpu.memory_space<vmem>>, vector<1x12x12xf32>,
    %c0_66 = arith.constant 0 : index
    %c1_67 = arith.constant 1 : index
    %c0_68 = arith.constant 0 : index
    %c6_69 = arith.constant 6 : index
    %56 = vector.load %arg2[%c0_66, %c1_67, %c0_68, %c6_69] : memref<1x3x16x18xf32, #tpu.memory_space<vmem>>, vector<1x1x12x12xf32>
    %57 = vector.shape_cast %56 : vector<1x1x12x12xf32> to vector<12x12xf32>
    %c11 = arith.constant 11 : index
    %c0_70 = arith.constant 0 : index
    %c0_71 = arith.constant 0 : index
    %58 = vector.load %arg6[%c11, %c0_70, %c0_71] : memref<27x12x12xf32, #tpu.memory_space<vmem>>, vector<1x12x12xf32>
    %59 = vector.shape_cast %58 : vector<1x12x12xf32> to vector<12x12xf32>
    %60 = vector.shape_cast %57 : vector<12x12xf32> to vector<1x12x12xf32>
    tpu.vector_store %arg6[%c11, %c0_70, %c0_71], %60 {strides = array<i32>} : memref<27x12x12xf32, #tpu.memory_space<vmem>>, vector<1x12x12xf32>,
    %c0_72 = arith.constant 0 : index
    %c1_73 = arith.constant 1 : index
    %c2_74 = arith.constant 2 : index
    %c0_75 = arith.constant 0 : index
    %61 = vector.load %arg2[%c0_72, %c1_73, %c2_74, %c0_75] : memref<1x3x16x18xf32, #tpu.memory_space<vmem>>, vector<1x1x12x12xf32>
    %62 = vector.shape_cast %61 : vector<1x1x12x12xf32> to vector<12x12xf32>
    %c12 = arith.constant 12 : index
    %c0_76 = arith.constant 0 : index
    %c0_77 = arith.constant 0 : index
    %63 = vector.load %arg6[%c12, %c0_76, %c0_77] : memref<27x12x12xf32, #tpu.memory_space<vmem>>, vector<1x12x12xf32>
    %64 = vector.shape_cast %63 : vector<1x12x12xf32> to vector<12x12xf32>
    %65 = vector.shape_cast %62 : vector<12x12xf32> to vector<1x12x12xf32>
    tpu.vector_store %arg6[%c12, %c0_76, %c0_77], %65 {strides = array<i32>} : memref<27x12x12xf32, #tpu.memory_space<vmem>>, vector<1x12x12xf32>,
    %c0_78 = arith.constant 0 : index
    %c1_79 = arith.constant 1 : index
    %c2_80 = arith.constant 2 : index
    %c3_81 = arith.constant 3 : index
    %66 = vector.load %arg2[%c0_78, %c1_79, %c2_80, %c3_81] : memref<1x3x16x18xf32, #tpu.memory_space<vmem>>, vector<1x1x12x12xf32>
    %67 = vector.shape_cast %66 : vector<1x1x12x12xf32> to vector<12x12xf32>
    %c13 = arith.constant 13 : index
    %c0_82 = arith.constant 0 : index
    %c0_83 = arith.constant 0 : index
    %68 = vector.load %arg6[%c13, %c0_82, %c0_83] : memref<27x12x12xf32, #tpu.memory_space<vmem>>, vector<1x12x12xf32>
    %69 = vector.shape_cast %68 : vector<1x12x12xf32> to vector<12x12xf32>
    %70 = vector.shape_cast %67 : vector<12x12xf32> to vector<1x12x12xf32>
    tpu.vector_store %arg6[%c13, %c0_82, %c0_83], %70 {strides = array<i32>} : memref<27x12x12xf32, #tpu.memory_space<vmem>>, vector<1x12x12xf32>,
    %c0_84 = arith.constant 0 : index
    %c1_85 = arith.constant 1 : index
    %c2_86 = arith.constant 2 : index
    %c6_87 = arith.constant 6 : index
    %71 = vector.load %arg2[%c0_84, %c1_85, %c2_86, %c6_87] : memref<1x3x16x18xf32, #tpu.memory_space<vmem>>, vector<1x1x12x12xf32>
    %72 = vector.shape_cast %71 : vector<1x1x12x12xf32> to vector<12x12xf32>
    %c14 = arith.constant 14 : index
    %c0_88 = arith.constant 0 : index
    %c0_89 = arith.constant 0 : index
    %73 = vector.load %arg6[%c14, %c0_88, %c0_89] : memref<27x12x12xf32, #tpu.memory_space<vmem>>, vector<1x12x12xf32>
    %74 = vector.shape_cast %73 : vector<1x12x12xf32> to vector<12x12xf32>
    %75 = vector.shape_cast %72 : vector<12x12xf32> to vector<1x12x12xf32>
    tpu.vector_store %arg6[%c14, %c0_88, %c0_89], %75 {strides = array<i32>} : memref<27x12x12xf32, #tpu.memory_space<vmem>>, vector<1x12x12xf32>,
    %c0_90 = arith.constant 0 : index
    %c1_91 = arith.constant 1 : index
    %c4_92 = arith.constant 4 : index
    %c0_93 = arith.constant 0 : index
    %76 = vector.load %arg2[%c0_90, %c1_91, %c4_92, %c0_93] : memref<1x3x16x18xf32, #tpu.memory_space<vmem>>, vector<1x1x12x12xf32>
    %77 = vector.shape_cast %76 : vector<1x1x12x12xf32> to vector<12x12xf32>
    %c15 = arith.constant 15 : index
    %c0_94 = arith.constant 0 : index
    %c0_95 = arith.constant 0 : index
    %78 = vector.load %arg6[%c15, %c0_94, %c0_95] : memref<27x12x12xf32, #tpu.memory_space<vmem>>, vector<1x12x12xf32>
    %79 = vector.shape_cast %78 : vector<1x12x12xf32> to vector<12x12xf32>
    %80 = vector.shape_cast %77 : vector<12x12xf32> to vector<1x12x12xf32>
    tpu.vector_store %arg6[%c15, %c0_94, %c0_95], %80 {strides = array<i32>} : memref<27x12x12xf32, #tpu.memory_space<vmem>>, vector<1x12x12xf32>,
    %c0_96 = arith.constant 0 : index
    %c1_97 = arith.constant 1 : index
    %c4_98 = arith.constant 4 : index
    %c3_99 = arith.constant 3 : index
    %81 = vector.load %arg2[%c0_96, %c1_97, %c4_98, %c3_99] : memref<1x3x16x18xf32, #tpu.memory_space<vmem>>, vector<1x1x12x12xf32>
    %82 = vector.shape_cast %81 : vector<1x1x12x12xf32> to vector<12x12xf32>
    %c16 = arith.constant 16 : index
    %c0_100 = arith.constant 0 : index
    %c0_101 = arith.constant 0 : index
    %83 = vector.load %arg6[%c16, %c0_100, %c0_101] : memref<27x12x12xf32, #tpu.memory_space<vmem>>, vector<1x12x12xf32>
    %84 = vector.shape_cast %83 : vector<1x12x12xf32> to vector<12x12xf32>
    %85 = vector.shape_cast %82 : vector<12x12xf32> to vector<1x12x12xf32>
    tpu.vector_store %arg6[%c16, %c0_100, %c0_101], %85 {strides = array<i32>} : memref<27x12x12xf32, #tpu.memory_space<vmem>>, vector<1x12x12xf32>,
    %c0_102 = arith.constant 0 : index
    %c1_103 = arith.constant 1 : index
    %c4_104 = arith.constant 4 : index
    %c6_105 = arith.constant 6 : index
    %86 = vector.load %arg2[%c0_102, %c1_103, %c4_104, %c6_105] : memref<1x3x16x18xf32, #tpu.memory_space<vmem>>, vector<1x1x12x12xf32>
    %87 = vector.shape_cast %86 : vector<1x1x12x12xf32> to vector<12x12xf32>
    %c17 = arith.constant 17 : index
    %c0_106 = arith.constant 0 : index
    %c0_107 = arith.constant 0 : index
    %88 = vector.load %arg6[%c17, %c0_106, %c0_107] : memref<27x12x12xf32, #tpu.memory_space<vmem>>, vector<1x12x12xf32>
    %89 = vector.shape_cast %88 : vector<1x12x12xf32> to vector<12x12xf32>
    %90 = vector.shape_cast %87 : vector<12x12xf32> to vector<1x12x12xf32>
    tpu.vector_store %arg6[%c17, %c0_106, %c0_107], %90 {strides = array<i32>} : memref<27x12x12xf32, #tpu.memory_space<vmem>>, vector<1x12x12xf32>,
    %c0_108 = arith.constant 0 : index
    %c2_109 = arith.constant 2 : index
    %c0_110 = arith.constant 0 : index
    %c0_111 = arith.constant 0 : index
    %91 = vector.load %arg2[%c0_108, %c2_109, %c0_110, %c0_111] : memref<1x3x16x18xf32, #tpu.memory_space<vmem>>, vector<1x1x12x12xf32>
    %92 = vector.shape_cast %91 : vector<1x1x12x12xf32> to vector<12x12xf32>
    %c18 = arith.constant 18 : index
    %c0_112 = arith.constant 0 : index
    %c0_113 = arith.constant 0 : index
    %93 = vector.load %arg6[%c18, %c0_112, %c0_113] : memref<27x12x12xf32, #tpu.memory_space<vmem>>, vector<1x12x12xf32>
    %94 = vector.shape_cast %93 : vector<1x12x12xf32> to vector<12x12xf32>
    %95 = vector.shape_cast %92 : vector<12x12xf32> to vector<1x12x12xf32>
    tpu.vector_store %arg6[%c18, %c0_112, %c0_113], %95 {strides = array<i32>} : memref<27x12x12xf32, #tpu.memory_space<vmem>>, vector<1x12x12xf32>,
    %c0_114 = arith.constant 0 : index
    %c2_115 = arith.constant 2 : index
    %c0_116 = arith.constant 0 : index
    %c3_117 = arith.constant 3 : index
    %96 = vector.load %arg2[%c0_114, %c2_115, %c0_116, %c3_117] : memref<1x3x16x18xf32, #tpu.memory_space<vmem>>, vector<1x1x12x12xf32>
    %97 = vector.shape_cast %96 : vector<1x1x12x12xf32> to vector<12x12xf32>
    %c19 = arith.constant 19 : index
    %c0_118 = arith.constant 0 : index
    %c0_119 = arith.constant 0 : index
    %98 = vector.load %arg6[%c19, %c0_118, %c0_119] : memref<27x12x12xf32, #tpu.memory_space<vmem>>, vector<1x12x12xf32>
    %99 = vector.shape_cast %98 : vector<1x12x12xf32> to vector<12x12xf32>
    %100 = vector.shape_cast %97 : vector<12x12xf32> to vector<1x12x12xf32>
    tpu.vector_store %arg6[%c19, %c0_118, %c0_119], %100 {strides = array<i32>} : memref<27x12x12xf32, #tpu.memory_space<vmem>>, vector<1x12x12xf32>,
    %c0_120 = arith.constant 0 : index
    %c2_121 = arith.constant 2 : index
    %c0_122 = arith.constant 0 : index
    %c6_123 = arith.constant 6 : index
    %101 = vector.load %arg2[%c0_120, %c2_121, %c0_122, %c6_123] : memref<1x3x16x18xf32, #tpu.memory_space<vmem>>, vector<1x1x12x12xf32>
    %102 = vector.shape_cast %101 : vector<1x1x12x12xf32> to vector<12x12xf32>
    %c20 = arith.constant 20 : index
    %c0_124 = arith.constant 0 : index
    %c0_125 = arith.constant 0 : index
    %103 = vector.load %arg6[%c20, %c0_124, %c0_125] : memref<27x12x12xf32, #tpu.memory_space<vmem>>, vector<1x12x12xf32>
    %104 = vector.shape_cast %103 : vector<1x12x12xf32> to vector<12x12xf32>
    %105 = vector.shape_cast %102 : vector<12x12xf32> to vector<1x12x12xf32>
    tpu.vector_store %arg6[%c20, %c0_124, %c0_125], %105 {strides = array<i32>} : memref<27x12x12xf32, #tpu.memory_space<vmem>>, vector<1x12x12xf32>,
    %c0_126 = arith.constant 0 : index
    %c2_127 = arith.constant 2 : index
    %c2_128 = arith.constant 2 : index
    %c0_129 = arith.constant 0 : index
    %106 = vector.load %arg2[%c0_126, %c2_127, %c2_128, %c0_129] : memref<1x3x16x18xf32, #tpu.memory_space<vmem>>, vector<1x1x12x12xf32>
    %107 = vector.shape_cast %106 : vector<1x1x12x12xf32> to vector<12x12xf32>
    %c21 = arith.constant 21 : index
    %c0_130 = arith.constant 0 : index
    %c0_131 = arith.constant 0 : index
    %108 = vector.load %arg6[%c21, %c0_130, %c0_131] : memref<27x12x12xf32, #tpu.memory_space<vmem>>, vector<1x12x12xf32>
    %109 = vector.shape_cast %108 : vector<1x12x12xf32> to vector<12x12xf32>
    %110 = vector.shape_cast %107 : vector<12x12xf32> to vector<1x12x12xf32>
    tpu.vector_store %arg6[%c21, %c0_130, %c0_131], %110 {strides = array<i32>} : memref<27x12x12xf32, #tpu.memory_space<vmem>>, vector<1x12x12xf32>,
    %c0_132 = arith.constant 0 : index
    %c2_133 = arith.constant 2 : index
    %c2_134 = arith.constant 2 : index
    %c3_135 = arith.constant 3 : index
    %111 = vector.load %arg2[%c0_132, %c2_133, %c2_134, %c3_135] : memref<1x3x16x18xf32, #tpu.memory_space<vmem>>, vector<1x1x12x12xf32>
    %112 = vector.shape_cast %111 : vector<1x1x12x12xf32> to vector<12x12xf32>
    %c22 = arith.constant 22 : index
    %c0_136 = arith.constant 0 : index
    %c0_137 = arith.constant 0 : index
    %113 = vector.load %arg6[%c22, %c0_136, %c0_137] : memref<27x12x12xf32, #tpu.memory_space<vmem>>, vector<1x12x12xf32>
    %114 = vector.shape_cast %113 : vector<1x12x12xf32> to vector<12x12xf32>
    %115 = vector.shape_cast %112 : vector<12x12xf32> to vector<1x12x12xf32>
    tpu.vector_store %arg6[%c22, %c0_136, %c0_137], %115 {strides = array<i32>} : memref<27x12x12xf32, #tpu.memory_space<vmem>>, vector<1x12x12xf32>,
    %c0_138 = arith.constant 0 : index
    %c2_139 = arith.constant 2 : index
    %c2_140 = arith.constant 2 : index
    %c6_141 = arith.constant 6 : index
    %116 = vector.load %arg2[%c0_138, %c2_139, %c2_140, %c6_141] : memref<1x3x16x18xf32, #tpu.memory_space<vmem>>, vector<1x1x12x12xf32>
    %117 = vector.shape_cast %116 : vector<1x1x12x12xf32> to vector<12x12xf32>
    %c23 = arith.constant 23 : index
    %c0_142 = arith.constant 0 : index
    %c0_143 = arith.constant 0 : index
    %118 = vector.load %arg6[%c23, %c0_142, %c0_143] : memref<27x12x12xf32, #tpu.memory_space<vmem>>, vector<1x12x12xf32>
    %119 = vector.shape_cast %118 : vector<1x12x12xf32> to vector<12x12xf32>
    %120 = vector.shape_cast %117 : vector<12x12xf32> to vector<1x12x12xf32>
    tpu.vector_store %arg6[%c23, %c0_142, %c0_143], %120 {strides = array<i32>} : memref<27x12x12xf32, #tpu.memory_space<vmem>>, vector<1x12x12xf32>,
    %c0_144 = arith.constant 0 : index
    %c2_145 = arith.constant 2 : index
    %c4_146 = arith.constant 4 : index
    %c0_147 = arith.constant 0 : index
    %121 = vector.load %arg2[%c0_144, %c2_145, %c4_146, %c0_147] : memref<1x3x16x18xf32, #tpu.memory_space<vmem>>, vector<1x1x12x12xf32>
    %122 = vector.shape_cast %121 : vector<1x1x12x12xf32> to vector<12x12xf32>
    %c24 = arith.constant 24 : index
    %c0_148 = arith.constant 0 : index
    %c0_149 = arith.constant 0 : index
    %123 = vector.load %arg6[%c24, %c0_148, %c0_149] : memref<27x12x12xf32, #tpu.memory_space<vmem>>, vector<1x12x12xf32>
    %124 = vector.shape_cast %123 : vector<1x12x12xf32> to vector<12x12xf32>
    %125 = vector.shape_cast %122 : vector<12x12xf32> to vector<1x12x12xf32>
    tpu.vector_store %arg6[%c24, %c0_148, %c0_149], %125 {strides = array<i32>} : memref<27x12x12xf32, #tpu.memory_space<vmem>>, vector<1x12x12xf32>,
    %c0_150 = arith.constant 0 : index
    %c2_151 = arith.constant 2 : index
    %c4_152 = arith.constant 4 : index
    %c3_153 = arith.constant 3 : index
    %126 = vector.load %arg2[%c0_150, %c2_151, %c4_152, %c3_153] : memref<1x3x16x18xf32, #tpu.memory_space<vmem>>, vector<1x1x12x12xf32>
    %127 = vector.shape_cast %126 : vector<1x1x12x12xf32> to vector<12x12xf32>
    %c25 = arith.constant 25 : index
    %c0_154 = arith.constant 0 : index
    %c0_155 = arith.constant 0 : index
    %128 = vector.load %arg6[%c25, %c0_154, %c0_155] : memref<27x12x12xf32, #tpu.memory_space<vmem>>, vector<1x12x12xf32>
    %129 = vector.shape_cast %128 : vector<1x12x12xf32> to vector<12x12xf32>
    %130 = vector.shape_cast %127 : vector<12x12xf32> to vector<1x12x12xf32>
    tpu.vector_store %arg6[%c25, %c0_154, %c0_155], %130 {strides = array<i32>} : memref<27x12x12xf32, #tpu.memory_space<vmem>>, vector<1x12x12xf32>,
    %c0_156 = arith.constant 0 : index
    %c2_157 = arith.constant 2 : index
    %c4_158 = arith.constant 4 : index
    %c6_159 = arith.constant 6 : index
    %131 = vector.load %arg2[%c0_156, %c2_157, %c4_158, %c6_159] : memref<1x3x16x18xf32, #tpu.memory_space<vmem>>, vector<1x1x12x12xf32>
    %132 = vector.shape_cast %131 : vector<1x1x12x12xf32> to vector<12x12xf32>
    %c26 = arith.constant 26 : index
    %c0_160 = arith.constant 0 : index
    %c0_161 = arith.constant 0 : index
    %133 = vector.load %arg6[%c26, %c0_160, %c0_161] : memref<27x12x12xf32, #tpu.memory_space<vmem>>, vector<1x12x12xf32>
    %134 = vector.shape_cast %133 : vector<1x12x12xf32> to vector<12x12xf32>
    %135 = vector.shape_cast %132 : vector<12x12xf32> to vector<1x12x12xf32>
    tpu.vector_store %arg6[%c26, %c0_160, %c0_161], %135 {strides = array<i32>} : memref<27x12x12xf32, #tpu.memory_space<vmem>>, vector<1x12x12xf32>,
    %c0_i32 = arith.constant 0 : i32
    %136 = arith.addi %0, %c0_i32 : i32
    %cst = arith.constant 0.000000e+00 : f32
    %137 = vector.broadcast %cst : f32 to vector<12x12xf32>
    %138 = arith.index_cast %136 : i32 to index
    %c0_162 = arith.constant 0 : index
    %139 = memref.load %arg3[%138, %c0_162] : memref<16x27xf32, #tpu.memory_space<smem>>
    %c0_163 = arith.constant 0 : index
    %c0_164 = arith.constant 0 : index
    %c0_165 = arith.constant 0 : index
    %140 = vector.load %arg6[%c0_163, %c0_164, %c0_165] : memref<27x12x12xf32, #tpu.memory_space<vmem>>, vector<1x12x12xf32>
    %141 = vector.shape_cast %140 : vector<1x12x12xf32> to vector<12x12xf32>
    %142 = vector.broadcast %139 : f32 to vector<12x12xf32>
    %143 = arith.mulf %142, %141 : vector<12x12xf32>
    %144 = arith.addf %137, %143 : vector<12x12xf32>
    %145 = arith.index_cast %136 : i32 to index
    %c1_166 = arith.constant 1 : index
    %146 = memref.load %arg3[%145, %c1_166] : memref<16x27xf32, #tpu.memory_space<smem>>
    %c1_167 = arith.constant 1 : index
    %c0_168 = arith.constant 0 : index
    %c0_169 = arith.constant 0 : index
    %147 = vector.load %arg6[%c1_167, %c0_168, %c0_169] : memref<27x12x12xf32, #tpu.memory_space<vmem>>, vector<1x12x12xf32>
    %148 = vector.shape_cast %147 : vector<1x12x12xf32> to vector<12x12xf32>
    %149 = vector.broadcast %146 : f32 to vector<12x12xf32>
    %150 = arith.mulf %149, %148 : vector<12x12xf32>
    %151 = arith.addf %144, %150 : vector<12x12xf32>
    %152 = arith.index_cast %136 : i32 to index
    %c2_170 = arith.constant 2 : index
    %153 = memref.load %arg3[%152, %c2_170] : memref<16x27xf32, #tpu.memory_space<smem>>
    %c2_171 = arith.constant 2 : index
    %c0_172 = arith.constant 0 : index
    %c0_173 = arith.constant 0 : index
    %154 = vector.load %arg6[%c2_171, %c0_172, %c0_173] : memref<27x12x12xf32, #tpu.memory_space<vmem>>, vector<1x12x12xf32>
    %155 = vector.shape_cast %154 : vector<1x12x12xf32> to vector<12x12xf32>
    %156 = vector.broadcast %153 : f32 to vector<12x12xf32>
    %157 = arith.mulf %156, %155 : vector<12x12xf32>
    %158 = arith.addf %151, %157 : vector<12x12xf32>
    %159 = arith.index_cast %136 : i32 to index
    %c3_174 = arith.constant 3 : index
    %160 = memref.load %arg3[%159, %c3_174] : memref<16x27xf32, #tpu.memory_space<smem>>
    %c3_175 = arith.constant 3 : index
    %c0_176 = arith.constant 0 : index
    %c0_177 = arith.constant 0 : index
    %161 = vector.load %arg6[%c3_175, %c0_176, %c0_177] : memref<27x12x12xf32, #tpu.memory_space<vmem>>, vector<1x12x12xf32>
    %162 = vector.shape_cast %161 : vector<1x12x12xf32> to vector<12x12xf32>
    %163 = vector.broadcast %160 : f32 to vector<12x12xf32>
    %164 = arith.mulf %163, %162 : vector<12x12xf32>
    %165 = arith.addf %158, %164 : vector<12x12xf32>
    %166 = arith.index_cast %136 : i32 to index
    %c4_178 = arith.constant 4 : index
    %167 = memref.load %arg3[%166, %c4_178] : memref<16x27xf32, #tpu.memory_space<smem>>
    %c4_179 = arith.constant 4 : index
    %c0_180 = arith.constant 0 : index
    %c0_181 = arith.constant 0 : index
    %168 = vector.load %arg6[%c4_179, %c0_180, %c0_181] : memref<27x12x12xf32, #tpu.memory_space<vmem>>, vector<1x12x12xf32>
    %169 = vector.shape_cast %168 : vector<1x12x12xf32> to vector<12x12xf32>
    %170 = vector.broadcast %167 : f32 to vector<12x12xf32>
    %171 = arith.mulf %170, %169 : vector<12x12xf32>
    %172 = arith.addf %165, %171 : vector<12x12xf32>
    %173 = arith.index_cast %136 : i32 to index
    %c5_182 = arith.constant 5 : index
    %174 = memref.load %arg3[%173, %c5_182] : memref<16x27xf32, #tpu.memory_space<smem>>
    %c5_183 = arith.constant 5 : index
    %c0_184 = arith.constant 0 : index
    %c0_185 = arith.constant 0 : index
    %175 = vector.load %arg6[%c5_183, %c0_184, %c0_185] : memref<27x12x12xf32, #tpu.memory_space<vmem>>, vector<1x12x12xf32>
    %176 = vector.shape_cast %175 : vector<1x12x12xf32> to vector<12x12xf32>
    %177 = vector.broadcast %174 : f32 to vector<12x12xf32>
    %178 = arith.mulf %177, %176 : vector<12x12xf32>
    %179 = arith.addf %172, %178 : vector<12x12xf32>
    %180 = arith.index_cast %136 : i32 to index
    %c6_186 = arith.constant 6 : index
    %181 = memref.load %arg3[%180, %c6_186] : memref<16x27xf32, #tpu.memory_space<smem>>
    %c6_187 = arith.constant 6 : index
    %c0_188 = arith.constant 0 : index
    %c0_189 = arith.constant 0 : index
    %182 = vector.load %arg6[%c6_187, %c0_188, %c0_189] : memref<27x12x12xf32, #tpu.memory_space<vmem>>, vector<1x12x12xf32>
    %183 = vector.shape_cast %182 : vector<1x12x12xf32> to vector<12x12xf32>
    %184 = vector.broadcast %181 : f32 to vector<12x12xf32>
    %185 = arith.mulf %184, %183 : vector<12x12xf32>
    %186 = arith.addf %179, %185 : vector<12x12xf32>
    %187 = arith.index_cast %136 : i32 to index
    %c7_190 = arith.constant 7 : index
    %188 = memref.load %arg3[%187, %c7_190] : memref<16x27xf32, #tpu.memory_space<smem>>
    %c7_191 = arith.constant 7 : index
    %c0_192 = arith.constant 0 : index
    %c0_193 = arith.constant 0 : index
    %189 = vector.load %arg6[%c7_191, %c0_192, %c0_193] : memref<27x12x12xf32, #tpu.memory_space<vmem>>, vector<1x12x12xf32>
    %190 = vector.shape_cast %189 : vector<1x12x12xf32> to vector<12x12xf32>
    %191 = vector.broadcast %188 : f32 to vector<12x12xf32>
    %192 = arith.mulf %191, %190 : vector<12x12xf32>
    %193 = arith.addf %186, %192 : vector<12x12xf32>
    %194 = arith.index_cast %136 : i32 to index
    %c8_194 = arith.constant 8 : index
    %195 = memref.load %arg3[%194, %c8_194] : memref<16x27xf32, #tpu.memory_space<smem>>
    %c8_195 = arith.constant 8 : index
    %c0_196 = arith.constant 0 : index
    %c0_197 = arith.constant 0 : index
    %196 = vector.load %arg6[%c8_195, %c0_196, %c0_197] : memref<27x12x12xf32, #tpu.memory_space<vmem>>, vector<1x12x12xf32>
    %197 = vector.shape_cast %196 : vector<1x12x12xf32> to vector<12x12xf32>
    %198 = vector.broadcast %195 : f32 to vector<12x12xf32>
    %199 = arith.mulf %198, %197 : vector<12x12xf32>
    %200 = arith.addf %193, %199 : vector<12x12xf32>
    %201 = arith.index_cast %136 : i32 to index
    %c9_198 = arith.constant 9 : index
    %202 = memref.load %arg3[%201, %c9_198] : memref<16x27xf32, #tpu.memory_space<smem>>
    %c9_199 = arith.constant 9 : index
    %c0_200 = arith.constant 0 : index
    %c0_201 = arith.constant 0 : index
    %203 = vector.load %arg6[%c9_199, %c0_200, %c0_201] : memref<27x12x12xf32, #tpu.memory_space<vmem>>, vector<1x12x12xf32>
    %204 = vector.shape_cast %203 : vector<1x12x12xf32> to vector<12x12xf32>
    %205 = vector.broadcast %202 : f32 to vector<12x12xf32>
    %206 = arith.mulf %205, %204 : vector<12x12xf32>
    %207 = arith.addf %200, %206 : vector<12x12xf32>
    %208 = arith.index_cast %136 : i32 to index
    %c10_202 = arith.constant 10 : index
    %209 = memref.load %arg3[%208, %c10_202] : memref<16x27xf32, #tpu.memory_space<smem>>
    %c10_203 = arith.constant 10 : index
    %c0_204 = arith.constant 0 : index
    %c0_205 = arith.constant 0 : index
    %210 = vector.load %arg6[%c10_203, %c0_204, %c0_205] : memref<27x12x12xf32, #tpu.memory_space<vmem>>, vector<1x12x12xf32>
    %211 = vector.shape_cast %210 : vector<1x12x12xf32> to vector<12x12xf32>
    %212 = vector.broadcast %209 : f32 to vector<12x12xf32>
    %213 = arith.mulf %212, %211 : vector<12x12xf32>
    %214 = arith.addf %207, %213 : vector<12x12xf32>
    %215 = arith.index_cast %136 : i32 to index
    %c11_206 = arith.constant 11 : index
    %216 = memref.load %arg3[%215, %c11_206] : memref<16x27xf32, #tpu.memory_space<smem>>
    %c11_207 = arith.constant 11 : index
    %c0_208 = arith.constant 0 : index
    %c0_209 = arith.constant 0 : index
    %217 = vector.load %arg6[%c11_207, %c0_208, %c0_209] : memref<27x12x12xf32, #tpu.memory_space<vmem>>, vector<1x12x12xf32>
    %218 = vector.shape_cast %217 : vector<1x12x12xf32> to vector<12x12xf32>
    %219 = vector.broadcast %216 : f32 to vector<12x12xf32>
    %220 = arith.mulf %219, %218 : vector<12x12xf32>
    %221 = arith.addf %214, %220 : vector<12x12xf32>
    %222 = arith.index_cast %136 : i32 to index
    %c12_210 = arith.constant 12 : index
    %223 = memref.load %arg3[%222, %c12_210] : memref<16x27xf32, #tpu.memory_space<smem>>
    %c12_211 = arith.constant 12 : index
    %c0_212 = arith.constant 0 : index
    %c0_213 = arith.constant 0 : index
    %224 = vector.load %arg6[%c12_211, %c0_212, %c0_213] : memref<27x12x12xf32, #tpu.memory_space<vmem>>, vector<1x12x12xf32>
    %225 = vector.shape_cast %224 : vector<1x12x12xf32> to vector<12x12xf32>
    %226 = vector.broadcast %223 : f32 to vector<12x12xf32>
    %227 = arith.mulf %226, %225 : vector<12x12xf32>
    %228 = arith.addf %221, %227 : vector<12x12xf32>
    %229 = arith.index_cast %136 : i32 to index
    %c13_214 = arith.constant 13 : index
    %230 = memref.load %arg3[%229, %c13_214] : memref<16x27xf32, #tpu.memory_space<smem>>
    %c13_215 = arith.constant 13 : index
    %c0_216 = arith.constant 0 : index
    %c0_217 = arith.constant 0 : index
    %231 = vector.load %arg6[%c13_215, %c0_216, %c0_217] : memref<27x12x12xf32, #tpu.memory_space<vmem>>, vector<1x12x12xf32>
    %232 = vector.shape_cast %231 : vector<1x12x12xf32> to vector<12x12xf32>
    %233 = vector.broadcast %230 : f32 to vector<12x12xf32>
    %234 = arith.mulf %233, %232 : vector<12x12xf32>
    %235 = arith.addf %228, %234 : vector<12x12xf32>
    %236 = arith.index_cast %136 : i32 to index
    %c14_218 = arith.constant 14 : index
    %237 = memref.load %arg3[%236, %c14_218] : memref<16x27xf32, #tpu.memory_space<smem>>
    %c14_219 = arith.constant 14 : index
    %c0_220 = arith.constant 0 : index
    %c0_221 = arith.constant 0 : index
    %238 = vector.load %arg6[%c14_219, %c0_220, %c0_221] : memref<27x12x12xf32, #tpu.memory_space<vmem>>, vector<1x12x12xf32>
    %239 = vector.shape_cast %238 : vector<1x12x12xf32> to vector<12x12xf32>
    %240 = vector.broadcast %237 : f32 to vector<12x12xf32>
    %241 = arith.mulf %240, %239 : vector<12x12xf32>
    %242 = arith.addf %235, %241 : vector<12x12xf32>
    %243 = arith.index_cast %136 : i32 to index
    %c15_222 = arith.constant 15 : index
    %244 = memref.load %arg3[%243, %c15_222] : memref<16x27xf32, #tpu.memory_space<smem>>
    %c15_223 = arith.constant 15 : index
    %c0_224 = arith.constant 0 : index
    %c0_225 = arith.constant 0 : index
    %245 = vector.load %arg6[%c15_223, %c0_224, %c0_225] : memref<27x12x12xf32, #tpu.memory_space<vmem>>, vector<1x12x12xf32>
    %246 = vector.shape_cast %245 : vector<1x12x12xf32> to vector<12x12xf32>
    %247 = vector.broadcast %244 : f32 to vector<12x12xf32>
    %248 = arith.mulf %247, %246 : vector<12x12xf32>
    %249 = arith.addf %242, %248 : vector<12x12xf32>
    %250 = arith.index_cast %136 : i32 to index
    %c16_226 = arith.constant 16 : index
    %251 = memref.load %arg3[%250, %c16_226] : memref<16x27xf32, #tpu.memory_space<smem>>
    %c16_227 = arith.constant 16 : index
    %c0_228 = arith.constant 0 : index
    %c0_229 = arith.constant 0 : index
    %252 = vector.load %arg6[%c16_227, %c0_228, %c0_229] : memref<27x12x12xf32, #tpu.memory_space<vmem>>, vector<1x12x12xf32>
    %253 = vector.shape_cast %252 : vector<1x12x12xf32> to vector<12x12xf32>
    %254 = vector.broadcast %251 : f32 to vector<12x12xf32>
    %255 = arith.mulf %254, %253 : vector<12x12xf32>
    %256 = arith.addf %249, %255 : vector<12x12xf32>
    %257 = arith.index_cast %136 : i32 to index
    %c17_230 = arith.constant 17 : index
    %258 = memref.load %arg3[%257, %c17_230] : memref<16x27xf32, #tpu.memory_space<smem>>
    %c17_231 = arith.constant 17 : index
    %c0_232 = arith.constant 0 : index
    %c0_233 = arith.constant 0 : index
    %259 = vector.load %arg6[%c17_231, %c0_232, %c0_233] : memref<27x12x12xf32, #tpu.memory_space<vmem>>, vector<1x12x12xf32>
    %260 = vector.shape_cast %259 : vector<1x12x12xf32> to vector<12x12xf32>
    %261 = vector.broadcast %258 : f32 to vector<12x12xf32>
    %262 = arith.mulf %261, %260 : vector<12x12xf32>
    %263 = arith.addf %256, %262 : vector<12x12xf32>
    %264 = arith.index_cast %136 : i32 to index
    %c18_234 = arith.constant 18 : index
    %265 = memref.load %arg3[%264, %c18_234] : memref<16x27xf32, #tpu.memory_space<smem>>
    %c18_235 = arith.constant 18 : index
    %c0_236 = arith.constant 0 : index
    %c0_237 = arith.constant 0 : index
    %266 = vector.load %arg6[%c18_235, %c0_236, %c0_237] : memref<27x12x12xf32, #tpu.memory_space<vmem>>, vector<1x12x12xf32>
    %267 = vector.shape_cast %266 : vector<1x12x12xf32> to vector<12x12xf32>
    %268 = vector.broadcast %265 : f32 to vector<12x12xf32>
    %269 = arith.mulf %268, %267 : vector<12x12xf32>
    %270 = arith.addf %263, %269 : vector<12x12xf32>
    %271 = arith.index_cast %136 : i32 to index
    %c19_238 = arith.constant 19 : index
    %272 = memref.load %arg3[%271, %c19_238] : memref<16x27xf32, #tpu.memory_space<smem>>
    %c19_239 = arith.constant 19 : index
    %c0_240 = arith.constant 0 : index
    %c0_241 = arith.constant 0 : index
    %273 = vector.load %arg6[%c19_239, %c0_240, %c0_241] : memref<27x12x12xf32, #tpu.memory_space<vmem>>, vector<1x12x12xf32>
    %274 = vector.shape_cast %273 : vector<1x12x12xf32> to vector<12x12xf32>
    %275 = vector.broadcast %272 : f32 to vector<12x12xf32>
    %276 = arith.mulf %275, %274 : vector<12x12xf32>
    %277 = arith.addf %270, %276 : vector<12x12xf32>
    %278 = arith.index_cast %136 : i32 to index
    %c20_242 = arith.constant 20 : index
    %279 = memref.load %arg3[%278, %c20_242] : memref<16x27xf32, #tpu.memory_space<smem>>
    %c20_243 = arith.constant 20 : index
    %c0_244 = arith.constant 0 : index
    %c0_245 = arith.constant 0 : index
    %280 = vector.load %arg6[%c20_243, %c0_244, %c0_245] : memref<27x12x12xf32, #tpu.memory_space<vmem>>, vector<1x12x12xf32>
    %281 = vector.shape_cast %280 : vector<1x12x12xf32> to vector<12x12xf32>
    %282 = vector.broadcast %279 : f32 to vector<12x12xf32>
    %283 = arith.mulf %282, %281 : vector<12x12xf32>
    %284 = arith.addf %277, %283 : vector<12x12xf32>
    %285 = arith.index_cast %136 : i32 to index
    %c21_246 = arith.constant 21 : index
    %286 = memref.load %arg3[%285, %c21_246] : memref<16x27xf32, #tpu.memory_space<smem>>
    %c21_247 = arith.constant 21 : index
    %c0_248 = arith.constant 0 : index
    %c0_249 = arith.constant 0 : index
    %287 = vector.load %arg6[%c21_247, %c0_248, %c0_249] : memref<27x12x12xf32, #tpu.memory_space<vmem>>, vector<1x12x12xf32>
    %288 = vector.shape_cast %287 : vector<1x12x12xf32> to vector<12x12xf32>
    %289 = vector.broadcast %286 : f32 to vector<12x12xf32>
    %290 = arith.mulf %289, %288 : vector<12x12xf32>
    %291 = arith.addf %284, %290 : vector<12x12xf32>
    %292 = arith.index_cast %136 : i32 to index
    %c22_250 = arith.constant 22 : index
    %293 = memref.load %arg3[%292, %c22_250] : memref<16x27xf32, #tpu.memory_space<smem>>
    %c22_251 = arith.constant 22 : index
    %c0_252 = arith.constant 0 : index
    %c0_253 = arith.constant 0 : index
    %294 = vector.load %arg6[%c22_251, %c0_252, %c0_253] : memref<27x12x12xf32, #tpu.memory_space<vmem>>, vector<1x12x12xf32>
    %295 = vector.shape_cast %294 : vector<1x12x12xf32> to vector<12x12xf32>
    %296 = vector.broadcast %293 : f32 to vector<12x12xf32>
    %297 = arith.mulf %296, %295 : vector<12x12xf32>
    %298 = arith.addf %291, %297 : vector<12x12xf32>
    %299 = arith.index_cast %136 : i32 to index
    %c23_254 = arith.constant 23 : index
    %300 = memref.load %arg3[%299, %c23_254] : memref<16x27xf32, #tpu.memory_space<smem>>
    %c23_255 = arith.constant 23 : index
    %c0_256 = arith.constant 0 : index
    %c0_257 = arith.constant 0 : index
    %301 = vector.load %arg6[%c23_255, %c0_256, %c0_257] : memref<27x12x12xf32, #tpu.memory_space<vmem>>, vector<1x12x12xf32>
    %302 = vector.shape_cast %301 : vector<1x12x12xf32> to vector<12x12xf32>
    %303 = vector.broadcast %300 : f32 to vector<12x12xf32>
    %304 = arith.mulf %303, %302 : vector<12x12xf32>
    %305 = arith.addf %298, %304 : vector<12x12xf32>
    %306 = arith.index_cast %136 : i32 to index
    %c24_258 = arith.constant 24 : index
    %307 = memref.load %arg3[%306, %c24_258] : memref<16x27xf32, #tpu.memory_space<smem>>
    %c24_259 = arith.constant 24 : index
    %c0_260 = arith.constant 0 : index
    %c0_261 = arith.constant 0 : index
    %308 = vector.load %arg6[%c24_259, %c0_260, %c0_261] : memref<27x12x12xf32, #tpu.memory_space<vmem>>, vector<1x12x12xf32>
    %309 = vector.shape_cast %308 : vector<1x12x12xf32> to vector<12x12xf32>
    %310 = vector.broadcast %307 : f32 to vector<12x12xf32>
    %311 = arith.mulf %310, %309 : vector<12x12xf32>
    %312 = arith.addf %305, %311 : vector<12x12xf32>
    %313 = arith.index_cast %136 : i32 to index
    %c25_262 = arith.constant 25 : index
    %314 = memref.load %arg3[%313, %c25_262] : memref<16x27xf32, #tpu.memory_space<smem>>
    %c25_263 = arith.constant 25 : index
    %c0_264 = arith.constant 0 : index
    %c0_265 = arith.constant 0 : index
    %315 = vector.load %arg6[%c25_263, %c0_264, %c0_265] : memref<27x12x12xf32, #tpu.memory_space<vmem>>, vector<1x12x12xf32>
    %316 = vector.shape_cast %315 : vector<1x12x12xf32> to vector<12x12xf32>
    %317 = vector.broadcast %314 : f32 to vector<12x12xf32>
    %318 = arith.mulf %317, %316 : vector<12x12xf32>
    %319 = arith.addf %312, %318 : vector<12x12xf32>
    %320 = arith.index_cast %136 : i32 to index
    %c26_266 = arith.constant 26 : index
    %321 = memref.load %arg3[%320, %c26_266] : memref<16x27xf32, #tpu.memory_space<smem>>
    %c26_267 = arith.constant 26 : index
    %c0_268 = arith.constant 0 : index
    %c0_269 = arith.constant 0 : index
    %322 = vector.load %arg6[%c26_267, %c0_268, %c0_269] : memref<27x12x12xf32, #tpu.memory_space<vmem>>, vector<1x12x12xf32>
    %323 = vector.shape_cast %322 : vector<1x12x12xf32> to vector<12x12xf32>
    %324 = vector.broadcast %321 : f32 to vector<12x12xf32>
    %325 = arith.mulf %324, %323 : vector<12x12xf32>
    %326 = arith.addf %319, %325 : vector<12x12xf32>
    %327 = arith.index_cast %136 : i32 to index
    %328 = memref.load %arg4[%327] : memref<16xf32, #tpu.memory_space<smem>>
    %329 = vector.broadcast %328 : f32 to vector<12x12xf32>
    %330 = arith.addf %326, %329 : vector<12x12xf32>
    %331 = arith.negf %330 : vector<12x12xf32>
    %332 = math.exp %331 : vector<12x12xf32>
    %cst_270 = arith.constant 1.000000e+00 : f32
    %333 = vector.broadcast %cst_270 : f32 to vector<12x12xf32>
    %334 = arith.addf %333, %332 : vector<12x12xf32>
    %335 = arith.divf %333, %334 : vector<12x12xf32>
    %c0_271 = arith.constant 0 : index
    %c0_272 = arith.constant 0 : index
    %c0_273 = arith.constant 0 : index
    %c0_274 = arith.constant 0 : index
    %336 = vector.load %arg5[%c0_271, %c0_272, %c0_273, %c0_274] : memref<1x8x12x12xf32, #tpu.memory_space<vmem>>, vector<1x1x12x12xf32>
    %337 = vector.shape_cast %336 : vector<1x1x12x12xf32> to vector<12x12xf32>
    %338 = vector.shape_cast %335 : vector<12x12xf32> to vector<1x1x12x12xf32>
    tpu.vector_store %arg5[%c0_271, %c0_272, %c0_273, %c0_274], %338 {strides = array<i32>} : memref<1x8x12x12xf32, #tpu.memory_space<vmem>>, vector<1x1x12x12xf32>,
    %c1_i32 = arith.constant 1 : i32
    %339 = arith.addi %0, %c1_i32 : i32
    %cst_275 = arith.constant 0.000000e+00 : f32
    %340 = vector.broadcast %cst_275 : f32 to vector<12x12xf32>
    %341 = arith.index_cast %339 : i32 to index
    %c0_276 = arith.constant 0 : index
    %342 = memref.load %arg3[%341, %c0_276] : memref<16x27xf32, #tpu.memory_space<smem>>
    %c0_277 = arith.constant 0 : index
    %c0_278 = arith.constant 0 : index
    %c0_279 = arith.constant 0 : index
    %343 = vector.load %arg6[%c0_277, %c0_278, %c0_279] : memref<27x12x12xf32, #tpu.memory_space<vmem>>, vector<1x12x12xf32>
    %344 = vector.shape_cast %343 : vector<1x12x12xf32> to vector<12x12xf32>
    %345 = vector.broadcast %342 : f32 to vector<12x12xf32>
    %346 = arith.mulf %345, %344 : vector<12x12xf32>
    %347 = arith.addf %340, %346 : vector<12x12xf32>
    %348 = arith.index_cast %339 : i32 to index
    %c1_280 = arith.constant 1 : index
    %349 = memref.load %arg3[%348, %c1_280] : memref<16x27xf32, #tpu.memory_space<smem>>
    %c1_281 = arith.constant 1 : index
    %c0_282 = arith.constant 0 : index
    %c0_283 = arith.constant 0 : index
    %350 = vector.load %arg6[%c1_281, %c0_282, %c0_283] : memref<27x12x12xf32, #tpu.memory_space<vmem>>, vector<1x12x12xf32>
    %351 = vector.shape_cast %350 : vector<1x12x12xf32> to vector<12x12xf32>
    %352 = vector.broadcast %349 : f32 to vector<12x12xf32>
    %353 = arith.mulf %352, %351 : vector<12x12xf32>
    %354 = arith.addf %347, %353 : vector<12x12xf32>
    %355 = arith.index_cast %339 : i32 to index
    %c2_284 = arith.constant 2 : index
    %356 = memref.load %arg3[%355, %c2_284] : memref<16x27xf32, #tpu.memory_space<smem>>
    %c2_285 = arith.constant 2 : index
    %c0_286 = arith.constant 0 : index
    %c0_287 = arith.constant 0 : index
    %357 = vector.load %arg6[%c2_285, %c0_286, %c0_287] : memref<27x12x12xf32, #tpu.memory_space<vmem>>, vector<1x12x12xf32>
    %358 = vector.shape_cast %357 : vector<1x12x12xf32> to vector<12x12xf32>
    %359 = vector.broadcast %356 : f32 to vector<12x12xf32>
    %360 = arith.mulf %359, %358 : vector<12x12xf32>
    %361 = arith.addf %354, %360 : vector<12x12xf32>
    %362 = arith.index_cast %339 : i32 to index
    %c3_288 = arith.constant 3 : index
    %363 = memref.load %arg3[%362, %c3_288] : memref<16x27xf32, #tpu.memory_space<smem>>
    %c3_289 = arith.constant 3 : index
    %c0_290 = arith.constant 0 : index
    %c0_291 = arith.constant 0 : index
    %364 = vector.load %arg6[%c3_289, %c0_290, %c0_291] : memref<27x12x12xf32, #tpu.memory_space<vmem>>, vector<1x12x12xf32>
    %365 = vector.shape_cast %364 : vector<1x12x12xf32> to vector<12x12xf32>
    %366 = vector.broadcast %363 : f32 to vector<12x12xf32>
    %367 = arith.mulf %366, %365 : vector<12x12xf32>
    %368 = arith.addf %361, %367 : vector<12x12xf32>
    %369 = arith.index_cast %339 : i32 to index
    %c4_292 = arith.constant 4 : index
    %370 = memref.load %arg3[%369, %c4_292] : memref<16x27xf32, #tpu.memory_space<smem>>
    %c4_293 = arith.constant 4 : index
    %c0_294 = arith.constant 0 : index
    %c0_295 = arith.constant 0 : index
    %371 = vector.load %arg6[%c4_293, %c0_294, %c0_295] : memref<27x12x12xf32, #tpu.memory_space<vmem>>, vector<1x12x12xf32>
    %372 = vector.shape_cast %371 : vector<1x12x12xf32> to vector<12x12xf32>
    %373 = vector.broadcast %370 : f32 to vector<12x12xf32>
    %374 = arith.mulf %373, %372 : vector<12x12xf32>
    %375 = arith.addf %368, %374 : vector<12x12xf32>
    %376 = arith.index_cast %339 : i32 to index
    %c5_296 = arith.constant 5 : index
    %377 = memref.load %arg3[%376, %c5_296] : memref<16x27xf32, #tpu.memory_space<smem>>
    %c5_297 = arith.constant 5 : index
    %c0_298 = arith.constant 0 : index
    %c0_299 = arith.constant 0 : index
    %378 = vector.load %arg6[%c5_297, %c0_298, %c0_299] : memref<27x12x12xf32, #tpu.memory_space<vmem>>, vector<1x12x12xf32>
    %379 = vector.shape_cast %378 : vector<1x12x12xf32> to vector<12x12xf32>
    %380 = vector.broadcast %377 : f32 to vector<12x12xf32>
    %381 = arith.mulf %380, %379 : vector<12x12xf32>
    %382 = arith.addf %375, %381 : vector<12x12xf32>
    %383 = arith.index_cast %339 : i32 to index
    %c6_300 = arith.constant 6 : index
    %384 = memref.load %arg3[%383, %c6_300] : memref<16x27xf32, #tpu.memory_space<smem>>
    %c6_301 = arith.constant 6 : index
    %c0_302 = arith.constant 0 : index
    %c0_303 = arith.constant 0 : index
    %385 = vector.load %arg6[%c6_301, %c0_302, %c0_303] : memref<27x12x12xf32, #tpu.memory_space<vmem>>, vector<1x12x12xf32>
    %386 = vector.shape_cast %385 : vector<1x12x12xf32> to vector<12x12xf32>
    %387 = vector.broadcast %384 : f32 to vector<12x12xf32>
    %388 = arith.mulf %387, %386 : vector<12x12xf32>
    %389 = arith.addf %382, %388 : vector<12x12xf32>
    %390 = arith.index_cast %339 : i32 to index
    %c7_304 = arith.constant 7 : index
    %391 = memref.load %arg3[%390, %c7_304] : memref<16x27xf32, #tpu.memory_space<smem>>
    %c7_305 = arith.constant 7 : index
    %c0_306 = arith.constant 0 : index
    %c0_307 = arith.constant 0 : index
    %392 = vector.load %arg6[%c7_305, %c0_306, %c0_307] : memref<27x12x12xf32, #tpu.memory_space<vmem>>, vector<1x12x12xf32>
    %393 = vector.shape_cast %392 : vector<1x12x12xf32> to vector<12x12xf32>
    %394 = vector.broadcast %391 : f32 to vector<12x12xf32>
    %395 = arith.mulf %394, %393 : vector<12x12xf32>
    %396 = arith.addf %389, %395 : vector<12x12xf32>
    %397 = arith.index_cast %339 : i32 to index
    %c8_308 = arith.constant 8 : index
    %398 = memref.load %arg3[%397, %c8_308] : memref<16x27xf32, #tpu.memory_space<smem>>
    %c8_309 = arith.constant 8 : index
    %c0_310 = arith.constant 0 : index
    %c0_311 = arith.constant 0 : index
    %399 = vector.load %arg6[%c8_309, %c0_310, %c0_311] : memref<27x12x12xf32, #tpu.memory_space<vmem>>, vector<1x12x12xf32>
    %400 = vector.shape_cast %399 : vector<1x12x12xf32> to vector<12x12xf32>
    %401 = vector.broadcast %398 : f32 to vector<12x12xf32>
    %402 = arith.mulf %401, %400 : vector<12x12xf32>
    %403 = arith.addf %396, %402 : vector<12x12xf32>
    %404 = arith.index_cast %339 : i32 to index
    %c9_312 = arith.constant 9 : index
    %405 = memref.load %arg3[%404, %c9_312] : memref<16x27xf32, #tpu.memory_space<smem>>
    %c9_313 = arith.constant 9 : index
    %c0_314 = arith.constant 0 : index
    %c0_315 = arith.constant 0 : index
    %406 = vector.load %arg6[%c9_313, %c0_314, %c0_315] : memref<27x12x12xf32, #tpu.memory_space<vmem>>, vector<1x12x12xf32>
    %407 = vector.shape_cast %406 : vector<1x12x12xf32> to vector<12x12xf32>
    %408 = vector.broadcast %405 : f32 to vector<12x12xf32>
    %409 = arith.mulf %408, %407 : vector<12x12xf32>
    %410 = arith.addf %403, %409 : vector<12x12xf32>
    %411 = arith.index_cast %339 : i32 to index
    %c10_316 = arith.constant 10 : index
    %412 = memref.load %arg3[%411, %c10_316] : memref<16x27xf32, #tpu.memory_space<smem>>
    %c10_317 = arith.constant 10 : index
    %c0_318 = arith.constant 0 : index
    %c0_319 = arith.constant 0 : index
    %413 = vector.load %arg6[%c10_317, %c0_318, %c0_319] : memref<27x12x12xf32, #tpu.memory_space<vmem>>, vector<1x12x12xf32>
    %414 = vector.shape_cast %413 : vector<1x12x12xf32> to vector<12x12xf32>
    %415 = vector.broadcast %412 : f32 to vector<12x12xf32>
    %416 = arith.mulf %415, %414 : vector<12x12xf32>
    %417 = arith.addf %410, %416 : vector<12x12xf32>
    %418 = arith.index_cast %339 : i32 to index
    %c11_320 = arith.constant 11 : index
    %419 = memref.load %arg3[%418, %c11_320] : memref<16x27xf32, #tpu.memory_space<smem>>
    %c11_321 = arith.constant 11 : index
    %c0_322 = arith.constant 0 : index
    %c0_323 = arith.constant 0 : index
    %420 = vector.load %arg6[%c11_321, %c0_322, %c0_323] : memref<27x12x12xf32, #tpu.memory_space<vmem>>, vector<1x12x12xf32>
    %421 = vector.shape_cast %420 : vector<1x12x12xf32> to vector<12x12xf32>
    %422 = vector.broadcast %419 : f32 to vector<12x12xf32>
    %423 = arith.mulf %422, %421 : vector<12x12xf32>
    %424 = arith.addf %417, %423 : vector<12x12xf32>
    %425 = arith.index_cast %339 : i32 to index
    %c12_324 = arith.constant 12 : index
    %426 = memref.load %arg3[%425, %c12_324] : memref<16x27xf32, #tpu.memory_space<smem>>
    %c12_325 = arith.constant 12 : index
    %c0_326 = arith.constant 0 : index
    %c0_327 = arith.constant 0 : index
    %427 = vector.load %arg6[%c12_325, %c0_326, %c0_327] : memref<27x12x12xf32, #tpu.memory_space<vmem>>, vector<1x12x12xf32>
    %428 = vector.shape_cast %427 : vector<1x12x12xf32> to vector<12x12xf32>
    %429 = vector.broadcast %426 : f32 to vector<12x12xf32>
    %430 = arith.mulf %429, %428 : vector<12x12xf32>
    %431 = arith.addf %424, %430 : vector<12x12xf32>
    %432 = arith.index_cast %339 : i32 to index
    %c13_328 = arith.constant 13 : index
    %433 = memref.load %arg3[%432, %c13_328] : memref<16x27xf32, #tpu.memory_space<smem>>
    %c13_329 = arith.constant 13 : index
    %c0_330 = arith.constant 0 : index
    %c0_331 = arith.constant 0 : index
    %434 = vector.load %arg6[%c13_329, %c0_330, %c0_331] : memref<27x12x12xf32, #tpu.memory_space<vmem>>, vector<1x12x12xf32>
    %435 = vector.shape_cast %434 : vector<1x12x12xf32> to vector<12x12xf32>
    %436 = vector.broadcast %433 : f32 to vector<12x12xf32>
    %437 = arith.mulf %436, %435 : vector<12x12xf32>
    %438 = arith.addf %431, %437 : vector<12x12xf32>
    %439 = arith.index_cast %339 : i32 to index
    %c14_332 = arith.constant 14 : index
    %440 = memref.load %arg3[%439, %c14_332] : memref<16x27xf32, #tpu.memory_space<smem>>
    %c14_333 = arith.constant 14 : index
    %c0_334 = arith.constant 0 : index
    %c0_335 = arith.constant 0 : index
    %441 = vector.load %arg6[%c14_333, %c0_334, %c0_335] : memref<27x12x12xf32, #tpu.memory_space<vmem>>, vector<1x12x12xf32>
    %442 = vector.shape_cast %441 : vector<1x12x12xf32> to vector<12x12xf32>
    %443 = vector.broadcast %440 : f32 to vector<12x12xf32>
    %444 = arith.mulf %443, %442 : vector<12x12xf32>
    %445 = arith.addf %438, %444 : vector<12x12xf32>
    %446 = arith.index_cast %339 : i32 to index
    %c15_336 = arith.constant 15 : index
    %447 = memref.load %arg3[%446, %c15_336] : memref<16x27xf32, #tpu.memory_space<smem>>
    %c15_337 = arith.constant 15 : index
    %c0_338 = arith.constant 0 : index
    %c0_339 = arith.constant 0 : index
    %448 = vector.load %arg6[%c15_337, %c0_338, %c0_339] : memref<27x12x12xf32, #tpu.memory_space<vmem>>, vector<1x12x12xf32>
    %449 = vector.shape_cast %448 : vector<1x12x12xf32> to vector<12x12xf32>
    %450 = vector.broadcast %447 : f32 to vector<12x12xf32>
    %451 = arith.mulf %450, %449 : vector<12x12xf32>
    %452 = arith.addf %445, %451 : vector<12x12xf32>
    %453 = arith.index_cast %339 : i32 to index
    %c16_340 = arith.constant 16 : index
    %454 = memref.load %arg3[%453, %c16_340] : memref<16x27xf32, #tpu.memory_space<smem>>
    %c16_341 = arith.constant 16 : index
    %c0_342 = arith.constant 0 : index
    %c0_343 = arith.constant 0 : index
    %455 = vector.load %arg6[%c16_341, %c0_342, %c0_343] : memref<27x12x12xf32, #tpu.memory_space<vmem>>, vector<1x12x12xf32>
    %456 = vector.shape_cast %455 : vector<1x12x12xf32> to vector<12x12xf32>
    %457 = vector.broadcast %454 : f32 to vector<12x12xf32>
    %458 = arith.mulf %457, %456 : vector<12x12xf32>
    %459 = arith.addf %452, %458 : vector<12x12xf32>
    %460 = arith.index_cast %339 : i32 to index
    %c17_344 = arith.constant 17 : index
    %461 = memref.load %arg3[%460, %c17_344] : memref<16x27xf32, #tpu.memory_space<smem>>
    %c17_345 = arith.constant 17 : index
    %c0_346 = arith.constant 0 : index
    %c0_347 = arith.constant 0 : index
    %462 = vector.load %arg6[%c17_345, %c0_346, %c0_347] : memref<27x12x12xf32, #tpu.memory_space<vmem>>, vector<1x12x12xf32>
    %463 = vector.shape_cast %462 : vector<1x12x12xf32> to vector<12x12xf32>
    %464 = vector.broadcast %461 : f32 to vector<12x12xf32>
    %465 = arith.mulf %464, %463 : vector<12x12xf32>
    %466 = arith.addf %459, %465 : vector<12x12xf32>
    %467 = arith.index_cast %339 : i32 to index
    %c18_348 = arith.constant 18 : index
    %468 = memref.load %arg3[%467, %c18_348] : memref<16x27xf32, #tpu.memory_space<smem>>
    %c18_349 = arith.constant 18 : index
    %c0_350 = arith.constant 0 : index
    %c0_351 = arith.constant 0 : index
    %469 = vector.load %arg6[%c18_349, %c0_350, %c0_351] : memref<27x12x12xf32, #tpu.memory_space<vmem>>, vector<1x12x12xf32>
    %470 = vector.shape_cast %469 : vector<1x12x12xf32> to vector<12x12xf32>
    %471 = vector.broadcast %468 : f32 to vector<12x12xf32>
    %472 = arith.mulf %471, %470 : vector<12x12xf32>
    %473 = arith.addf %466, %472 : vector<12x12xf32>
    %474 = arith.index_cast %339 : i32 to index
    %c19_352 = arith.constant 19 : index
    %475 = memref.load %arg3[%474, %c19_352] : memref<16x27xf32, #tpu.memory_space<smem>>
    %c19_353 = arith.constant 19 : index
    %c0_354 = arith.constant 0 : index
    %c0_355 = arith.constant 0 : index
    %476 = vector.load %arg6[%c19_353, %c0_354, %c0_355] : memref<27x12x12xf32, #tpu.memory_space<vmem>>, vector<1x12x12xf32>
    %477 = vector.shape_cast %476 : vector<1x12x12xf32> to vector<12x12xf32>
    %478 = vector.broadcast %475 : f32 to vector<12x12xf32>
    %479 = arith.mulf %478, %477 : vector<12x12xf32>
    %480 = arith.addf %473, %479 : vector<12x12xf32>
    %481 = arith.index_cast %339 : i32 to index
    %c20_356 = arith.constant 20 : index
    %482 = memref.load %arg3[%481, %c20_356] : memref<16x27xf32, #tpu.memory_space<smem>>
    %c20_357 = arith.constant 20 : index
    %c0_358 = arith.constant 0 : index
    %c0_359 = arith.constant 0 : index
    %483 = vector.load %arg6[%c20_357, %c0_358, %c0_359] : memref<27x12x12xf32, #tpu.memory_space<vmem>>, vector<1x12x12xf32>
    %484 = vector.shape_cast %483 : vector<1x12x12xf32> to vector<12x12xf32>
    %485 = vector.broadcast %482 : f32 to vector<12x12xf32>
    %486 = arith.mulf %485, %484 : vector<12x12xf32>
    %487 = arith.addf %480, %486 : vector<12x12xf32>
    %488 = arith.index_cast %339 : i32 to index
    %c21_360 = arith.constant 21 : index
    %489 = memref.load %arg3[%488, %c21_360] : memref<16x27xf32, #tpu.memory_space<smem>>
    %c21_361 = arith.constant 21 : index
    %c0_362 = arith.constant 0 : index
    %c0_363 = arith.constant 0 : index
    %490 = vector.load %arg6[%c21_361, %c0_362, %c0_363] : memref<27x12x12xf32, #tpu.memory_space<vmem>>, vector<1x12x12xf32>
    %491 = vector.shape_cast %490 : vector<1x12x12xf32> to vector<12x12xf32>
    %492 = vector.broadcast %489 : f32 to vector<12x12xf32>
    %493 = arith.mulf %492, %491 : vector<12x12xf32>
    %494 = arith.addf %487, %493 : vector<12x12xf32>
    %495 = arith.index_cast %339 : i32 to index
    %c22_364 = arith.constant 22 : index
    %496 = memref.load %arg3[%495, %c22_364] : memref<16x27xf32, #tpu.memory_space<smem>>
    %c22_365 = arith.constant 22 : index
    %c0_366 = arith.constant 0 : index
    %c0_367 = arith.constant 0 : index
    %497 = vector.load %arg6[%c22_365, %c0_366, %c0_367] : memref<27x12x12xf32, #tpu.memory_space<vmem>>, vector<1x12x12xf32>
    %498 = vector.shape_cast %497 : vector<1x12x12xf32> to vector<12x12xf32>
    %499 = vector.broadcast %496 : f32 to vector<12x12xf32>
    %500 = arith.mulf %499, %498 : vector<12x12xf32>
    %501 = arith.addf %494, %500 : vector<12x12xf32>
    %502 = arith.index_cast %339 : i32 to index
    %c23_368 = arith.constant 23 : index
    %503 = memref.load %arg3[%502, %c23_368] : memref<16x27xf32, #tpu.memory_space<smem>>
    %c23_369 = arith.constant 23 : index
    %c0_370 = arith.constant 0 : index
    %c0_371 = arith.constant 0 : index
    %504 = vector.load %arg6[%c23_369, %c0_370, %c0_371] : memref<27x12x12xf32, #tpu.memory_space<vmem>>, vector<1x12x12xf32>
    %505 = vector.shape_cast %504 : vector<1x12x12xf32> to vector<12x12xf32>
    %506 = vector.broadcast %503 : f32 to vector<12x12xf32>
    %507 = arith.mulf %506, %505 : vector<12x12xf32>
    %508 = arith.addf %501, %507 : vector<12x12xf32>
    %509 = arith.index_cast %339 : i32 to index
    %c24_372 = arith.constant 24 : index
    %510 = memref.load %arg3[%509, %c24_372] : memref<16x27xf32, #tpu.memory_space<smem>>
    %c24_373 = arith.constant 24 : index
    %c0_374 = arith.constant 0 : index
    %c0_375 = arith.constant 0 : index
    %511 = vector.load %arg6[%c24_373, %c0_374, %c0_375] : memref<27x12x12xf32, #tpu.memory_space<vmem>>, vector<1x12x12xf32>
    %512 = vector.shape_cast %511 : vector<1x12x12xf32> to vector<12x12xf32>
    %513 = vector.broadcast %510 : f32 to vector<12x12xf32>
    %514 = arith.mulf %513, %512 : vector<12x12xf32>
    %515 = arith.addf %508, %514 : vector<12x12xf32>
    %516 = arith.index_cast %339 : i32 to index
    %c25_376 = arith.constant 25 : index
    %517 = memref.load %arg3[%516, %c25_376] : memref<16x27xf32, #tpu.memory_space<smem>>
    %c25_377 = arith.constant 25 : index
    %c0_378 = arith.constant 0 : index
    %c0_379 = arith.constant 0 : index
    %518 = vector.load %arg6[%c25_377, %c0_378, %c0_379] : memref<27x12x12xf32, #tpu.memory_space<vmem>>, vector<1x12x12xf32>
    %519 = vector.shape_cast %518 : vector<1x12x12xf32> to vector<12x12xf32>
    %520 = vector.broadcast %517 : f32 to vector<12x12xf32>
    %521 = arith.mulf %520, %519 : vector<12x12xf32>
    %522 = arith.addf %515, %521 : vector<12x12xf32>
    %523 = arith.index_cast %339 : i32 to index
    %c26_380 = arith.constant 26 : index
    %524 = memref.load %arg3[%523, %c26_380] : memref<16x27xf32, #tpu.memory_space<smem>>
    %c26_381 = arith.constant 26 : index
    %c0_382 = arith.constant 0 : index
    %c0_383 = arith.constant 0 : index
    %525 = vector.load %arg6[%c26_381, %c0_382, %c0_383] : memref<27x12x12xf32, #tpu.memory_space<vmem>>, vector<1x12x12xf32>
    %526 = vector.shape_cast %525 : vector<1x12x12xf32> to vector<12x12xf32>
    %527 = vector.broadcast %524 : f32 to vector<12x12xf32>
    %528 = arith.mulf %527, %526 : vector<12x12xf32>
    %529 = arith.addf %522, %528 : vector<12x12xf32>
    %530 = arith.index_cast %339 : i32 to index
    %531 = memref.load %arg4[%530] : memref<16xf32, #tpu.memory_space<smem>>
    %532 = vector.broadcast %531 : f32 to vector<12x12xf32>
    %533 = arith.addf %529, %532 : vector<12x12xf32>
    %534 = arith.negf %533 : vector<12x12xf32>
    %535 = math.exp %534 : vector<12x12xf32>
    %cst_384 = arith.constant 1.000000e+00 : f32
    %536 = vector.broadcast %cst_384 : f32 to vector<12x12xf32>
    %537 = arith.addf %536, %535 : vector<12x12xf32>
    %538 = arith.divf %536, %537 : vector<12x12xf32>
    %c0_385 = arith.constant 0 : index
    %c1_386 = arith.constant 1 : index
    %c0_387 = arith.constant 0 : index
    %c0_388 = arith.constant 0 : index
    %539 = vector.load %arg5[%c0_385, %c1_386, %c0_387, %c0_388] : memref<1x8x12x12xf32, #tpu.memory_space<vmem>>, vector<1x1x12x12xf32>
    %540 = vector.shape_cast %539 : vector<1x1x12x12xf32> to vector<12x12xf32>
    %541 = vector.shape_cast %538 : vector<12x12xf32> to vector<1x1x12x12xf32>
    tpu.vector_store %arg5[%c0_385, %c1_386, %c0_387, %c0_388], %541 {strides = array<i32>} : memref<1x8x12x12xf32, #tpu.memory_space<vmem>>, vector<1x1x12x12xf32>,
    %c2_i32 = arith.constant 2 : i32
    %542 = arith.addi %0, %c2_i32 : i32
    %cst_389 = arith.constant 0.000000e+00 : f32
    %543 = vector.broadcast %cst_389 : f32 to vector<12x12xf32>
    %544 = arith.index_cast %542 : i32 to index
    %c0_390 = arith.constant 0 : index
    %545 = memref.load %arg3[%544, %c0_390] : memref<16x27xf32, #tpu.memory_space<smem>>
    %c0_391 = arith.constant 0 : index
    %c0_392 = arith.constant 0 : index
    %c0_393 = arith.constant 0 : index
    %546 = vector.load %arg6[%c0_391, %c0_392, %c0_393] : memref<27x12x12xf32, #tpu.memory_space<vmem>>, vector<1x12x12xf32>
    %547 = vector.shape_cast %546 : vector<1x12x12xf32> to vector<12x12xf32>
    %548 = vector.broadcast %545 : f32 to vector<12x12xf32>
    %549 = arith.mulf %548, %547 : vector<12x12xf32>
    %550 = arith.addf %543, %549 : vector<12x12xf32>
    %551 = arith.index_cast %542 : i32 to index
    %c1_394 = arith.constant 1 : index
    %552 = memref.load %arg3[%551, %c1_394] : memref<16x27xf32, #tpu.memory_space<smem>>
    %c1_395 = arith.constant 1 : index
    %c0_396 = arith.constant 0 : index
    %c0_397 = arith.constant 0 : index
    %553 = vector.load %arg6[%c1_395, %c0_396, %c0_397] : memref<27x12x12xf32, #tpu.memory_space<vmem>>, vector<1x12x12xf32>
    %554 = vector.shape_cast %553 : vector<1x12x12xf32> to vector<12x12xf32>
    %555 = vector.broadcast %552 : f32 to vector<12x12xf32>
    %556 = arith.mulf %555, %554 : vector<12x12xf32>
    %557 = arith.addf %550, %556 : vector<12x12xf32>
    %558 = arith.index_cast %542 : i32 to index
    %c2_398 = arith.constant 2 : index
    %559 = memref.load %arg3[%558, %c2_398] : memref<16x27xf32, #tpu.memory_space<smem>>
    %c2_399 = arith.constant 2 : index
    %c0_400 = arith.constant 0 : index
    %c0_401 = arith.constant 0 : index
    %560 = vector.load %arg6[%c2_399, %c0_400, %c0_401] : memref<27x12x12xf32, #tpu.memory_space<vmem>>, vector<1x12x12xf32>
    %561 = vector.shape_cast %560 : vector<1x12x12xf32> to vector<12x12xf32>
    %562 = vector.broadcast %559 : f32 to vector<12x12xf32>
    %563 = arith.mulf %562, %561 : vector<12x12xf32>
    %564 = arith.addf %557, %563 : vector<12x12xf32>
    %565 = arith.index_cast %542 : i32 to index
    %c3_402 = arith.constant 3 : index
    %566 = memref.load %arg3[%565, %c3_402] : memref<16x27xf32, #tpu.memory_space<smem>>
    %c3_403 = arith.constant 3 : index
    %c0_404 = arith.constant 0 : index
    %c0_405 = arith.constant 0 : index
    %567 = vector.load %arg6[%c3_403, %c0_404, %c0_405] : memref<27x12x12xf32, #tpu.memory_space<vmem>>, vector<1x12x12xf32>
    %568 = vector.shape_cast %567 : vector<1x12x12xf32> to vector<12x12xf32>
    %569 = vector.broadcast %566 : f32 to vector<12x12xf32>
    %570 = arith.mulf %569, %568 : vector<12x12xf32>
    %571 = arith.addf %564, %570 : vector<12x12xf32>
    %572 = arith.index_cast %542 : i32 to index
    %c4_406 = arith.constant 4 : index
    %573 = memref.load %arg3[%572, %c4_406] : memref<16x27xf32, #tpu.memory_space<smem>>
    %c4_407 = arith.constant 4 : index
    %c0_408 = arith.constant 0 : index
    %c0_409 = arith.constant 0 : index
    %574 = vector.load %arg6[%c4_407, %c0_408, %c0_409] : memref<27x12x12xf32, #tpu.memory_space<vmem>>, vector<1x12x12xf32>
    %575 = vector.shape_cast %574 : vector<1x12x12xf32> to vector<12x12xf32>
    %576 = vector.broadcast %573 : f32 to vector<12x12xf32>
    %577 = arith.mulf %576, %575 : vector<12x12xf32>
    %578 = arith.addf %571, %577 : vector<12x12xf32>
    %579 = arith.index_cast %542 : i32 to index
    %c5_410 = arith.constant 5 : index
    %580 = memref.load %arg3[%579, %c5_410] : memref<16x27xf32, #tpu.memory_space<smem>>
    %c5_411 = arith.constant 5 : index
    %c0_412 = arith.constant 0 : index
    %c0_413 = arith.constant 0 : index
    %581 = vector.load %arg6[%c5_411, %c0_412, %c0_413] : memref<27x12x12xf32, #tpu.memory_space<vmem>>, vector<1x12x12xf32>
    %582 = vector.shape_cast %581 : vector<1x12x12xf32> to vector<12x12xf32>
    %583 = vector.broadcast %580 : f32 to vector<12x12xf32>
    %584 = arith.mulf %583, %582 : vector<12x12xf32>
    %585 = arith.addf %578, %584 : vector<12x12xf32>
    %586 = arith.index_cast %542 : i32 to index
    %c6_414 = arith.constant 6 : index
    %587 = memref.load %arg3[%586, %c6_414] : memref<16x27xf32, #tpu.memory_space<smem>>
    %c6_415 = arith.constant 6 : index
    %c0_416 = arith.constant 0 : index
    %c0_417 = arith.constant 0 : index
    %588 = vector.load %arg6[%c6_415, %c0_416, %c0_417] : memref<27x12x12xf32, #tpu.memory_space<vmem>>, vector<1x12x12xf32>
    %589 = vector.shape_cast %588 : vector<1x12x12xf32> to vector<12x12xf32>
    %590 = vector.broadcast %587 : f32 to vector<12x12xf32>
    %591 = arith.mulf %590, %589 : vector<12x12xf32>
    %592 = arith.addf %585, %591 : vector<12x12xf32>
    %593 = arith.index_cast %542 : i32 to index
    %c7_418 = arith.constant 7 : index
    %594 = memref.load %arg3[%593, %c7_418] : memref<16x27xf32, #tpu.memory_space<smem>>
    %c7_419 = arith.constant 7 : index
    %c0_420 = arith.constant 0 : index
    %c0_421 = arith.constant 0 : index
    %595 = vector.load %arg6[%c7_419, %c0_420, %c0_421] : memref<27x12x12xf32, #tpu.memory_space<vmem>>, vector<1x12x12xf32>
    %596 = vector.shape_cast %595 : vector<1x12x12xf32> to vector<12x12xf32>
    %597 = vector.broadcast %594 : f32 to vector<12x12xf32>
    %598 = arith.mulf %597, %596 : vector<12x12xf32>
    %599 = arith.addf %592, %598 : vector<12x12xf32>
    %600 = arith.index_cast %542 : i32 to index
    %c8_422 = arith.constant 8 : index
    %601 = memref.load %arg3[%600, %c8_422] : memref<16x27xf32, #tpu.memory_space<smem>>
    %c8_423 = arith.constant 8 : index
    %c0_424 = arith.constant 0 : index
    %c0_425 = arith.constant 0 : index
    %602 = vector.load %arg6[%c8_423, %c0_424, %c0_425] : memref<27x12x12xf32, #tpu.memory_space<vmem>>, vector<1x12x12xf32>
    %603 = vector.shape_cast %602 : vector<1x12x12xf32> to vector<12x12xf32>
    %604 = vector.broadcast %601 : f32 to vector<12x12xf32>
    %605 = arith.mulf %604, %603 : vector<12x12xf32>
    %606 = arith.addf %599, %605 : vector<12x12xf32>
    %607 = arith.index_cast %542 : i32 to index
    %c9_426 = arith.constant 9 : index
    %608 = memref.load %arg3[%607, %c9_426] : memref<16x27xf32, #tpu.memory_space<smem>>
    %c9_427 = arith.constant 9 : index
    %c0_428 = arith.constant 0 : index
    %c0_429 = arith.constant 0 : index
    %609 = vector.load %arg6[%c9_427, %c0_428, %c0_429] : memref<27x12x12xf32, #tpu.memory_space<vmem>>, vector<1x12x12xf32>
    %610 = vector.shape_cast %609 : vector<1x12x12xf32> to vector<12x12xf32>
    %611 = vector.broadcast %608 : f32 to vector<12x12xf32>
    %612 = arith.mulf %611, %610 : vector<12x12xf32>
    %613 = arith.addf %606, %612 : vector<12x12xf32>
    %614 = arith.index_cast %542 : i32 to index
    %c10_430 = arith.constant 10 : index
    %615 = memref.load %arg3[%614, %c10_430] : memref<16x27xf32, #tpu.memory_space<smem>>
    %c10_431 = arith.constant 10 : index
    %c0_432 = arith.constant 0 : index
    %c0_433 = arith.constant 0 : index
    %616 = vector.load %arg6[%c10_431, %c0_432, %c0_433] : memref<27x12x12xf32, #tpu.memory_space<vmem>>, vector<1x12x12xf32>
    %617 = vector.shape_cast %616 : vector<1x12x12xf32> to vector<12x12xf32>
    %618 = vector.broadcast %615 : f32 to vector<12x12xf32>
    %619 = arith.mulf %618, %617 : vector<12x12xf32>
    %620 = arith.addf %613, %619 : vector<12x12xf32>
    %621 = arith.index_cast %542 : i32 to index
    %c11_434 = arith.constant 11 : index
    %622 = memref.load %arg3[%621, %c11_434] : memref<16x27xf32, #tpu.memory_space<smem>>
    %c11_435 = arith.constant 11 : index
    %c0_436 = arith.constant 0 : index
    %c0_437 = arith.constant 0 : index
    %623 = vector.load %arg6[%c11_435, %c0_436, %c0_437] : memref<27x12x12xf32, #tpu.memory_space<vmem>>, vector<1x12x12xf32>
    %624 = vector.shape_cast %623 : vector<1x12x12xf32> to vector<12x12xf32>
    %625 = vector.broadcast %622 : f32 to vector<12x12xf32>
    %626 = arith.mulf %625, %624 : vector<12x12xf32>
    %627 = arith.addf %620, %626 : vector<12x12xf32>
    %628 = arith.index_cast %542 : i32 to index
    %c12_438 = arith.constant 12 : index
    %629 = memref.load %arg3[%628, %c12_438] : memref<16x27xf32, #tpu.memory_space<smem>>
    %c12_439 = arith.constant 12 : index
    %c0_440 = arith.constant 0 : index
    %c0_441 = arith.constant 0 : index
    %630 = vector.load %arg6[%c12_439, %c0_440, %c0_441] : memref<27x12x12xf32, #tpu.memory_space<vmem>>, vector<1x12x12xf32>
    %631 = vector.shape_cast %630 : vector<1x12x12xf32> to vector<12x12xf32>
    %632 = vector.broadcast %629 : f32 to vector<12x12xf32>
    %633 = arith.mulf %632, %631 : vector<12x12xf32>
    %634 = arith.addf %627, %633 : vector<12x12xf32>
    %635 = arith.index_cast %542 : i32 to index
    %c13_442 = arith.constant 13 : index
    %636 = memref.load %arg3[%635, %c13_442] : memref<16x27xf32, #tpu.memory_space<smem>>
    %c13_443 = arith.constant 13 : index
    %c0_444 = arith.constant 0 : index
    %c0_445 = arith.constant 0 : index
    %637 = vector.load %arg6[%c13_443, %c0_444, %c0_445] : memref<27x12x12xf32, #tpu.memory_space<vmem>>, vector<1x12x12xf32>
    %638 = vector.shape_cast %637 : vector<1x12x12xf32> to vector<12x12xf32>
    %639 = vector.broadcast %636 : f32 to vector<12x12xf32>
    %640 = arith.mulf %639, %638 : vector<12x12xf32>
    %641 = arith.addf %634, %640 : vector<12x12xf32>
    %642 = arith.index_cast %542 : i32 to index
    %c14_446 = arith.constant 14 : index
    %643 = memref.load %arg3[%642, %c14_446] : memref<16x27xf32, #tpu.memory_space<smem>>
    %c14_447 = arith.constant 14 : index
    %c0_448 = arith.constant 0 : index
    %c0_449 = arith.constant 0 : index
    %644 = vector.load %arg6[%c14_447, %c0_448, %c0_449] : memref<27x12x12xf32, #tpu.memory_space<vmem>>, vector<1x12x12xf32>
    %645 = vector.shape_cast %644 : vector<1x12x12xf32> to vector<12x12xf32>
    %646 = vector.broadcast %643 : f32 to vector<12x12xf32>
    %647 = arith.mulf %646, %645 : vector<12x12xf32>
    %648 = arith.addf %641, %647 : vector<12x12xf32>
    %649 = arith.index_cast %542 : i32 to index
    %c15_450 = arith.constant 15 : index
    %650 = memref.load %arg3[%649, %c15_450] : memref<16x27xf32, #tpu.memory_space<smem>>
    %c15_451 = arith.constant 15 : index
    %c0_452 = arith.constant 0 : index
    %c0_453 = arith.constant 0 : index
    %651 = vector.load %arg6[%c15_451, %c0_452, %c0_453] : memref<27x12x12xf32, #tpu.memory_space<vmem>>, vector<1x12x12xf32>
    %652 = vector.shape_cast %651 : vector<1x12x12xf32> to vector<12x12xf32>
    %653 = vector.broadcast %650 : f32 to vector<12x12xf32>
    %654 = arith.mulf %653, %652 : vector<12x12xf32>
    %655 = arith.addf %648, %654 : vector<12x12xf32>
    %656 = arith.index_cast %542 : i32 to index
    %c16_454 = arith.constant 16 : index
    %657 = memref.load %arg3[%656, %c16_454] : memref<16x27xf32, #tpu.memory_space<smem>>
    %c16_455 = arith.constant 16 : index
    %c0_456 = arith.constant 0 : index
    %c0_457 = arith.constant 0 : index
    %658 = vector.load %arg6[%c16_455, %c0_456, %c0_457] : memref<27x12x12xf32, #tpu.memory_space<vmem>>, vector<1x12x12xf32>
    %659 = vector.shape_cast %658 : vector<1x12x12xf32> to vector<12x12xf32>
    %660 = vector.broadcast %657 : f32 to vector<12x12xf32>
    %661 = arith.mulf %660, %659 : vector<12x12xf32>
    %662 = arith.addf %655, %661 : vector<12x12xf32>
    %663 = arith.index_cast %542 : i32 to index
    %c17_458 = arith.constant 17 : index
    %664 = memref.load %arg3[%663, %c17_458] : memref<16x27xf32, #tpu.memory_space<smem>>
    %c17_459 = arith.constant 17 : index
    %c0_460 = arith.constant 0 : index
    %c0_461 = arith.constant 0 : index
    %665 = vector.load %arg6[%c17_459, %c0_460, %c0_461] : memref<27x12x12xf32, #tpu.memory_space<vmem>>, vector<1x12x12xf32>
    %666 = vector.shape_cast %665 : vector<1x12x12xf32> to vector<12x12xf32>
    %667 = vector.broadcast %664 : f32 to vector<12x12xf32>
    %668 = arith.mulf %667, %666 : vector<12x12xf32>
    %669 = arith.addf %662, %668 : vector<12x12xf32>
    %670 = arith.index_cast %542 : i32 to index
    %c18_462 = arith.constant 18 : index
    %671 = memref.load %arg3[%670, %c18_462] : memref<16x27xf32, #tpu.memory_space<smem>>
    %c18_463 = arith.constant 18 : index
    %c0_464 = arith.constant 0 : index
    %c0_465 = arith.constant 0 : index
    %672 = vector.load %arg6[%c18_463, %c0_464, %c0_465] : memref<27x12x12xf32, #tpu.memory_space<vmem>>, vector<1x12x12xf32>
    %673 = vector.shape_cast %672 : vector<1x12x12xf32> to vector<12x12xf32>
    %674 = vector.broadcast %671 : f32 to vector<12x12xf32>
    %675 = arith.mulf %674, %673 : vector<12x12xf32>
    %676 = arith.addf %669, %675 : vector<12x12xf32>
    %677 = arith.index_cast %542 : i32 to index
    %c19_466 = arith.constant 19 : index
    %678 = memref.load %arg3[%677, %c19_466] : memref<16x27xf32, #tpu.memory_space<smem>>
    %c19_467 = arith.constant 19 : index
    %c0_468 = arith.constant 0 : index
    %c0_469 = arith.constant 0 : index
    %679 = vector.load %arg6[%c19_467, %c0_468, %c0_469] : memref<27x12x12xf32, #tpu.memory_space<vmem>>, vector<1x12x12xf32>
    %680 = vector.shape_cast %679 : vector<1x12x12xf32> to vector<12x12xf32>
    %681 = vector.broadcast %678 : f32 to vector<12x12xf32>
    %682 = arith.mulf %681, %680 : vector<12x12xf32>
    %683 = arith.addf %676, %682 : vector<12x12xf32>
    %684 = arith.index_cast %542 : i32 to index
    %c20_470 = arith.constant 20 : index
    %685 = memref.load %arg3[%684, %c20_470] : memref<16x27xf32, #tpu.memory_space<smem>>
    %c20_471 = arith.constant 20 : index
    %c0_472 = arith.constant 0 : index
    %c0_473 = arith.constant 0 : index
    %686 = vector.load %arg6[%c20_471, %c0_472, %c0_473] : memref<27x12x12xf32, #tpu.memory_space<vmem>>, vector<1x12x12xf32>
    %687 = vector.shape_cast %686 : vector<1x12x12xf32> to vector<12x12xf32>
    %688 = vector.broadcast %685 : f32 to vector<12x12xf32>
    %689 = arith.mulf %688, %687 : vector<12x12xf32>
    %690 = arith.addf %683, %689 : vector<12x12xf32>
    %691 = arith.index_cast %542 : i32 to index
    %c21_474 = arith.constant 21 : index
    %692 = memref.load %arg3[%691, %c21_474] : memref<16x27xf32, #tpu.memory_space<smem>>
    %c21_475 = arith.constant 21 : index
    %c0_476 = arith.constant 0 : index
    %c0_477 = arith.constant 0 : index
    %693 = vector.load %arg6[%c21_475, %c0_476, %c0_477] : memref<27x12x12xf32, #tpu.memory_space<vmem>>, vector<1x12x12xf32>
    %694 = vector.shape_cast %693 : vector<1x12x12xf32> to vector<12x12xf32>
    %695 = vector.broadcast %692 : f32 to vector<12x12xf32>
    %696 = arith.mulf %695, %694 : vector<12x12xf32>
    %697 = arith.addf %690, %696 : vector<12x12xf32>
    %698 = arith.index_cast %542 : i32 to index
    %c22_478 = arith.constant 22 : index
    %699 = memref.load %arg3[%698, %c22_478] : memref<16x27xf32, #tpu.memory_space<smem>>
    %c22_479 = arith.constant 22 : index
    %c0_480 = arith.constant 0 : index
    %c0_481 = arith.constant 0 : index
    %700 = vector.load %arg6[%c22_479, %c0_480, %c0_481] : memref<27x12x12xf32, #tpu.memory_space<vmem>>, vector<1x12x12xf32>
    %701 = vector.shape_cast %700 : vector<1x12x12xf32> to vector<12x12xf32>
    %702 = vector.broadcast %699 : f32 to vector<12x12xf32>
    %703 = arith.mulf %702, %701 : vector<12x12xf32>
    %704 = arith.addf %697, %703 : vector<12x12xf32>
    %705 = arith.index_cast %542 : i32 to index
    %c23_482 = arith.constant 23 : index
    %706 = memref.load %arg3[%705, %c23_482] : memref<16x27xf32, #tpu.memory_space<smem>>
    %c23_483 = arith.constant 23 : index
    %c0_484 = arith.constant 0 : index
    %c0_485 = arith.constant 0 : index
    %707 = vector.load %arg6[%c23_483, %c0_484, %c0_485] : memref<27x12x12xf32, #tpu.memory_space<vmem>>, vector<1x12x12xf32>
    %708 = vector.shape_cast %707 : vector<1x12x12xf32> to vector<12x12xf32>
    %709 = vector.broadcast %706 : f32 to vector<12x12xf32>
    %710 = arith.mulf %709, %708 : vector<12x12xf32>
    %711 = arith.addf %704, %710 : vector<12x12xf32>
    %712 = arith.index_cast %542 : i32 to index
    %c24_486 = arith.constant 24 : index
    %713 = memref.load %arg3[%712, %c24_486] : memref<16x27xf32, #tpu.memory_space<smem>>
    %c24_487 = arith.constant 24 : index
    %c0_488 = arith.constant 0 : index
    %c0_489 = arith.constant 0 : index
    %714 = vector.load %arg6[%c24_487, %c0_488, %c0_489] : memref<27x12x12xf32, #tpu.memory_space<vmem>>, vector<1x12x12xf32>
    %715 = vector.shape_cast %714 : vector<1x12x12xf32> to vector<12x12xf32>
    %716 = vector.broadcast %713 : f32 to vector<12x12xf32>
    %717 = arith.mulf %716, %715 : vector<12x12xf32>
    %718 = arith.addf %711, %717 : vector<12x12xf32>
    %719 = arith.index_cast %542 : i32 to index
    %c25_490 = arith.constant 25 : index
    %720 = memref.load %arg3[%719, %c25_490] : memref<16x27xf32, #tpu.memory_space<smem>>
    %c25_491 = arith.constant 25 : index
    %c0_492 = arith.constant 0 : index
    %c0_493 = arith.constant 0 : index
    %721 = vector.load %arg6[%c25_491, %c0_492, %c0_493] : memref<27x12x12xf32, #tpu.memory_space<vmem>>, vector<1x12x12xf32>
    %722 = vector.shape_cast %721 : vector<1x12x12xf32> to vector<12x12xf32>
    %723 = vector.broadcast %720 : f32 to vector<12x12xf32>
    %724 = arith.mulf %723, %722 : vector<12x12xf32>
    %725 = arith.addf %718, %724 : vector<12x12xf32>
    %726 = arith.index_cast %542 : i32 to index
    %c26_494 = arith.constant 26 : index
    %727 = memref.load %arg3[%726, %c26_494] : memref<16x27xf32, #tpu.memory_space<smem>>
    %c26_495 = arith.constant 26 : index
    %c0_496 = arith.constant 0 : index
    %c0_497 = arith.constant 0 : index
    %728 = vector.load %arg6[%c26_495, %c0_496, %c0_497] : memref<27x12x12xf32, #tpu.memory_space<vmem>>, vector<1x12x12xf32>
    %729 = vector.shape_cast %728 : vector<1x12x12xf32> to vector<12x12xf32>
    %730 = vector.broadcast %727 : f32 to vector<12x12xf32>
    %731 = arith.mulf %730, %729 : vector<12x12xf32>
    %732 = arith.addf %725, %731 : vector<12x12xf32>
    %733 = arith.index_cast %542 : i32 to index
    %734 = memref.load %arg4[%733] : memref<16xf32, #tpu.memory_space<smem>>
    %735 = vector.broadcast %734 : f32 to vector<12x12xf32>
    %736 = arith.addf %732, %735 : vector<12x12xf32>
    %737 = arith.negf %736 : vector<12x12xf32>
    %738 = math.exp %737 : vector<12x12xf32>
    %cst_498 = arith.constant 1.000000e+00 : f32
    %739 = vector.broadcast %cst_498 : f32 to vector<12x12xf32>
    %740 = arith.addf %739, %738 : vector<12x12xf32>
    %741 = arith.divf %739, %740 : vector<12x12xf32>
    %c0_499 = arith.constant 0 : index
    %c2_500 = arith.constant 2 : index
    %c0_501 = arith.constant 0 : index
    %c0_502 = arith.constant 0 : index
    %742 = vector.load %arg5[%c0_499, %c2_500, %c0_501, %c0_502] : memref<1x8x12x12xf32, #tpu.memory_space<vmem>>, vector<1x1x12x12xf32>
    %743 = vector.shape_cast %742 : vector<1x1x12x12xf32> to vector<12x12xf32>
    %744 = vector.shape_cast %741 : vector<12x12xf32> to vector<1x1x12x12xf32>
    tpu.vector_store %arg5[%c0_499, %c2_500, %c0_501, %c0_502], %744 {strides = array<i32>} : memref<1x8x12x12xf32, #tpu.memory_space<vmem>>, vector<1x1x12x12xf32>,
    %c3_i32 = arith.constant 3 : i32
    %745 = arith.addi %0, %c3_i32 : i32
    %cst_503 = arith.constant 0.000000e+00 : f32
    %746 = vector.broadcast %cst_503 : f32 to vector<12x12xf32>
    %747 = arith.index_cast %745 : i32 to index
    %c0_504 = arith.constant 0 : index
    %748 = memref.load %arg3[%747, %c0_504] : memref<16x27xf32, #tpu.memory_space<smem>>
    %c0_505 = arith.constant 0 : index
    %c0_506 = arith.constant 0 : index
    %c0_507 = arith.constant 0 : index
    %749 = vector.load %arg6[%c0_505, %c0_506, %c0_507] : memref<27x12x12xf32, #tpu.memory_space<vmem>>, vector<1x12x12xf32>
    %750 = vector.shape_cast %749 : vector<1x12x12xf32> to vector<12x12xf32>
    %751 = vector.broadcast %748 : f32 to vector<12x12xf32>
    %752 = arith.mulf %751, %750 : vector<12x12xf32>
    %753 = arith.addf %746, %752 : vector<12x12xf32>
    %754 = arith.index_cast %745 : i32 to index
    %c1_508 = arith.constant 1 : index
    %755 = memref.load %arg3[%754, %c1_508] : memref<16x27xf32, #tpu.memory_space<smem>>
    %c1_509 = arith.constant 1 : index
    %c0_510 = arith.constant 0 : index
    %c0_511 = arith.constant 0 : index
    %756 = vector.load %arg6[%c1_509, %c0_510, %c0_511] : memref<27x12x12xf32, #tpu.memory_space<vmem>>, vector<1x12x12xf32>
    %757 = vector.shape_cast %756 : vector<1x12x12xf32> to vector<12x12xf32>
    %758 = vector.broadcast %755 : f32 to vector<12x12xf32>
    %759 = arith.mulf %758, %757 : vector<12x12xf32>
    %760 = arith.addf %753, %759 : vector<12x12xf32>
    %761 = arith.index_cast %745 : i32 to index
    %c2_512 = arith.constant 2 : index
    %762 = memref.load %arg3[%761, %c2_512] : memref<16x27xf32, #tpu.memory_space<smem>>
    %c2_513 = arith.constant 2 : index
    %c0_514 = arith.constant 0 : index
    %c0_515 = arith.constant 0 : index
    %763 = vector.load %arg6[%c2_513, %c0_514, %c0_515] : memref<27x12x12xf32, #tpu.memory_space<vmem>>, vector<1x12x12xf32>
    %764 = vector.shape_cast %763 : vector<1x12x12xf32> to vector<12x12xf32>
    %765 = vector.broadcast %762 : f32 to vector<12x12xf32>
    %766 = arith.mulf %765, %764 : vector<12x12xf32>
    %767 = arith.addf %760, %766 : vector<12x12xf32>
    %768 = arith.index_cast %745 : i32 to index
    %c3_516 = arith.constant 3 : index
    %769 = memref.load %arg3[%768, %c3_516] : memref<16x27xf32, #tpu.memory_space<smem>>
    %c3_517 = arith.constant 3 : index
    %c0_518 = arith.constant 0 : index
    %c0_519 = arith.constant 0 : index
    %770 = vector.load %arg6[%c3_517, %c0_518, %c0_519] : memref<27x12x12xf32, #tpu.memory_space<vmem>>, vector<1x12x12xf32>
    %771 = vector.shape_cast %770 : vector<1x12x12xf32> to vector<12x12xf32>
    %772 = vector.broadcast %769 : f32 to vector<12x12xf32>
    %773 = arith.mulf %772, %771 : vector<12x12xf32>
    %774 = arith.addf %767, %773 : vector<12x12xf32>
    %775 = arith.index_cast %745 : i32 to index
    %c4_520 = arith.constant 4 : index
    %776 = memref.load %arg3[%775, %c4_520] : memref<16x27xf32, #tpu.memory_space<smem>>
    %c4_521 = arith.constant 4 : index
    %c0_522 = arith.constant 0 : index
    %c0_523 = arith.constant 0 : index
    %777 = vector.load %arg6[%c4_521, %c0_522, %c0_523] : memref<27x12x12xf32, #tpu.memory_space<vmem>>, vector<1x12x12xf32>
    %778 = vector.shape_cast %777 : vector<1x12x12xf32> to vector<12x12xf32>
    %779 = vector.broadcast %776 : f32 to vector<12x12xf32>
    %780 = arith.mulf %779, %778 : vector<12x12xf32>
    %781 = arith.addf %774, %780 : vector<12x12xf32>
    %782 = arith.index_cast %745 : i32 to index
    %c5_524 = arith.constant 5 : index
    %783 = memref.load %arg3[%782, %c5_524] : memref<16x27xf32, #tpu.memory_space<smem>>
    %c5_525 = arith.constant 5 : index
    %c0_526 = arith.constant 0 : index
    %c0_527 = arith.constant 0 : index
    %784 = vector.load %arg6[%c5_525, %c0_526, %c0_527] : memref<27x12x12xf32, #tpu.memory_space<vmem>>, vector<1x12x12xf32>
    %785 = vector.shape_cast %784 : vector<1x12x12xf32> to vector<12x12xf32>
    %786 = vector.broadcast %783 : f32 to vector<12x12xf32>
    %787 = arith.mulf %786, %785 : vector<12x12xf32>
    %788 = arith.addf %781, %787 : vector<12x12xf32>
    %789 = arith.index_cast %745 : i32 to index
    %c6_528 = arith.constant 6 : index
    %790 = memref.load %arg3[%789, %c6_528] : memref<16x27xf32, #tpu.memory_space<smem>>
    %c6_529 = arith.constant 6 : index
    %c0_530 = arith.constant 0 : index
    %c0_531 = arith.constant 0 : index
    %791 = vector.load %arg6[%c6_529, %c0_530, %c0_531] : memref<27x12x12xf32, #tpu.memory_space<vmem>>, vector<1x12x12xf32>
    %792 = vector.shape_cast %791 : vector<1x12x12xf32> to vector<12x12xf32>
    %793 = vector.broadcast %790 : f32 to vector<12x12xf32>
    %794 = arith.mulf %793, %792 : vector<12x12xf32>
    %795 = arith.addf %788, %794 : vector<12x12xf32>
    %796 = arith.index_cast %745 : i32 to index
    %c7_532 = arith.constant 7 : index
    %797 = memref.load %arg3[%796, %c7_532] : memref<16x27xf32, #tpu.memory_space<smem>>
    %c7_533 = arith.constant 7 : index
    %c0_534 = arith.constant 0 : index
    %c0_535 = arith.constant 0 : index
    %798 = vector.load %arg6[%c7_533, %c0_534, %c0_535] : memref<27x12x12xf32, #tpu.memory_space<vmem>>, vector<1x12x12xf32>
    %799 = vector.shape_cast %798 : vector<1x12x12xf32> to vector<12x12xf32>
    %800 = vector.broadcast %797 : f32 to vector<12x12xf32>
    %801 = arith.mulf %800, %799 : vector<12x12xf32>
    %802 = arith.addf %795, %801 : vector<12x12xf32>
    %803 = arith.index_cast %745 : i32 to index
    %c8_536 = arith.constant 8 : index
    %804 = memref.load %arg3[%803, %c8_536] : memref<16x27xf32, #tpu.memory_space<smem>>
    %c8_537 = arith.constant 8 : index
    %c0_538 = arith.constant 0 : index
    %c0_539 = arith.constant 0 : index
    %805 = vector.load %arg6[%c8_537, %c0_538, %c0_539] : memref<27x12x12xf32, #tpu.memory_space<vmem>>, vector<1x12x12xf32>
    %806 = vector.shape_cast %805 : vector<1x12x12xf32> to vector<12x12xf32>
    %807 = vector.broadcast %804 : f32 to vector<12x12xf32>
    %808 = arith.mulf %807, %806 : vector<12x12xf32>
    %809 = arith.addf %802, %808 : vector<12x12xf32>
    %810 = arith.index_cast %745 : i32 to index
    %c9_540 = arith.constant 9 : index
    %811 = memref.load %arg3[%810, %c9_540] : memref<16x27xf32, #tpu.memory_space<smem>>
    %c9_541 = arith.constant 9 : index
    %c0_542 = arith.constant 0 : index
    %c0_543 = arith.constant 0 : index
    %812 = vector.load %arg6[%c9_541, %c0_542, %c0_543] : memref<27x12x12xf32, #tpu.memory_space<vmem>>, vector<1x12x12xf32>
    %813 = vector.shape_cast %812 : vector<1x12x12xf32> to vector<12x12xf32>
    %814 = vector.broadcast %811 : f32 to vector<12x12xf32>
    %815 = arith.mulf %814, %813 : vector<12x12xf32>
    %816 = arith.addf %809, %815 : vector<12x12xf32>
    %817 = arith.index_cast %745 : i32 to index
    %c10_544 = arith.constant 10 : index
    %818 = memref.load %arg3[%817, %c10_544] : memref<16x27xf32, #tpu.memory_space<smem>>
    %c10_545 = arith.constant 10 : index
    %c0_546 = arith.constant 0 : index
    %c0_547 = arith.constant 0 : index
    %819 = vector.load %arg6[%c10_545, %c0_546, %c0_547] : memref<27x12x12xf32, #tpu.memory_space<vmem>>, vector<1x12x12xf32>
    %820 = vector.shape_cast %819 : vector<1x12x12xf32> to vector<12x12xf32>
    %821 = vector.broadcast %818 : f32 to vector<12x12xf32>
    %822 = arith.mulf %821, %820 : vector<12x12xf32>
    %823 = arith.addf %816, %822 : vector<12x12xf32>
    %824 = arith.index_cast %745 : i32 to index
    %c11_548 = arith.constant 11 : index
    %825 = memref.load %arg3[%824, %c11_548] : memref<16x27xf32, #tpu.memory_space<smem>>
    %c11_549 = arith.constant 11 : index
    %c0_550 = arith.constant 0 : index
    %c0_551 = arith.constant 0 : index
    %826 = vector.load %arg6[%c11_549, %c0_550, %c0_551] : memref<27x12x12xf32, #tpu.memory_space<vmem>>, vector<1x12x12xf32>
    %827 = vector.shape_cast %826 : vector<1x12x12xf32> to vector<12x12xf32>
    %828 = vector.broadcast %825 : f32 to vector<12x12xf32>
    %829 = arith.mulf %828, %827 : vector<12x12xf32>
    %830 = arith.addf %823, %829 : vector<12x12xf32>
    %831 = arith.index_cast %745 : i32 to index
    %c12_552 = arith.constant 12 : index
    %832 = memref.load %arg3[%831, %c12_552] : memref<16x27xf32, #tpu.memory_space<smem>>
    %c12_553 = arith.constant 12 : index
    %c0_554 = arith.constant 0 : index
    %c0_555 = arith.constant 0 : index
    %833 = vector.load %arg6[%c12_553, %c0_554, %c0_555] : memref<27x12x12xf32, #tpu.memory_space<vmem>>, vector<1x12x12xf32>
    %834 = vector.shape_cast %833 : vector<1x12x12xf32> to vector<12x12xf32>
    %835 = vector.broadcast %832 : f32 to vector<12x12xf32>
    %836 = arith.mulf %835, %834 : vector<12x12xf32>
    %837 = arith.addf %830, %836 : vector<12x12xf32>
    %838 = arith.index_cast %745 : i32 to index
    %c13_556 = arith.constant 13 : index
    %839 = memref.load %arg3[%838, %c13_556] : memref<16x27xf32, #tpu.memory_space<smem>>
    %c13_557 = arith.constant 13 : index
    %c0_558 = arith.constant 0 : index
    %c0_559 = arith.constant 0 : index
    %840 = vector.load %arg6[%c13_557, %c0_558, %c0_559] : memref<27x12x12xf32, #tpu.memory_space<vmem>>, vector<1x12x12xf32>
    %841 = vector.shape_cast %840 : vector<1x12x12xf32> to vector<12x12xf32>
    %842 = vector.broadcast %839 : f32 to vector<12x12xf32>
    %843 = arith.mulf %842, %841 : vector<12x12xf32>
    %844 = arith.addf %837, %843 : vector<12x12xf32>
    %845 = arith.index_cast %745 : i32 to index
    %c14_560 = arith.constant 14 : index
    %846 = memref.load %arg3[%845, %c14_560] : memref<16x27xf32, #tpu.memory_space<smem>>
    %c14_561 = arith.constant 14 : index
    %c0_562 = arith.constant 0 : index
    %c0_563 = arith.constant 0 : index
    %847 = vector.load %arg6[%c14_561, %c0_562, %c0_563] : memref<27x12x12xf32, #tpu.memory_space<vmem>>, vector<1x12x12xf32>
    %848 = vector.shape_cast %847 : vector<1x12x12xf32> to vector<12x12xf32>
    %849 = vector.broadcast %846 : f32 to vector<12x12xf32>
    %850 = arith.mulf %849, %848 : vector<12x12xf32>
    %851 = arith.addf %844, %850 : vector<12x12xf32>
    %852 = arith.index_cast %745 : i32 to index
    %c15_564 = arith.constant 15 : index
    %853 = memref.load %arg3[%852, %c15_564] : memref<16x27xf32, #tpu.memory_space<smem>>
    %c15_565 = arith.constant 15 : index
    %c0_566 = arith.constant 0 : index
    %c0_567 = arith.constant 0 : index
    %854 = vector.load %arg6[%c15_565, %c0_566, %c0_567] : memref<27x12x12xf32, #tpu.memory_space<vmem>>, vector<1x12x12xf32>
    %855 = vector.shape_cast %854 : vector<1x12x12xf32> to vector<12x12xf32>
    %856 = vector.broadcast %853 : f32 to vector<12x12xf32>
    %857 = arith.mulf %856, %855 : vector<12x12xf32>
    %858 = arith.addf %851, %857 : vector<12x12xf32>
    %859 = arith.index_cast %745 : i32 to index
    %c16_568 = arith.constant 16 : index
    %860 = memref.load %arg3[%859, %c16_568] : memref<16x27xf32, #tpu.memory_space<smem>>
    %c16_569 = arith.constant 16 : index
    %c0_570 = arith.constant 0 : index
    %c0_571 = arith.constant 0 : index
    %861 = vector.load %arg6[%c16_569, %c0_570, %c0_571] : memref<27x12x12xf32, #tpu.memory_space<vmem>>, vector<1x12x12xf32>
    %862 = vector.shape_cast %861 : vector<1x12x12xf32> to vector<12x12xf32>
    %863 = vector.broadcast %860 : f32 to vector<12x12xf32>
    %864 = arith.mulf %863, %862 : vector<12x12xf32>
    %865 = arith.addf %858, %864 : vector<12x12xf32>
    %866 = arith.index_cast %745 : i32 to index
    %c17_572 = arith.constant 17 : index
    %867 = memref.load %arg3[%866, %c17_572] : memref<16x27xf32, #tpu.memory_space<smem>>
    %c17_573 = arith.constant 17 : index
    %c0_574 = arith.constant 0 : index
    %c0_575 = arith.constant 0 : index
    %868 = vector.load %arg6[%c17_573, %c0_574, %c0_575] : memref<27x12x12xf32, #tpu.memory_space<vmem>>, vector<1x12x12xf32>
    %869 = vector.shape_cast %868 : vector<1x12x12xf32> to vector<12x12xf32>
    %870 = vector.broadcast %867 : f32 to vector<12x12xf32>
    %871 = arith.mulf %870, %869 : vector<12x12xf32>
    %872 = arith.addf %865, %871 : vector<12x12xf32>
    %873 = arith.index_cast %745 : i32 to index
    %c18_576 = arith.constant 18 : index
    %874 = memref.load %arg3[%873, %c18_576] : memref<16x27xf32, #tpu.memory_space<smem>>
    %c18_577 = arith.constant 18 : index
    %c0_578 = arith.constant 0 : index
    %c0_579 = arith.constant 0 : index
    %875 = vector.load %arg6[%c18_577, %c0_578, %c0_579] : memref<27x12x12xf32, #tpu.memory_space<vmem>>, vector<1x12x12xf32>
    %876 = vector.shape_cast %875 : vector<1x12x12xf32> to vector<12x12xf32>
    %877 = vector.broadcast %874 : f32 to vector<12x12xf32>
    %878 = arith.mulf %877, %876 : vector<12x12xf32>
    %879 = arith.addf %872, %878 : vector<12x12xf32>
    %880 = arith.index_cast %745 : i32 to index
    %c19_580 = arith.constant 19 : index
    %881 = memref.load %arg3[%880, %c19_580] : memref<16x27xf32, #tpu.memory_space<smem>>
    %c19_581 = arith.constant 19 : index
    %c0_582 = arith.constant 0 : index
    %c0_583 = arith.constant 0 : index
    %882 = vector.load %arg6[%c19_581, %c0_582, %c0_583] : memref<27x12x12xf32, #tpu.memory_space<vmem>>, vector<1x12x12xf32>
    %883 = vector.shape_cast %882 : vector<1x12x12xf32> to vector<12x12xf32>
    %884 = vector.broadcast %881 : f32 to vector<12x12xf32>
    %885 = arith.mulf %884, %883 : vector<12x12xf32>
    %886 = arith.addf %879, %885 : vector<12x12xf32>
    %887 = arith.index_cast %745 : i32 to index
    %c20_584 = arith.constant 20 : index
    %888 = memref.load %arg3[%887, %c20_584] : memref<16x27xf32, #tpu.memory_space<smem>>
    %c20_585 = arith.constant 20 : index
    %c0_586 = arith.constant 0 : index
    %c0_587 = arith.constant 0 : index
    %889 = vector.load %arg6[%c20_585, %c0_586, %c0_587] : memref<27x12x12xf32, #tpu.memory_space<vmem>>, vector<1x12x12xf32>
    %890 = vector.shape_cast %889 : vector<1x12x12xf32> to vector<12x12xf32>
    %891 = vector.broadcast %888 : f32 to vector<12x12xf32>
    %892 = arith.mulf %891, %890 : vector<12x12xf32>
    %893 = arith.addf %886, %892 : vector<12x12xf32>
    %894 = arith.index_cast %745 : i32 to index
    %c21_588 = arith.constant 21 : index
    %895 = memref.load %arg3[%894, %c21_588] : memref<16x27xf32, #tpu.memory_space<smem>>
    %c21_589 = arith.constant 21 : index
    %c0_590 = arith.constant 0 : index
    %c0_591 = arith.constant 0 : index
    %896 = vector.load %arg6[%c21_589, %c0_590, %c0_591] : memref<27x12x12xf32, #tpu.memory_space<vmem>>, vector<1x12x12xf32>
    %897 = vector.shape_cast %896 : vector<1x12x12xf32> to vector<12x12xf32>
    %898 = vector.broadcast %895 : f32 to vector<12x12xf32>
    %899 = arith.mulf %898, %897 : vector<12x12xf32>
    %900 = arith.addf %893, %899 : vector<12x12xf32>
    %901 = arith.index_cast %745 : i32 to index
    %c22_592 = arith.constant 22 : index
    %902 = memref.load %arg3[%901, %c22_592] : memref<16x27xf32, #tpu.memory_space<smem>>
    %c22_593 = arith.constant 22 : index
    %c0_594 = arith.constant 0 : index
    %c0_595 = arith.constant 0 : index
    %903 = vector.load %arg6[%c22_593, %c0_594, %c0_595] : memref<27x12x12xf32, #tpu.memory_space<vmem>>, vector<1x12x12xf32>
    %904 = vector.shape_cast %903 : vector<1x12x12xf32> to vector<12x12xf32>
    %905 = vector.broadcast %902 : f32 to vector<12x12xf32>
    %906 = arith.mulf %905, %904 : vector<12x12xf32>
    %907 = arith.addf %900, %906 : vector<12x12xf32>
    %908 = arith.index_cast %745 : i32 to index
    %c23_596 = arith.constant 23 : index
    %909 = memref.load %arg3[%908, %c23_596] : memref<16x27xf32, #tpu.memory_space<smem>>
    %c23_597 = arith.constant 23 : index
    %c0_598 = arith.constant 0 : index
    %c0_599 = arith.constant 0 : index
    %910 = vector.load %arg6[%c23_597, %c0_598, %c0_599] : memref<27x12x12xf32, #tpu.memory_space<vmem>>, vector<1x12x12xf32>
    %911 = vector.shape_cast %910 : vector<1x12x12xf32> to vector<12x12xf32>
    %912 = vector.broadcast %909 : f32 to vector<12x12xf32>
    %913 = arith.mulf %912, %911 : vector<12x12xf32>
    %914 = arith.addf %907, %913 : vector<12x12xf32>
    %915 = arith.index_cast %745 : i32 to index
    %c24_600 = arith.constant 24 : index
    %916 = memref.load %arg3[%915, %c24_600] : memref<16x27xf32, #tpu.memory_space<smem>>
    %c24_601 = arith.constant 24 : index
    %c0_602 = arith.constant 0 : index
    %c0_603 = arith.constant 0 : index
    %917 = vector.load %arg6[%c24_601, %c0_602, %c0_603] : memref<27x12x12xf32, #tpu.memory_space<vmem>>, vector<1x12x12xf32>
    %918 = vector.shape_cast %917 : vector<1x12x12xf32> to vector<12x12xf32>
    %919 = vector.broadcast %916 : f32 to vector<12x12xf32>
    %920 = arith.mulf %919, %918 : vector<12x12xf32>
    %921 = arith.addf %914, %920 : vector<12x12xf32>
    %922 = arith.index_cast %745 : i32 to index
    %c25_604 = arith.constant 25 : index
    %923 = memref.load %arg3[%922, %c25_604] : memref<16x27xf32, #tpu.memory_space<smem>>
    %c25_605 = arith.constant 25 : index
    %c0_606 = arith.constant 0 : index
    %c0_607 = arith.constant 0 : index
    %924 = vector.load %arg6[%c25_605, %c0_606, %c0_607] : memref<27x12x12xf32, #tpu.memory_space<vmem>>, vector<1x12x12xf32>
    %925 = vector.shape_cast %924 : vector<1x12x12xf32> to vector<12x12xf32>
    %926 = vector.broadcast %923 : f32 to vector<12x12xf32>
    %927 = arith.mulf %926, %925 : vector<12x12xf32>
    %928 = arith.addf %921, %927 : vector<12x12xf32>
    %929 = arith.index_cast %745 : i32 to index
    %c26_608 = arith.constant 26 : index
    %930 = memref.load %arg3[%929, %c26_608] : memref<16x27xf32, #tpu.memory_space<smem>>
    %c26_609 = arith.constant 26 : index
    %c0_610 = arith.constant 0 : index
    %c0_611 = arith.constant 0 : index
    %931 = vector.load %arg6[%c26_609, %c0_610, %c0_611] : memref<27x12x12xf32, #tpu.memory_space<vmem>>, vector<1x12x12xf32>
    %932 = vector.shape_cast %931 : vector<1x12x12xf32> to vector<12x12xf32>
    %933 = vector.broadcast %930 : f32 to vector<12x12xf32>
    %934 = arith.mulf %933, %932 : vector<12x12xf32>
    %935 = arith.addf %928, %934 : vector<12x12xf32>
    %936 = arith.index_cast %745 : i32 to index
    %937 = memref.load %arg4[%936] : memref<16xf32, #tpu.memory_space<smem>>
    %938 = vector.broadcast %937 : f32 to vector<12x12xf32>
    %939 = arith.addf %935, %938 : vector<12x12xf32>
    %940 = arith.negf %939 : vector<12x12xf32>
    %941 = math.exp %940 : vector<12x12xf32>
    %cst_612 = arith.constant 1.000000e+00 : f32
    %942 = vector.broadcast %cst_612 : f32 to vector<12x12xf32>
    %943 = arith.addf %942, %941 : vector<12x12xf32>
    %944 = arith.divf %942, %943 : vector<12x12xf32>
    %c0_613 = arith.constant 0 : index
    %c3_614 = arith.constant 3 : index
    %c0_615 = arith.constant 0 : index
    %c0_616 = arith.constant 0 : index
    %945 = vector.load %arg5[%c0_613, %c3_614, %c0_615, %c0_616] : memref<1x8x12x12xf32, #tpu.memory_space<vmem>>, vector<1x1x12x12xf32>
    %946 = vector.shape_cast %945 : vector<1x1x12x12xf32> to vector<12x12xf32>
    %947 = vector.shape_cast %944 : vector<12x12xf32> to vector<1x1x12x12xf32>
    tpu.vector_store %arg5[%c0_613, %c3_614, %c0_615, %c0_616], %947 {strides = array<i32>} : memref<1x8x12x12xf32, #tpu.memory_space<vmem>>, vector<1x1x12x12xf32>,
    %c4_i32 = arith.constant 4 : i32
    %948 = arith.addi %0, %c4_i32 : i32
    %cst_617 = arith.constant 0.000000e+00 : f32
    %949 = vector.broadcast %cst_617 : f32 to vector<12x12xf32>
    %950 = arith.index_cast %948 : i32 to index
    %c0_618 = arith.constant 0 : index
    %951 = memref.load %arg3[%950, %c0_618] : memref<16x27xf32, #tpu.memory_space<smem>>
    %c0_619 = arith.constant 0 : index
    %c0_620 = arith.constant 0 : index
    %c0_621 = arith.constant 0 : index
    %952 = vector.load %arg6[%c0_619, %c0_620, %c0_621] : memref<27x12x12xf32, #tpu.memory_space<vmem>>, vector<1x12x12xf32>
    %953 = vector.shape_cast %952 : vector<1x12x12xf32> to vector<12x12xf32>
    %954 = vector.broadcast %951 : f32 to vector<12x12xf32>
    %955 = arith.mulf %954, %953 : vector<12x12xf32>
    %956 = arith.addf %949, %955 : vector<12x12xf32>
    %957 = arith.index_cast %948 : i32 to index
    %c1_622 = arith.constant 1 : index
    %958 = memref.load %arg3[%957, %c1_622] : memref<16x27xf32, #tpu.memory_space<smem>>
    %c1_623 = arith.constant 1 : index
    %c0_624 = arith.constant 0 : index
    %c0_625 = arith.constant 0 : index
    %959 = vector.load %arg6[%c1_623, %c0_624, %c0_625] : memref<27x12x12xf32, #tpu.memory_space<vmem>>, vector<1x12x12xf32>
    %960 = vector.shape_cast %959 : vector<1x12x12xf32> to vector<12x12xf32>
    %961 = vector.broadcast %958 : f32 to vector<12x12xf32>
    %962 = arith.mulf %961, %960 : vector<12x12xf32>
    %963 = arith.addf %956, %962 : vector<12x12xf32>
    %964 = arith.index_cast %948 : i32 to index
    %c2_626 = arith.constant 2 : index
    %965 = memref.load %arg3[%964, %c2_626] : memref<16x27xf32, #tpu.memory_space<smem>>
    %c2_627 = arith.constant 2 : index
    %c0_628 = arith.constant 0 : index
    %c0_629 = arith.constant 0 : index
    %966 = vector.load %arg6[%c2_627, %c0_628, %c0_629] : memref<27x12x12xf32, #tpu.memory_space<vmem>>, vector<1x12x12xf32>
    %967 = vector.shape_cast %966 : vector<1x12x12xf32> to vector<12x12xf32>
    %968 = vector.broadcast %965 : f32 to vector<12x12xf32>
    %969 = arith.mulf %968, %967 : vector<12x12xf32>
    %970 = arith.addf %963, %969 : vector<12x12xf32>
    %971 = arith.index_cast %948 : i32 to index
    %c3_630 = arith.constant 3 : index
    %972 = memref.load %arg3[%971, %c3_630] : memref<16x27xf32, #tpu.memory_space<smem>>
    %c3_631 = arith.constant 3 : index
    %c0_632 = arith.constant 0 : index
    %c0_633 = arith.constant 0 : index
    %973 = vector.load %arg6[%c3_631, %c0_632, %c0_633] : memref<27x12x12xf32, #tpu.memory_space<vmem>>, vector<1x12x12xf32>
    %974 = vector.shape_cast %973 : vector<1x12x12xf32> to vector<12x12xf32>
    %975 = vector.broadcast %972 : f32 to vector<12x12xf32>
    %976 = arith.mulf %975, %974 : vector<12x12xf32>
    %977 = arith.addf %970, %976 : vector<12x12xf32>
    %978 = arith.index_cast %948 : i32 to index
    %c4_634 = arith.constant 4 : index
    %979 = memref.load %arg3[%978, %c4_634] : memref<16x27xf32, #tpu.memory_space<smem>>
    %c4_635 = arith.constant 4 : index
    %c0_636 = arith.constant 0 : index
    %c0_637 = arith.constant 0 : index
    %980 = vector.load %arg6[%c4_635, %c0_636, %c0_637] : memref<27x12x12xf32, #tpu.memory_space<vmem>>, vector<1x12x12xf32>
    %981 = vector.shape_cast %980 : vector<1x12x12xf32> to vector<12x12xf32>
    %982 = vector.broadcast %979 : f32 to vector<12x12xf32>
    %983 = arith.mulf %982, %981 : vector<12x12xf32>
    %984 = arith.addf %977, %983 : vector<12x12xf32>
    %985 = arith.index_cast %948 : i32 to index
    %c5_638 = arith.constant 5 : index
    %986 = memref.load %arg3[%985, %c5_638] : memref<16x27xf32, #tpu.memory_space<smem>>
    %c5_639 = arith.constant 5 : index
    %c0_640 = arith.constant 0 : index
    %c0_641 = arith.constant 0 : index
    %987 = vector.load %arg6[%c5_639, %c0_640, %c0_641] : memref<27x12x12xf32, #tpu.memory_space<vmem>>, vector<1x12x12xf32>
    %988 = vector.shape_cast %987 : vector<1x12x12xf32> to vector<12x12xf32>
    %989 = vector.broadcast %986 : f32 to vector<12x12xf32>
    %990 = arith.mulf %989, %988 : vector<12x12xf32>
    %991 = arith.addf %984, %990 : vector<12x12xf32>
    %992 = arith.index_cast %948 : i32 to index
    %c6_642 = arith.constant 6 : index
    %993 = memref.load %arg3[%992, %c6_642] : memref<16x27xf32, #tpu.memory_space<smem>>
    %c6_643 = arith.constant 6 : index
    %c0_644 = arith.constant 0 : index
    %c0_645 = arith.constant 0 : index
    %994 = vector.load %arg6[%c6_643, %c0_644, %c0_645] : memref<27x12x12xf32, #tpu.memory_space<vmem>>, vector<1x12x12xf32>
    %995 = vector.shape_cast %994 : vector<1x12x12xf32> to vector<12x12xf32>
    %996 = vector.broadcast %993 : f32 to vector<12x12xf32>
    %997 = arith.mulf %996, %995 : vector<12x12xf32>
    %998 = arith.addf %991, %997 : vector<12x12xf32>
    %999 = arith.index_cast %948 : i32 to index
    %c7_646 = arith.constant 7 : index
    %1000 = memref.load %arg3[%999, %c7_646] : memref<16x27xf32, #tpu.memory_space<smem>>
    %c7_647 = arith.constant 7 : index
    %c0_648 = arith.constant 0 : index
    %c0_649 = arith.constant 0 : index
    %1001 = vector.load %arg6[%c7_647, %c0_648, %c0_649] : memref<27x12x12xf32, #tpu.memory_space<vmem>>, vector<1x12x12xf32>
    %1002 = vector.shape_cast %1001 : vector<1x12x12xf32> to vector<12x12xf32>
    %1003 = vector.broadcast %1000 : f32 to vector<12x12xf32>
    %1004 = arith.mulf %1003, %1002 : vector<12x12xf32>
    %1005 = arith.addf %998, %1004 : vector<12x12xf32>
    %1006 = arith.index_cast %948 : i32 to index
    %c8_650 = arith.constant 8 : index
    %1007 = memref.load %arg3[%1006, %c8_650] : memref<16x27xf32, #tpu.memory_space<smem>>
    %c8_651 = arith.constant 8 : index
    %c0_652 = arith.constant 0 : index
    %c0_653 = arith.constant 0 : index
    %1008 = vector.load %arg6[%c8_651, %c0_652, %c0_653] : memref<27x12x12xf32, #tpu.memory_space<vmem>>, vector<1x12x12xf32>
    %1009 = vector.shape_cast %1008 : vector<1x12x12xf32> to vector<12x12xf32>
    %1010 = vector.broadcast %1007 : f32 to vector<12x12xf32>
    %1011 = arith.mulf %1010, %1009 : vector<12x12xf32>
    %1012 = arith.addf %1005, %1011 : vector<12x12xf32>
    %1013 = arith.index_cast %948 : i32 to index
    %c9_654 = arith.constant 9 : index
    %1014 = memref.load %arg3[%1013, %c9_654] : memref<16x27xf32, #tpu.memory_space<smem>>
    %c9_655 = arith.constant 9 : index
    %c0_656 = arith.constant 0 : index
    %c0_657 = arith.constant 0 : index
    %1015 = vector.load %arg6[%c9_655, %c0_656, %c0_657] : memref<27x12x12xf32, #tpu.memory_space<vmem>>, vector<1x12x12xf32>
    %1016 = vector.shape_cast %1015 : vector<1x12x12xf32> to vector<12x12xf32>
    %1017 = vector.broadcast %1014 : f32 to vector<12x12xf32>
    %1018 = arith.mulf %1017, %1016 : vector<12x12xf32>
    %1019 = arith.addf %1012, %1018 : vector<12x12xf32>
    %1020 = arith.index_cast %948 : i32 to index
    %c10_658 = arith.constant 10 : index
    %1021 = memref.load %arg3[%1020, %c10_658] : memref<16x27xf32, #tpu.memory_space<smem>>
    %c10_659 = arith.constant 10 : index
    %c0_660 = arith.constant 0 : index
    %c0_661 = arith.constant 0 : index
    %1022 = vector.load %arg6[%c10_659, %c0_660, %c0_661] : memref<27x12x12xf32, #tpu.memory_space<vmem>>, vector<1x12x12xf32>
    %1023 = vector.shape_cast %1022 : vector<1x12x12xf32> to vector<12x12xf32>
    %1024 = vector.broadcast %1021 : f32 to vector<12x12xf32>
    %1025 = arith.mulf %1024, %1023 : vector<12x12xf32>
    %1026 = arith.addf %1019, %1025 : vector<12x12xf32>
    %1027 = arith.index_cast %948 : i32 to index
    %c11_662 = arith.constant 11 : index
    %1028 = memref.load %arg3[%1027, %c11_662] : memref<16x27xf32, #tpu.memory_space<smem>>
    %c11_663 = arith.constant 11 : index
    %c0_664 = arith.constant 0 : index
    %c0_665 = arith.constant 0 : index
    %1029 = vector.load %arg6[%c11_663, %c0_664, %c0_665] : memref<27x12x12xf32, #tpu.memory_space<vmem>>, vector<1x12x12xf32>
    %1030 = vector.shape_cast %1029 : vector<1x12x12xf32> to vector<12x12xf32>
    %1031 = vector.broadcast %1028 : f32 to vector<12x12xf32>
    %1032 = arith.mulf %1031, %1030 : vector<12x12xf32>
    %1033 = arith.addf %1026, %1032 : vector<12x12xf32>
    %1034 = arith.index_cast %948 : i32 to index
    %c12_666 = arith.constant 12 : index
    %1035 = memref.load %arg3[%1034, %c12_666] : memref<16x27xf32, #tpu.memory_space<smem>>
    %c12_667 = arith.constant 12 : index
    %c0_668 = arith.constant 0 : index
    %c0_669 = arith.constant 0 : index
    %1036 = vector.load %arg6[%c12_667, %c0_668, %c0_669] : memref<27x12x12xf32, #tpu.memory_space<vmem>>, vector<1x12x12xf32>
    %1037 = vector.shape_cast %1036 : vector<1x12x12xf32> to vector<12x12xf32>
    %1038 = vector.broadcast %1035 : f32 to vector<12x12xf32>
    %1039 = arith.mulf %1038, %1037 : vector<12x12xf32>
    %1040 = arith.addf %1033, %1039 : vector<12x12xf32>
    %1041 = arith.index_cast %948 : i32 to index
    %c13_670 = arith.constant 13 : index
    %1042 = memref.load %arg3[%1041, %c13_670] : memref<16x27xf32, #tpu.memory_space<smem>>
    %c13_671 = arith.constant 13 : index
    %c0_672 = arith.constant 0 : index
    %c0_673 = arith.constant 0 : index
    %1043 = vector.load %arg6[%c13_671, %c0_672, %c0_673] : memref<27x12x12xf32, #tpu.memory_space<vmem>>, vector<1x12x12xf32>
    %1044 = vector.shape_cast %1043 : vector<1x12x12xf32> to vector<12x12xf32>
    %1045 = vector.broadcast %1042 : f32 to vector<12x12xf32>
    %1046 = arith.mulf %1045, %1044 : vector<12x12xf32>
    %1047 = arith.addf %1040, %1046 : vector<12x12xf32>
    %1048 = arith.index_cast %948 : i32 to index
    %c14_674 = arith.constant 14 : index
    %1049 = memref.load %arg3[%1048, %c14_674] : memref<16x27xf32, #tpu.memory_space<smem>>
    %c14_675 = arith.constant 14 : index
    %c0_676 = arith.constant 0 : index
    %c0_677 = arith.constant 0 : index
    %1050 = vector.load %arg6[%c14_675, %c0_676, %c0_677] : memref<27x12x12xf32, #tpu.memory_space<vmem>>, vector<1x12x12xf32>
    %1051 = vector.shape_cast %1050 : vector<1x12x12xf32> to vector<12x12xf32>
    %1052 = vector.broadcast %1049 : f32 to vector<12x12xf32>
    %1053 = arith.mulf %1052, %1051 : vector<12x12xf32>
    %1054 = arith.addf %1047, %1053 : vector<12x12xf32>
    %1055 = arith.index_cast %948 : i32 to index
    %c15_678 = arith.constant 15 : index
    %1056 = memref.load %arg3[%1055, %c15_678] : memref<16x27xf32, #tpu.memory_space<smem>>
    %c15_679 = arith.constant 15 : index
    %c0_680 = arith.constant 0 : index
    %c0_681 = arith.constant 0 : index
    %1057 = vector.load %arg6[%c15_679, %c0_680, %c0_681] : memref<27x12x12xf32, #tpu.memory_space<vmem>>, vector<1x12x12xf32>
    %1058 = vector.shape_cast %1057 : vector<1x12x12xf32> to vector<12x12xf32>
    %1059 = vector.broadcast %1056 : f32 to vector<12x12xf32>
    %1060 = arith.mulf %1059, %1058 : vector<12x12xf32>
    %1061 = arith.addf %1054, %1060 : vector<12x12xf32>
    %1062 = arith.index_cast %948 : i32 to index
    %c16_682 = arith.constant 16 : index
    %1063 = memref.load %arg3[%1062, %c16_682] : memref<16x27xf32, #tpu.memory_space<smem>>
    %c16_683 = arith.constant 16 : index
    %c0_684 = arith.constant 0 : index
    %c0_685 = arith.constant 0 : index
    %1064 = vector.load %arg6[%c16_683, %c0_684, %c0_685] : memref<27x12x12xf32, #tpu.memory_space<vmem>>, vector<1x12x12xf32>
    %1065 = vector.shape_cast %1064 : vector<1x12x12xf32> to vector<12x12xf32>
    %1066 = vector.broadcast %1063 : f32 to vector<12x12xf32>
    %1067 = arith.mulf %1066, %1065 : vector<12x12xf32>
    %1068 = arith.addf %1061, %1067 : vector<12x12xf32>
    %1069 = arith.index_cast %948 : i32 to index
    %c17_686 = arith.constant 17 : index
    %1070 = memref.load %arg3[%1069, %c17_686] : memref<16x27xf32, #tpu.memory_space<smem>>
    %c17_687 = arith.constant 17 : index
    %c0_688 = arith.constant 0 : index
    %c0_689 = arith.constant 0 : index
    %1071 = vector.load %arg6[%c17_687, %c0_688, %c0_689] : memref<27x12x12xf32, #tpu.memory_space<vmem>>, vector<1x12x12xf32>
    %1072 = vector.shape_cast %1071 : vector<1x12x12xf32> to vector<12x12xf32>
    %1073 = vector.broadcast %1070 : f32 to vector<12x12xf32>
    %1074 = arith.mulf %1073, %1072 : vector<12x12xf32>
    %1075 = arith.addf %1068, %1074 : vector<12x12xf32>
    %1076 = arith.index_cast %948 : i32 to index
    %c18_690 = arith.constant 18 : index
    %1077 = memref.load %arg3[%1076, %c18_690] : memref<16x27xf32, #tpu.memory_space<smem>>
    %c18_691 = arith.constant 18 : index
    %c0_692 = arith.constant 0 : index
    %c0_693 = arith.constant 0 : index
    %1078 = vector.load %arg6[%c18_691, %c0_692, %c0_693] : memref<27x12x12xf32, #tpu.memory_space<vmem>>, vector<1x12x12xf32>
    %1079 = vector.shape_cast %1078 : vector<1x12x12xf32> to vector<12x12xf32>
    %1080 = vector.broadcast %1077 : f32 to vector<12x12xf32>
    %1081 = arith.mulf %1080, %1079 : vector<12x12xf32>
    %1082 = arith.addf %1075, %1081 : vector<12x12xf32>
    %1083 = arith.index_cast %948 : i32 to index
    %c19_694 = arith.constant 19 : index
    %1084 = memref.load %arg3[%1083, %c19_694] : memref<16x27xf32, #tpu.memory_space<smem>>
    %c19_695 = arith.constant 19 : index
    %c0_696 = arith.constant 0 : index
    %c0_697 = arith.constant 0 : index
    %1085 = vector.load %arg6[%c19_695, %c0_696, %c0_697] : memref<27x12x12xf32, #tpu.memory_space<vmem>>, vector<1x12x12xf32>
    %1086 = vector.shape_cast %1085 : vector<1x12x12xf32> to vector<12x12xf32>
    %1087 = vector.broadcast %1084 : f32 to vector<12x12xf32>
    %1088 = arith.mulf %1087, %1086 : vector<12x12xf32>
    %1089 = arith.addf %1082, %1088 : vector<12x12xf32>
    %1090 = arith.index_cast %948 : i32 to index
    %c20_698 = arith.constant 20 : index
    %1091 = memref.load %arg3[%1090, %c20_698] : memref<16x27xf32, #tpu.memory_space<smem>>
    %c20_699 = arith.constant 20 : index
    %c0_700 = arith.constant 0 : index
    %c0_701 = arith.constant 0 : index
    %1092 = vector.load %arg6[%c20_699, %c0_700, %c0_701] : memref<27x12x12xf32, #tpu.memory_space<vmem>>, vector<1x12x12xf32>
    %1093 = vector.shape_cast %1092 : vector<1x12x12xf32> to vector<12x12xf32>
    %1094 = vector.broadcast %1091 : f32 to vector<12x12xf32>
    %1095 = arith.mulf %1094, %1093 : vector<12x12xf32>
    %1096 = arith.addf %1089, %1095 : vector<12x12xf32>
    %1097 = arith.index_cast %948 : i32 to index
    %c21_702 = arith.constant 21 : index
    %1098 = memref.load %arg3[%1097, %c21_702] : memref<16x27xf32, #tpu.memory_space<smem>>
    %c21_703 = arith.constant 21 : index
    %c0_704 = arith.constant 0 : index
    %c0_705 = arith.constant 0 : index
    %1099 = vector.load %arg6[%c21_703, %c0_704, %c0_705] : memref<27x12x12xf32, #tpu.memory_space<vmem>>, vector<1x12x12xf32>
    %1100 = vector.shape_cast %1099 : vector<1x12x12xf32> to vector<12x12xf32>
    %1101 = vector.broadcast %1098 : f32 to vector<12x12xf32>
    %1102 = arith.mulf %1101, %1100 : vector<12x12xf32>
    %1103 = arith.addf %1096, %1102 : vector<12x12xf32>
    %1104 = arith.index_cast %948 : i32 to index
    %c22_706 = arith.constant 22 : index
    %1105 = memref.load %arg3[%1104, %c22_706] : memref<16x27xf32, #tpu.memory_space<smem>>
    %c22_707 = arith.constant 22 : index
    %c0_708 = arith.constant 0 : index
    %c0_709 = arith.constant 0 : index
    %1106 = vector.load %arg6[%c22_707, %c0_708, %c0_709] : memref<27x12x12xf32, #tpu.memory_space<vmem>>, vector<1x12x12xf32>
    %1107 = vector.shape_cast %1106 : vector<1x12x12xf32> to vector<12x12xf32>
    %1108 = vector.broadcast %1105 : f32 to vector<12x12xf32>
    %1109 = arith.mulf %1108, %1107 : vector<12x12xf32>
    %1110 = arith.addf %1103, %1109 : vector<12x12xf32>
    %1111 = arith.index_cast %948 : i32 to index
    %c23_710 = arith.constant 23 : index
    %1112 = memref.load %arg3[%1111, %c23_710] : memref<16x27xf32, #tpu.memory_space<smem>>
    %c23_711 = arith.constant 23 : index
    %c0_712 = arith.constant 0 : index
    %c0_713 = arith.constant 0 : index
    %1113 = vector.load %arg6[%c23_711, %c0_712, %c0_713] : memref<27x12x12xf32, #tpu.memory_space<vmem>>, vector<1x12x12xf32>
    %1114 = vector.shape_cast %1113 : vector<1x12x12xf32> to vector<12x12xf32>
    %1115 = vector.broadcast %1112 : f32 to vector<12x12xf32>
    %1116 = arith.mulf %1115, %1114 : vector<12x12xf32>
    %1117 = arith.addf %1110, %1116 : vector<12x12xf32>
    %1118 = arith.index_cast %948 : i32 to index
    %c24_714 = arith.constant 24 : index
    %1119 = memref.load %arg3[%1118, %c24_714] : memref<16x27xf32, #tpu.memory_space<smem>>
    %c24_715 = arith.constant 24 : index
    %c0_716 = arith.constant 0 : index
    %c0_717 = arith.constant 0 : index
    %1120 = vector.load %arg6[%c24_715, %c0_716, %c0_717] : memref<27x12x12xf32, #tpu.memory_space<vmem>>, vector<1x12x12xf32>
    %1121 = vector.shape_cast %1120 : vector<1x12x12xf32> to vector<12x12xf32>
    %1122 = vector.broadcast %1119 : f32 to vector<12x12xf32>
    %1123 = arith.mulf %1122, %1121 : vector<12x12xf32>
    %1124 = arith.addf %1117, %1123 : vector<12x12xf32>
    %1125 = arith.index_cast %948 : i32 to index
    %c25_718 = arith.constant 25 : index
    %1126 = memref.load %arg3[%1125, %c25_718] : memref<16x27xf32, #tpu.memory_space<smem>>
    %c25_719 = arith.constant 25 : index
    %c0_720 = arith.constant 0 : index
    %c0_721 = arith.constant 0 : index
    %1127 = vector.load %arg6[%c25_719, %c0_720, %c0_721] : memref<27x12x12xf32, #tpu.memory_space<vmem>>, vector<1x12x12xf32>
    %1128 = vector.shape_cast %1127 : vector<1x12x12xf32> to vector<12x12xf32>
    %1129 = vector.broadcast %1126 : f32 to vector<12x12xf32>
    %1130 = arith.mulf %1129, %1128 : vector<12x12xf32>
    %1131 = arith.addf %1124, %1130 : vector<12x12xf32>
    %1132 = arith.index_cast %948 : i32 to index
    %c26_722 = arith.constant 26 : index
    %1133 = memref.load %arg3[%1132, %c26_722] : memref<16x27xf32, #tpu.memory_space<smem>>
    %c26_723 = arith.constant 26 : index
    %c0_724 = arith.constant 0 : index
    %c0_725 = arith.constant 0 : index
    %1134 = vector.load %arg6[%c26_723, %c0_724, %c0_725] : memref<27x12x12xf32, #tpu.memory_space<vmem>>, vector<1x12x12xf32>
    %1135 = vector.shape_cast %1134 : vector<1x12x12xf32> to vector<12x12xf32>
    %1136 = vector.broadcast %1133 : f32 to vector<12x12xf32>
    %1137 = arith.mulf %1136, %1135 : vector<12x12xf32>
    %1138 = arith.addf %1131, %1137 : vector<12x12xf32>
    %1139 = arith.index_cast %948 : i32 to index
    %1140 = memref.load %arg4[%1139] : memref<16xf32, #tpu.memory_space<smem>>
    %1141 = vector.broadcast %1140 : f32 to vector<12x12xf32>
    %1142 = arith.addf %1138, %1141 : vector<12x12xf32>
    %1143 = arith.negf %1142 : vector<12x12xf32>
    %1144 = math.exp %1143 : vector<12x12xf32>
    %cst_726 = arith.constant 1.000000e+00 : f32
    %1145 = vector.broadcast %cst_726 : f32 to vector<12x12xf32>
    %1146 = arith.addf %1145, %1144 : vector<12x12xf32>
    %1147 = arith.divf %1145, %1146 : vector<12x12xf32>
    %c0_727 = arith.constant 0 : index
    %c4_728 = arith.constant 4 : index
    %c0_729 = arith.constant 0 : index
    %c0_730 = arith.constant 0 : index
    %1148 = vector.load %arg5[%c0_727, %c4_728, %c0_729, %c0_730] : memref<1x8x12x12xf32, #tpu.memory_space<vmem>>, vector<1x1x12x12xf32>
    %1149 = vector.shape_cast %1148 : vector<1x1x12x12xf32> to vector<12x12xf32>
    %1150 = vector.shape_cast %1147 : vector<12x12xf32> to vector<1x1x12x12xf32>
    tpu.vector_store %arg5[%c0_727, %c4_728, %c0_729, %c0_730], %1150 {strides = array<i32>} : memref<1x8x12x12xf32, #tpu.memory_space<vmem>>, vector<1x1x12x12xf32>,
    %c5_i32 = arith.constant 5 : i32
    %1151 = arith.addi %0, %c5_i32 : i32
    %cst_731 = arith.constant 0.000000e+00 : f32
    %1152 = vector.broadcast %cst_731 : f32 to vector<12x12xf32>
    %1153 = arith.index_cast %1151 : i32 to index
    %c0_732 = arith.constant 0 : index
    %1154 = memref.load %arg3[%1153, %c0_732] : memref<16x27xf32, #tpu.memory_space<smem>>
    %c0_733 = arith.constant 0 : index
    %c0_734 = arith.constant 0 : index
    %c0_735 = arith.constant 0 : index
    %1155 = vector.load %arg6[%c0_733, %c0_734, %c0_735] : memref<27x12x12xf32, #tpu.memory_space<vmem>>, vector<1x12x12xf32>
    %1156 = vector.shape_cast %1155 : vector<1x12x12xf32> to vector<12x12xf32>
    %1157 = vector.broadcast %1154 : f32 to vector<12x12xf32>
    %1158 = arith.mulf %1157, %1156 : vector<12x12xf32>
    %1159 = arith.addf %1152, %1158 : vector<12x12xf32>
    %1160 = arith.index_cast %1151 : i32 to index
    %c1_736 = arith.constant 1 : index
    %1161 = memref.load %arg3[%1160, %c1_736] : memref<16x27xf32, #tpu.memory_space<smem>>
    %c1_737 = arith.constant 1 : index
    %c0_738 = arith.constant 0 : index
    %c0_739 = arith.constant 0 : index
    %1162 = vector.load %arg6[%c1_737, %c0_738, %c0_739] : memref<27x12x12xf32, #tpu.memory_space<vmem>>, vector<1x12x12xf32>
    %1163 = vector.shape_cast %1162 : vector<1x12x12xf32> to vector<12x12xf32>
    %1164 = vector.broadcast %1161 : f32 to vector<12x12xf32>
    %1165 = arith.mulf %1164, %1163 : vector<12x12xf32>
    %1166 = arith.addf %1159, %1165 : vector<12x12xf32>
    %1167 = arith.index_cast %1151 : i32 to index
    %c2_740 = arith.constant 2 : index
    %1168 = memref.load %arg3[%1167, %c2_740] : memref<16x27xf32, #tpu.memory_space<smem>>
    %c2_741 = arith.constant 2 : index
    %c0_742 = arith.constant 0 : index
    %c0_743 = arith.constant 0 : index
    %1169 = vector.load %arg6[%c2_741, %c0_742, %c0_743] : memref<27x12x12xf32, #tpu.memory_space<vmem>>, vector<1x12x12xf32>
    %1170 = vector.shape_cast %1169 : vector<1x12x12xf32> to vector<12x12xf32>
    %1171 = vector.broadcast %1168 : f32 to vector<12x12xf32>
    %1172 = arith.mulf %1171, %1170 : vector<12x12xf32>
    %1173 = arith.addf %1166, %1172 : vector<12x12xf32>
    %1174 = arith.index_cast %1151 : i32 to index
    %c3_744 = arith.constant 3 : index
    %1175 = memref.load %arg3[%1174, %c3_744] : memref<16x27xf32, #tpu.memory_space<smem>>
    %c3_745 = arith.constant 3 : index
    %c0_746 = arith.constant 0 : index
    %c0_747 = arith.constant 0 : index
    %1176 = vector.load %arg6[%c3_745, %c0_746, %c0_747] : memref<27x12x12xf32, #tpu.memory_space<vmem>>, vector<1x12x12xf32>
    %1177 = vector.shape_cast %1176 : vector<1x12x12xf32> to vector<12x12xf32>
    %1178 = vector.broadcast %1175 : f32 to vector<12x12xf32>
    %1179 = arith.mulf %1178, %1177 : vector<12x12xf32>
    %1180 = arith.addf %1173, %1179 : vector<12x12xf32>
    %1181 = arith.index_cast %1151 : i32 to index
    %c4_748 = arith.constant 4 : index
    %1182 = memref.load %arg3[%1181, %c4_748] : memref<16x27xf32, #tpu.memory_space<smem>>
    %c4_749 = arith.constant 4 : index
    %c0_750 = arith.constant 0 : index
    %c0_751 = arith.constant 0 : index
    %1183 = vector.load %arg6[%c4_749, %c0_750, %c0_751] : memref<27x12x12xf32, #tpu.memory_space<vmem>>, vector<1x12x12xf32>
    %1184 = vector.shape_cast %1183 : vector<1x12x12xf32> to vector<12x12xf32>
    %1185 = vector.broadcast %1182 : f32 to vector<12x12xf32>
    %1186 = arith.mulf %1185, %1184 : vector<12x12xf32>
    %1187 = arith.addf %1180, %1186 : vector<12x12xf32>
    %1188 = arith.index_cast %1151 : i32 to index
    %c5_752 = arith.constant 5 : index
    %1189 = memref.load %arg3[%1188, %c5_752] : memref<16x27xf32, #tpu.memory_space<smem>>
    %c5_753 = arith.constant 5 : index
    %c0_754 = arith.constant 0 : index
    %c0_755 = arith.constant 0 : index
    %1190 = vector.load %arg6[%c5_753, %c0_754, %c0_755] : memref<27x12x12xf32, #tpu.memory_space<vmem>>, vector<1x12x12xf32>
    %1191 = vector.shape_cast %1190 : vector<1x12x12xf32> to vector<12x12xf32>
    %1192 = vector.broadcast %1189 : f32 to vector<12x12xf32>
    %1193 = arith.mulf %1192, %1191 : vector<12x12xf32>
    %1194 = arith.addf %1187, %1193 : vector<12x12xf32>
    %1195 = arith.index_cast %1151 : i32 to index
    %c6_756 = arith.constant 6 : index
    %1196 = memref.load %arg3[%1195, %c6_756] : memref<16x27xf32, #tpu.memory_space<smem>>
    %c6_757 = arith.constant 6 : index
    %c0_758 = arith.constant 0 : index
    %c0_759 = arith.constant 0 : index
    %1197 = vector.load %arg6[%c6_757, %c0_758, %c0_759] : memref<27x12x12xf32, #tpu.memory_space<vmem>>, vector<1x12x12xf32>
    %1198 = vector.shape_cast %1197 : vector<1x12x12xf32> to vector<12x12xf32>
    %1199 = vector.broadcast %1196 : f32 to vector<12x12xf32>
    %1200 = arith.mulf %1199, %1198 : vector<12x12xf32>
    %1201 = arith.addf %1194, %1200 : vector<12x12xf32>
    %1202 = arith.index_cast %1151 : i32 to index
    %c7_760 = arith.constant 7 : index
    %1203 = memref.load %arg3[%1202, %c7_760] : memref<16x27xf32, #tpu.memory_space<smem>>
    %c7_761 = arith.constant 7 : index
    %c0_762 = arith.constant 0 : index
    %c0_763 = arith.constant 0 : index
    %1204 = vector.load %arg6[%c7_761, %c0_762, %c0_763] : memref<27x12x12xf32, #tpu.memory_space<vmem>>, vector<1x12x12xf32>
    %1205 = vector.shape_cast %1204 : vector<1x12x12xf32> to vector<12x12xf32>
    %1206 = vector.broadcast %1203 : f32 to vector<12x12xf32>
    %1207 = arith.mulf %1206, %1205 : vector<12x12xf32>
    %1208 = arith.addf %1201, %1207 : vector<12x12xf32>
    %1209 = arith.index_cast %1151 : i32 to index
    %c8_764 = arith.constant 8 : index
    %1210 = memref.load %arg3[%1209, %c8_764] : memref<16x27xf32, #tpu.memory_space<smem>>
    %c8_765 = arith.constant 8 : index
    %c0_766 = arith.constant 0 : index
    %c0_767 = arith.constant 0 : index
    %1211 = vector.load %arg6[%c8_765, %c0_766, %c0_767] : memref<27x12x12xf32, #tpu.memory_space<vmem>>, vector<1x12x12xf32>
    %1212 = vector.shape_cast %1211 : vector<1x12x12xf32> to vector<12x12xf32>
    %1213 = vector.broadcast %1210 : f32 to vector<12x12xf32>
    %1214 = arith.mulf %1213, %1212 : vector<12x12xf32>
    %1215 = arith.addf %1208, %1214 : vector<12x12xf32>
    %1216 = arith.index_cast %1151 : i32 to index
    %c9_768 = arith.constant 9 : index
    %1217 = memref.load %arg3[%1216, %c9_768] : memref<16x27xf32, #tpu.memory_space<smem>>
    %c9_769 = arith.constant 9 : index
    %c0_770 = arith.constant 0 : index
    %c0_771 = arith.constant 0 : index
    %1218 = vector.load %arg6[%c9_769, %c0_770, %c0_771] : memref<27x12x12xf32, #tpu.memory_space<vmem>>, vector<1x12x12xf32>
    %1219 = vector.shape_cast %1218 : vector<1x12x12xf32> to vector<12x12xf32>
    %1220 = vector.broadcast %1217 : f32 to vector<12x12xf32>
    %1221 = arith.mulf %1220, %1219 : vector<12x12xf32>
    %1222 = arith.addf %1215, %1221 : vector<12x12xf32>
    %1223 = arith.index_cast %1151 : i32 to index
    %c10_772 = arith.constant 10 : index
    %1224 = memref.load %arg3[%1223, %c10_772] : memref<16x27xf32, #tpu.memory_space<smem>>
    %c10_773 = arith.constant 10 : index
    %c0_774 = arith.constant 0 : index
    %c0_775 = arith.constant 0 : index
    %1225 = vector.load %arg6[%c10_773, %c0_774, %c0_775] : memref<27x12x12xf32, #tpu.memory_space<vmem>>, vector<1x12x12xf32>
    %1226 = vector.shape_cast %1225 : vector<1x12x12xf32> to vector<12x12xf32>
    %1227 = vector.broadcast %1224 : f32 to vector<12x12xf32>
    %1228 = arith.mulf %1227, %1226 : vector<12x12xf32>
    %1229 = arith.addf %1222, %1228 : vector<12x12xf32>
    %1230 = arith.index_cast %1151 : i32 to index
    %c11_776 = arith.constant 11 : index
    %1231 = memref.load %arg3[%1230, %c11_776] : memref<16x27xf32, #tpu.memory_space<smem>>
    %c11_777 = arith.constant 11 : index
    %c0_778 = arith.constant 0 : index
    %c0_779 = arith.constant 0 : index
    %1232 = vector.load %arg6[%c11_777, %c0_778, %c0_779] : memref<27x12x12xf32, #tpu.memory_space<vmem>>, vector<1x12x12xf32>
    %1233 = vector.shape_cast %1232 : vector<1x12x12xf32> to vector<12x12xf32>
    %1234 = vector.broadcast %1231 : f32 to vector<12x12xf32>
    %1235 = arith.mulf %1234, %1233 : vector<12x12xf32>
    %1236 = arith.addf %1229, %1235 : vector<12x12xf32>
    %1237 = arith.index_cast %1151 : i32 to index
    %c12_780 = arith.constant 12 : index
    %1238 = memref.load %arg3[%1237, %c12_780] : memref<16x27xf32, #tpu.memory_space<smem>>
    %c12_781 = arith.constant 12 : index
    %c0_782 = arith.constant 0 : index
    %c0_783 = arith.constant 0 : index
    %1239 = vector.load %arg6[%c12_781, %c0_782, %c0_783] : memref<27x12x12xf32, #tpu.memory_space<vmem>>, vector<1x12x12xf32>
    %1240 = vector.shape_cast %1239 : vector<1x12x12xf32> to vector<12x12xf32>
    %1241 = vector.broadcast %1238 : f32 to vector<12x12xf32>
    %1242 = arith.mulf %1241, %1240 : vector<12x12xf32>
    %1243 = arith.addf %1236, %1242 : vector<12x12xf32>
    %1244 = arith.index_cast %1151 : i32 to index
    %c13_784 = arith.constant 13 : index
    %1245 = memref.load %arg3[%1244, %c13_784] : memref<16x27xf32, #tpu.memory_space<smem>>
    %c13_785 = arith.constant 13 : index
    %c0_786 = arith.constant 0 : index
    %c0_787 = arith.constant 0 : index
    %1246 = vector.load %arg6[%c13_785, %c0_786, %c0_787] : memref<27x12x12xf32, #tpu.memory_space<vmem>>, vector<1x12x12xf32>
    %1247 = vector.shape_cast %1246 : vector<1x12x12xf32> to vector<12x12xf32>
    %1248 = vector.broadcast %1245 : f32 to vector<12x12xf32>
    %1249 = arith.mulf %1248, %1247 : vector<12x12xf32>
    %1250 = arith.addf %1243, %1249 : vector<12x12xf32>
    %1251 = arith.index_cast %1151 : i32 to index
    %c14_788 = arith.constant 14 : index
    %1252 = memref.load %arg3[%1251, %c14_788] : memref<16x27xf32, #tpu.memory_space<smem>>
    %c14_789 = arith.constant 14 : index
    %c0_790 = arith.constant 0 : index
    %c0_791 = arith.constant 0 : index
    %1253 = vector.load %arg6[%c14_789, %c0_790, %c0_791] : memref<27x12x12xf32, #tpu.memory_space<vmem>>, vector<1x12x12xf32>
    %1254 = vector.shape_cast %1253 : vector<1x12x12xf32> to vector<12x12xf32>
    %1255 = vector.broadcast %1252 : f32 to vector<12x12xf32>
    %1256 = arith.mulf %1255, %1254 : vector<12x12xf32>
    %1257 = arith.addf %1250, %1256 : vector<12x12xf32>
    %1258 = arith.index_cast %1151 : i32 to index
    %c15_792 = arith.constant 15 : index
    %1259 = memref.load %arg3[%1258, %c15_792] : memref<16x27xf32, #tpu.memory_space<smem>>
    %c15_793 = arith.constant 15 : index
    %c0_794 = arith.constant 0 : index
    %c0_795 = arith.constant 0 : index
    %1260 = vector.load %arg6[%c15_793, %c0_794, %c0_795] : memref<27x12x12xf32, #tpu.memory_space<vmem>>, vector<1x12x12xf32>
    %1261 = vector.shape_cast %1260 : vector<1x12x12xf32> to vector<12x12xf32>
    %1262 = vector.broadcast %1259 : f32 to vector<12x12xf32>
    %1263 = arith.mulf %1262, %1261 : vector<12x12xf32>
    %1264 = arith.addf %1257, %1263 : vector<12x12xf32>
    %1265 = arith.index_cast %1151 : i32 to index
    %c16_796 = arith.constant 16 : index
    %1266 = memref.load %arg3[%1265, %c16_796] : memref<16x27xf32, #tpu.memory_space<smem>>
    %c16_797 = arith.constant 16 : index
    %c0_798 = arith.constant 0 : index
    %c0_799 = arith.constant 0 : index
    %1267 = vector.load %arg6[%c16_797, %c0_798, %c0_799] : memref<27x12x12xf32, #tpu.memory_space<vmem>>, vector<1x12x12xf32>
    %1268 = vector.shape_cast %1267 : vector<1x12x12xf32> to vector<12x12xf32>
    %1269 = vector.broadcast %1266 : f32 to vector<12x12xf32>
    %1270 = arith.mulf %1269, %1268 : vector<12x12xf32>
    %1271 = arith.addf %1264, %1270 : vector<12x12xf32>
    %1272 = arith.index_cast %1151 : i32 to index
    %c17_800 = arith.constant 17 : index
    %1273 = memref.load %arg3[%1272, %c17_800] : memref<16x27xf32, #tpu.memory_space<smem>>
    %c17_801 = arith.constant 17 : index
    %c0_802 = arith.constant 0 : index
    %c0_803 = arith.constant 0 : index
    %1274 = vector.load %arg6[%c17_801, %c0_802, %c0_803] : memref<27x12x12xf32, #tpu.memory_space<vmem>>, vector<1x12x12xf32>
    %1275 = vector.shape_cast %1274 : vector<1x12x12xf32> to vector<12x12xf32>
    %1276 = vector.broadcast %1273 : f32 to vector<12x12xf32>
    %1277 = arith.mulf %1276, %1275 : vector<12x12xf32>
    %1278 = arith.addf %1271, %1277 : vector<12x12xf32>
    %1279 = arith.index_cast %1151 : i32 to index
    %c18_804 = arith.constant 18 : index
    %1280 = memref.load %arg3[%1279, %c18_804] : memref<16x27xf32, #tpu.memory_space<smem>>
    %c18_805 = arith.constant 18 : index
    %c0_806 = arith.constant 0 : index
    %c0_807 = arith.constant 0 : index
    %1281 = vector.load %arg6[%c18_805, %c0_806, %c0_807] : memref<27x12x12xf32, #tpu.memory_space<vmem>>, vector<1x12x12xf32>
    %1282 = vector.shape_cast %1281 : vector<1x12x12xf32> to vector<12x12xf32>
    %1283 = vector.broadcast %1280 : f32 to vector<12x12xf32>
    %1284 = arith.mulf %1283, %1282 : vector<12x12xf32>
    %1285 = arith.addf %1278, %1284 : vector<12x12xf32>
    %1286 = arith.index_cast %1151 : i32 to index
    %c19_808 = arith.constant 19 : index
    %1287 = memref.load %arg3[%1286, %c19_808] : memref<16x27xf32, #tpu.memory_space<smem>>
    %c19_809 = arith.constant 19 : index
    %c0_810 = arith.constant 0 : index
    %c0_811 = arith.constant 0 : index
    %1288 = vector.load %arg6[%c19_809, %c0_810, %c0_811] : memref<27x12x12xf32, #tpu.memory_space<vmem>>, vector<1x12x12xf32>
    %1289 = vector.shape_cast %1288 : vector<1x12x12xf32> to vector<12x12xf32>
    %1290 = vector.broadcast %1287 : f32 to vector<12x12xf32>
    %1291 = arith.mulf %1290, %1289 : vector<12x12xf32>
    %1292 = arith.addf %1285, %1291 : vector<12x12xf32>
    %1293 = arith.index_cast %1151 : i32 to index
    %c20_812 = arith.constant 20 : index
    %1294 = memref.load %arg3[%1293, %c20_812] : memref<16x27xf32, #tpu.memory_space<smem>>
    %c20_813 = arith.constant 20 : index
    %c0_814 = arith.constant 0 : index
    %c0_815 = arith.constant 0 : index
    %1295 = vector.load %arg6[%c20_813, %c0_814, %c0_815] : memref<27x12x12xf32, #tpu.memory_space<vmem>>, vector<1x12x12xf32>
    %1296 = vector.shape_cast %1295 : vector<1x12x12xf32> to vector<12x12xf32>
    %1297 = vector.broadcast %1294 : f32 to vector<12x12xf32>
    %1298 = arith.mulf %1297, %1296 : vector<12x12xf32>
    %1299 = arith.addf %1292, %1298 : vector<12x12xf32>
    %1300 = arith.index_cast %1151 : i32 to index
    %c21_816 = arith.constant 21 : index
    %1301 = memref.load %arg3[%1300, %c21_816] : memref<16x27xf32, #tpu.memory_space<smem>>
    %c21_817 = arith.constant 21 : index
    %c0_818 = arith.constant 0 : index
    %c0_819 = arith.constant 0 : index
    %1302 = vector.load %arg6[%c21_817, %c0_818, %c0_819] : memref<27x12x12xf32, #tpu.memory_space<vmem>>, vector<1x12x12xf32>
    %1303 = vector.shape_cast %1302 : vector<1x12x12xf32> to vector<12x12xf32>
    %1304 = vector.broadcast %1301 : f32 to vector<12x12xf32>
    %1305 = arith.mulf %1304, %1303 : vector<12x12xf32>
    %1306 = arith.addf %1299, %1305 : vector<12x12xf32>
    %1307 = arith.index_cast %1151 : i32 to index
    %c22_820 = arith.constant 22 : index
    %1308 = memref.load %arg3[%1307, %c22_820] : memref<16x27xf32, #tpu.memory_space<smem>>
    %c22_821 = arith.constant 22 : index
    %c0_822 = arith.constant 0 : index
    %c0_823 = arith.constant 0 : index
    %1309 = vector.load %arg6[%c22_821, %c0_822, %c0_823] : memref<27x12x12xf32, #tpu.memory_space<vmem>>, vector<1x12x12xf32>
    %1310 = vector.shape_cast %1309 : vector<1x12x12xf32> to vector<12x12xf32>
    %1311 = vector.broadcast %1308 : f32 to vector<12x12xf32>
    %1312 = arith.mulf %1311, %1310 : vector<12x12xf32>
    %1313 = arith.addf %1306, %1312 : vector<12x12xf32>
    %1314 = arith.index_cast %1151 : i32 to index
    %c23_824 = arith.constant 23 : index
    %1315 = memref.load %arg3[%1314, %c23_824] : memref<16x27xf32, #tpu.memory_space<smem>>
    %c23_825 = arith.constant 23 : index
    %c0_826 = arith.constant 0 : index
    %c0_827 = arith.constant 0 : index
    %1316 = vector.load %arg6[%c23_825, %c0_826, %c0_827] : memref<27x12x12xf32, #tpu.memory_space<vmem>>, vector<1x12x12xf32>
    %1317 = vector.shape_cast %1316 : vector<1x12x12xf32> to vector<12x12xf32>
    %1318 = vector.broadcast %1315 : f32 to vector<12x12xf32>
    %1319 = arith.mulf %1318, %1317 : vector<12x12xf32>
    %1320 = arith.addf %1313, %1319 : vector<12x12xf32>
    %1321 = arith.index_cast %1151 : i32 to index
    %c24_828 = arith.constant 24 : index
    %1322 = memref.load %arg3[%1321, %c24_828] : memref<16x27xf32, #tpu.memory_space<smem>>
    %c24_829 = arith.constant 24 : index
    %c0_830 = arith.constant 0 : index
    %c0_831 = arith.constant 0 : index
    %1323 = vector.load %arg6[%c24_829, %c0_830, %c0_831] : memref<27x12x12xf32, #tpu.memory_space<vmem>>, vector<1x12x12xf32>
    %1324 = vector.shape_cast %1323 : vector<1x12x12xf32> to vector<12x12xf32>
    %1325 = vector.broadcast %1322 : f32 to vector<12x12xf32>
    %1326 = arith.mulf %1325, %1324 : vector<12x12xf32>
    %1327 = arith.addf %1320, %1326 : vector<12x12xf32>
    %1328 = arith.index_cast %1151 : i32 to index
    %c25_832 = arith.constant 25 : index
    %1329 = memref.load %arg3[%1328, %c25_832] : memref<16x27xf32, #tpu.memory_space<smem>>
    %c25_833 = arith.constant 25 : index
    %c0_834 = arith.constant 0 : index
    %c0_835 = arith.constant 0 : index
    %1330 = vector.load %arg6[%c25_833, %c0_834, %c0_835] : memref<27x12x12xf32, #tpu.memory_space<vmem>>, vector<1x12x12xf32>
    %1331 = vector.shape_cast %1330 : vector<1x12x12xf32> to vector<12x12xf32>
    %1332 = vector.broadcast %1329 : f32 to vector<12x12xf32>
    %1333 = arith.mulf %1332, %1331 : vector<12x12xf32>
    %1334 = arith.addf %1327, %1333 : vector<12x12xf32>
    %1335 = arith.index_cast %1151 : i32 to index
    %c26_836 = arith.constant 26 : index
    %1336 = memref.load %arg3[%1335, %c26_836] : memref<16x27xf32, #tpu.memory_space<smem>>
    %c26_837 = arith.constant 26 : index
    %c0_838 = arith.constant 0 : index
    %c0_839 = arith.constant 0 : index
    %1337 = vector.load %arg6[%c26_837, %c0_838, %c0_839] : memref<27x12x12xf32, #tpu.memory_space<vmem>>, vector<1x12x12xf32>
    %1338 = vector.shape_cast %1337 : vector<1x12x12xf32> to vector<12x12xf32>
    %1339 = vector.broadcast %1336 : f32 to vector<12x12xf32>
    %1340 = arith.mulf %1339, %1338 : vector<12x12xf32>
    %1341 = arith.addf %1334, %1340 : vector<12x12xf32>
    %1342 = arith.index_cast %1151 : i32 to index
    %1343 = memref.load %arg4[%1342] : memref<16xf32, #tpu.memory_space<smem>>
    %1344 = vector.broadcast %1343 : f32 to vector<12x12xf32>
    %1345 = arith.addf %1341, %1344 : vector<12x12xf32>
    %1346 = arith.negf %1345 : vector<12x12xf32>
    %1347 = math.exp %1346 : vector<12x12xf32>
    %cst_840 = arith.constant 1.000000e+00 : f32
    %1348 = vector.broadcast %cst_840 : f32 to vector<12x12xf32>
    %1349 = arith.addf %1348, %1347 : vector<12x12xf32>
    %1350 = arith.divf %1348, %1349 : vector<12x12xf32>
    %c0_841 = arith.constant 0 : index
    %c5_842 = arith.constant 5 : index
    %c0_843 = arith.constant 0 : index
    %c0_844 = arith.constant 0 : index
    %1351 = vector.load %arg5[%c0_841, %c5_842, %c0_843, %c0_844] : memref<1x8x12x12xf32, #tpu.memory_space<vmem>>, vector<1x1x12x12xf32>
    %1352 = vector.shape_cast %1351 : vector<1x1x12x12xf32> to vector<12x12xf32>
    %1353 = vector.shape_cast %1350 : vector<12x12xf32> to vector<1x1x12x12xf32>
    tpu.vector_store %arg5[%c0_841, %c5_842, %c0_843, %c0_844], %1353 {strides = array<i32>} : memref<1x8x12x12xf32, #tpu.memory_space<vmem>>, vector<1x1x12x12xf32>,
    %c6_i32 = arith.constant 6 : i32
    %1354 = arith.addi %0, %c6_i32 : i32
    %cst_845 = arith.constant 0.000000e+00 : f32
    %1355 = vector.broadcast %cst_845 : f32 to vector<12x12xf32>
    %1356 = arith.index_cast %1354 : i32 to index
    %c0_846 = arith.constant 0 : index
    %1357 = memref.load %arg3[%1356, %c0_846] : memref<16x27xf32, #tpu.memory_space<smem>>
    %c0_847 = arith.constant 0 : index
    %c0_848 = arith.constant 0 : index
    %c0_849 = arith.constant 0 : index
    %1358 = vector.load %arg6[%c0_847, %c0_848, %c0_849] : memref<27x12x12xf32, #tpu.memory_space<vmem>>, vector<1x12x12xf32>
    %1359 = vector.shape_cast %1358 : vector<1x12x12xf32> to vector<12x12xf32>
    %1360 = vector.broadcast %1357 : f32 to vector<12x12xf32>
    %1361 = arith.mulf %1360, %1359 : vector<12x12xf32>
    %1362 = arith.addf %1355, %1361 : vector<12x12xf32>
    %1363 = arith.index_cast %1354 : i32 to index
    %c1_850 = arith.constant 1 : index
    %1364 = memref.load %arg3[%1363, %c1_850] : memref<16x27xf32, #tpu.memory_space<smem>>
    %c1_851 = arith.constant 1 : index
    %c0_852 = arith.constant 0 : index
    %c0_853 = arith.constant 0 : index
    %1365 = vector.load %arg6[%c1_851, %c0_852, %c0_853] : memref<27x12x12xf32, #tpu.memory_space<vmem>>, vector<1x12x12xf32>
    %1366 = vector.shape_cast %1365 : vector<1x12x12xf32> to vector<12x12xf32>
    %1367 = vector.broadcast %1364 : f32 to vector<12x12xf32>
    %1368 = arith.mulf %1367, %1366 : vector<12x12xf32>
    %1369 = arith.addf %1362, %1368 : vector<12x12xf32>
    %1370 = arith.index_cast %1354 : i32 to index
    %c2_854 = arith.constant 2 : index
    %1371 = memref.load %arg3[%1370, %c2_854] : memref<16x27xf32, #tpu.memory_space<smem>>
    %c2_855 = arith.constant 2 : index
    %c0_856 = arith.constant 0 : index
    %c0_857 = arith.constant 0 : index
    %1372 = vector.load %arg6[%c2_855, %c0_856, %c0_857] : memref<27x12x12xf32, #tpu.memory_space<vmem>>, vector<1x12x12xf32>
    %1373 = vector.shape_cast %1372 : vector<1x12x12xf32> to vector<12x12xf32>
    %1374 = vector.broadcast %1371 : f32 to vector<12x12xf32>
    %1375 = arith.mulf %1374, %1373 : vector<12x12xf32>
    %1376 = arith.addf %1369, %1375 : vector<12x12xf32>
    %1377 = arith.index_cast %1354 : i32 to index
    %c3_858 = arith.constant 3 : index
    %1378 = memref.load %arg3[%1377, %c3_858] : memref<16x27xf32, #tpu.memory_space<smem>>
    %c3_859 = arith.constant 3 : index
    %c0_860 = arith.constant 0 : index
    %c0_861 = arith.constant 0 : index
    %1379 = vector.load %arg6[%c3_859, %c0_860, %c0_861] : memref<27x12x12xf32, #tpu.memory_space<vmem>>, vector<1x12x12xf32>
    %1380 = vector.shape_cast %1379 : vector<1x12x12xf32> to vector<12x12xf32>
    %1381 = vector.broadcast %1378 : f32 to vector<12x12xf32>
    %1382 = arith.mulf %1381, %1380 : vector<12x12xf32>
    %1383 = arith.addf %1376, %1382 : vector<12x12xf32>
    %1384 = arith.index_cast %1354 : i32 to index
    %c4_862 = arith.constant 4 : index
    %1385 = memref.load %arg3[%1384, %c4_862] : memref<16x27xf32, #tpu.memory_space<smem>>
    %c4_863 = arith.constant 4 : index
    %c0_864 = arith.constant 0 : index
    %c0_865 = arith.constant 0 : index
    %1386 = vector.load %arg6[%c4_863, %c0_864, %c0_865] : memref<27x12x12xf32, #tpu.memory_space<vmem>>, vector<1x12x12xf32>
    %1387 = vector.shape_cast %1386 : vector<1x12x12xf32> to vector<12x12xf32>
    %1388 = vector.broadcast %1385 : f32 to vector<12x12xf32>
    %1389 = arith.mulf %1388, %1387 : vector<12x12xf32>
    %1390 = arith.addf %1383, %1389 : vector<12x12xf32>
    %1391 = arith.index_cast %1354 : i32 to index
    %c5_866 = arith.constant 5 : index
    %1392 = memref.load %arg3[%1391, %c5_866] : memref<16x27xf32, #tpu.memory_space<smem>>
    %c5_867 = arith.constant 5 : index
    %c0_868 = arith.constant 0 : index
    %c0_869 = arith.constant 0 : index
    %1393 = vector.load %arg6[%c5_867, %c0_868, %c0_869] : memref<27x12x12xf32, #tpu.memory_space<vmem>>, vector<1x12x12xf32>
    %1394 = vector.shape_cast %1393 : vector<1x12x12xf32> to vector<12x12xf32>
    %1395 = vector.broadcast %1392 : f32 to vector<12x12xf32>
    %1396 = arith.mulf %1395, %1394 : vector<12x12xf32>
    %1397 = arith.addf %1390, %1396 : vector<12x12xf32>
    %1398 = arith.index_cast %1354 : i32 to index
    %c6_870 = arith.constant 6 : index
    %1399 = memref.load %arg3[%1398, %c6_870] : memref<16x27xf32, #tpu.memory_space<smem>>
    %c6_871 = arith.constant 6 : index
    %c0_872 = arith.constant 0 : index
    %c0_873 = arith.constant 0 : index
    %1400 = vector.load %arg6[%c6_871, %c0_872, %c0_873] : memref<27x12x12xf32, #tpu.memory_space<vmem>>, vector<1x12x12xf32>
    %1401 = vector.shape_cast %1400 : vector<1x12x12xf32> to vector<12x12xf32>
    %1402 = vector.broadcast %1399 : f32 to vector<12x12xf32>
    %1403 = arith.mulf %1402, %1401 : vector<12x12xf32>
    %1404 = arith.addf %1397, %1403 : vector<12x12xf32>
    %1405 = arith.index_cast %1354 : i32 to index
    %c7_874 = arith.constant 7 : index
    %1406 = memref.load %arg3[%1405, %c7_874] : memref<16x27xf32, #tpu.memory_space<smem>>
    %c7_875 = arith.constant 7 : index
    %c0_876 = arith.constant 0 : index
    %c0_877 = arith.constant 0 : index
    %1407 = vector.load %arg6[%c7_875, %c0_876, %c0_877] : memref<27x12x12xf32, #tpu.memory_space<vmem>>, vector<1x12x12xf32>
    %1408 = vector.shape_cast %1407 : vector<1x12x12xf32> to vector<12x12xf32>
    %1409 = vector.broadcast %1406 : f32 to vector<12x12xf32>
    %1410 = arith.mulf %1409, %1408 : vector<12x12xf32>
    %1411 = arith.addf %1404, %1410 : vector<12x12xf32>
    %1412 = arith.index_cast %1354 : i32 to index
    %c8_878 = arith.constant 8 : index
    %1413 = memref.load %arg3[%1412, %c8_878] : memref<16x27xf32, #tpu.memory_space<smem>>
    %c8_879 = arith.constant 8 : index
    %c0_880 = arith.constant 0 : index
    %c0_881 = arith.constant 0 : index
    %1414 = vector.load %arg6[%c8_879, %c0_880, %c0_881] : memref<27x12x12xf32, #tpu.memory_space<vmem>>, vector<1x12x12xf32>
    %1415 = vector.shape_cast %1414 : vector<1x12x12xf32> to vector<12x12xf32>
    %1416 = vector.broadcast %1413 : f32 to vector<12x12xf32>
    %1417 = arith.mulf %1416, %1415 : vector<12x12xf32>
    %1418 = arith.addf %1411, %1417 : vector<12x12xf32>
    %1419 = arith.index_cast %1354 : i32 to index
    %c9_882 = arith.constant 9 : index
    %1420 = memref.load %arg3[%1419, %c9_882] : memref<16x27xf32, #tpu.memory_space<smem>>
    %c9_883 = arith.constant 9 : index
    %c0_884 = arith.constant 0 : index
    %c0_885 = arith.constant 0 : index
    %1421 = vector.load %arg6[%c9_883, %c0_884, %c0_885] : memref<27x12x12xf32, #tpu.memory_space<vmem>>, vector<1x12x12xf32>
    %1422 = vector.shape_cast %1421 : vector<1x12x12xf32> to vector<12x12xf32>
    %1423 = vector.broadcast %1420 : f32 to vector<12x12xf32>
    %1424 = arith.mulf %1423, %1422 : vector<12x12xf32>
    %1425 = arith.addf %1418, %1424 : vector<12x12xf32>
    %1426 = arith.index_cast %1354 : i32 to index
    %c10_886 = arith.constant 10 : index
    %1427 = memref.load %arg3[%1426, %c10_886] : memref<16x27xf32, #tpu.memory_space<smem>>
    %c10_887 = arith.constant 10 : index
    %c0_888 = arith.constant 0 : index
    %c0_889 = arith.constant 0 : index
    %1428 = vector.load %arg6[%c10_887, %c0_888, %c0_889] : memref<27x12x12xf32, #tpu.memory_space<vmem>>, vector<1x12x12xf32>
    %1429 = vector.shape_cast %1428 : vector<1x12x12xf32> to vector<12x12xf32>
    %1430 = vector.broadcast %1427 : f32 to vector<12x12xf32>
    %1431 = arith.mulf %1430, %1429 : vector<12x12xf32>
    %1432 = arith.addf %1425, %1431 : vector<12x12xf32>
    %1433 = arith.index_cast %1354 : i32 to index
    %c11_890 = arith.constant 11 : index
    %1434 = memref.load %arg3[%1433, %c11_890] : memref<16x27xf32, #tpu.memory_space<smem>>
    %c11_891 = arith.constant 11 : index
    %c0_892 = arith.constant 0 : index
    %c0_893 = arith.constant 0 : index
    %1435 = vector.load %arg6[%c11_891, %c0_892, %c0_893] : memref<27x12x12xf32, #tpu.memory_space<vmem>>, vector<1x12x12xf32>
    %1436 = vector.shape_cast %1435 : vector<1x12x12xf32> to vector<12x12xf32>
    %1437 = vector.broadcast %1434 : f32 to vector<12x12xf32>
    %1438 = arith.mulf %1437, %1436 : vector<12x12xf32>
    %1439 = arith.addf %1432, %1438 : vector<12x12xf32>
    %1440 = arith.index_cast %1354 : i32 to index
    %c12_894 = arith.constant 12 : index
    %1441 = memref.load %arg3[%1440, %c12_894] : memref<16x27xf32, #tpu.memory_space<smem>>
    %c12_895 = arith.constant 12 : index
    %c0_896 = arith.constant 0 : index
    %c0_897 = arith.constant 0 : index
    %1442 = vector.load %arg6[%c12_895, %c0_896, %c0_897] : memref<27x12x12xf32, #tpu.memory_space<vmem>>, vector<1x12x12xf32>
    %1443 = vector.shape_cast %1442 : vector<1x12x12xf32> to vector<12x12xf32>
    %1444 = vector.broadcast %1441 : f32 to vector<12x12xf32>
    %1445 = arith.mulf %1444, %1443 : vector<12x12xf32>
    %1446 = arith.addf %1439, %1445 : vector<12x12xf32>
    %1447 = arith.index_cast %1354 : i32 to index
    %c13_898 = arith.constant 13 : index
    %1448 = memref.load %arg3[%1447, %c13_898] : memref<16x27xf32, #tpu.memory_space<smem>>
    %c13_899 = arith.constant 13 : index
    %c0_900 = arith.constant 0 : index
    %c0_901 = arith.constant 0 : index
    %1449 = vector.load %arg6[%c13_899, %c0_900, %c0_901] : memref<27x12x12xf32, #tpu.memory_space<vmem>>, vector<1x12x12xf32>
    %1450 = vector.shape_cast %1449 : vector<1x12x12xf32> to vector<12x12xf32>
    %1451 = vector.broadcast %1448 : f32 to vector<12x12xf32>
    %1452 = arith.mulf %1451, %1450 : vector<12x12xf32>
    %1453 = arith.addf %1446, %1452 : vector<12x12xf32>
    %1454 = arith.index_cast %1354 : i32 to index
    %c14_902 = arith.constant 14 : index
    %1455 = memref.load %arg3[%1454, %c14_902] : memref<16x27xf32, #tpu.memory_space<smem>>
    %c14_903 = arith.constant 14 : index
    %c0_904 = arith.constant 0 : index
    %c0_905 = arith.constant 0 : index
    %1456 = vector.load %arg6[%c14_903, %c0_904, %c0_905] : memref<27x12x12xf32, #tpu.memory_space<vmem>>, vector<1x12x12xf32>
    %1457 = vector.shape_cast %1456 : vector<1x12x12xf32> to vector<12x12xf32>
    %1458 = vector.broadcast %1455 : f32 to vector<12x12xf32>
    %1459 = arith.mulf %1458, %1457 : vector<12x12xf32>
    %1460 = arith.addf %1453, %1459 : vector<12x12xf32>
    %1461 = arith.index_cast %1354 : i32 to index
    %c15_906 = arith.constant 15 : index
    %1462 = memref.load %arg3[%1461, %c15_906] : memref<16x27xf32, #tpu.memory_space<smem>>
    %c15_907 = arith.constant 15 : index
    %c0_908 = arith.constant 0 : index
    %c0_909 = arith.constant 0 : index
    %1463 = vector.load %arg6[%c15_907, %c0_908, %c0_909] : memref<27x12x12xf32, #tpu.memory_space<vmem>>, vector<1x12x12xf32>
    %1464 = vector.shape_cast %1463 : vector<1x12x12xf32> to vector<12x12xf32>
    %1465 = vector.broadcast %1462 : f32 to vector<12x12xf32>
    %1466 = arith.mulf %1465, %1464 : vector<12x12xf32>
    %1467 = arith.addf %1460, %1466 : vector<12x12xf32>
    %1468 = arith.index_cast %1354 : i32 to index
    %c16_910 = arith.constant 16 : index
    %1469 = memref.load %arg3[%1468, %c16_910] : memref<16x27xf32, #tpu.memory_space<smem>>
    %c16_911 = arith.constant 16 : index
    %c0_912 = arith.constant 0 : index
    %c0_913 = arith.constant 0 : index
    %1470 = vector.load %arg6[%c16_911, %c0_912, %c0_913] : memref<27x12x12xf32, #tpu.memory_space<vmem>>, vector<1x12x12xf32>
    %1471 = vector.shape_cast %1470 : vector<1x12x12xf32> to vector<12x12xf32>
    %1472 = vector.broadcast %1469 : f32 to vector<12x12xf32>
    %1473 = arith.mulf %1472, %1471 : vector<12x12xf32>
    %1474 = arith.addf %1467, %1473 : vector<12x12xf32>
    %1475 = arith.index_cast %1354 : i32 to index
    %c17_914 = arith.constant 17 : index
    %1476 = memref.load %arg3[%1475, %c17_914] : memref<16x27xf32, #tpu.memory_space<smem>>
    %c17_915 = arith.constant 17 : index
    %c0_916 = arith.constant 0 : index
    %c0_917 = arith.constant 0 : index
    %1477 = vector.load %arg6[%c17_915, %c0_916, %c0_917] : memref<27x12x12xf32, #tpu.memory_space<vmem>>, vector<1x12x12xf32>
    %1478 = vector.shape_cast %1477 : vector<1x12x12xf32> to vector<12x12xf32>
    %1479 = vector.broadcast %1476 : f32 to vector<12x12xf32>
    %1480 = arith.mulf %1479, %1478 : vector<12x12xf32>
    %1481 = arith.addf %1474, %1480 : vector<12x12xf32>
    %1482 = arith.index_cast %1354 : i32 to index
    %c18_918 = arith.constant 18 : index
    %1483 = memref.load %arg3[%1482, %c18_918] : memref<16x27xf32, #tpu.memory_space<smem>>
    %c18_919 = arith.constant 18 : index
    %c0_920 = arith.constant 0 : index
    %c0_921 = arith.constant 0 : index
    %1484 = vector.load %arg6[%c18_919, %c0_920, %c0_921] : memref<27x12x12xf32, #tpu.memory_space<vmem>>, vector<1x12x12xf32>
    %1485 = vector.shape_cast %1484 : vector<1x12x12xf32> to vector<12x12xf32>
    %1486 = vector.broadcast %1483 : f32 to vector<12x12xf32>
    %1487 = arith.mulf %1486, %1485 : vector<12x12xf32>
    %1488 = arith.addf %1481, %1487 : vector<12x12xf32>
    %1489 = arith.index_cast %1354 : i32 to index
    %c19_922 = arith.constant 19 : index
    %1490 = memref.load %arg3[%1489, %c19_922] : memref<16x27xf32, #tpu.memory_space<smem>>
    %c19_923 = arith.constant 19 : index
    %c0_924 = arith.constant 0 : index
    %c0_925 = arith.constant 0 : index
    %1491 = vector.load %arg6[%c19_923, %c0_924, %c0_925] : memref<27x12x12xf32, #tpu.memory_space<vmem>>, vector<1x12x12xf32>
    %1492 = vector.shape_cast %1491 : vector<1x12x12xf32> to vector<12x12xf32>
    %1493 = vector.broadcast %1490 : f32 to vector<12x12xf32>
    %1494 = arith.mulf %1493, %1492 : vector<12x12xf32>
    %1495 = arith.addf %1488, %1494 : vector<12x12xf32>
    %1496 = arith.index_cast %1354 : i32 to index
    %c20_926 = arith.constant 20 : index
    %1497 = memref.load %arg3[%1496, %c20_926] : memref<16x27xf32, #tpu.memory_space<smem>>
    %c20_927 = arith.constant 20 : index
    %c0_928 = arith.constant 0 : index
    %c0_929 = arith.constant 0 : index
    %1498 = vector.load %arg6[%c20_927, %c0_928, %c0_929] : memref<27x12x12xf32, #tpu.memory_space<vmem>>, vector<1x12x12xf32>
    %1499 = vector.shape_cast %1498 : vector<1x12x12xf32> to vector<12x12xf32>
    %1500 = vector.broadcast %1497 : f32 to vector<12x12xf32>
    %1501 = arith.mulf %1500, %1499 : vector<12x12xf32>
    %1502 = arith.addf %1495, %1501 : vector<12x12xf32>
    %1503 = arith.index_cast %1354 : i32 to index
    %c21_930 = arith.constant 21 : index
    %1504 = memref.load %arg3[%1503, %c21_930] : memref<16x27xf32, #tpu.memory_space<smem>>
    %c21_931 = arith.constant 21 : index
    %c0_932 = arith.constant 0 : index
    %c0_933 = arith.constant 0 : index
    %1505 = vector.load %arg6[%c21_931, %c0_932, %c0_933] : memref<27x12x12xf32, #tpu.memory_space<vmem>>, vector<1x12x12xf32>
    %1506 = vector.shape_cast %1505 : vector<1x12x12xf32> to vector<12x12xf32>
    %1507 = vector.broadcast %1504 : f32 to vector<12x12xf32>
    %1508 = arith.mulf %1507, %1506 : vector<12x12xf32>
    %1509 = arith.addf %1502, %1508 : vector<12x12xf32>
    %1510 = arith.index_cast %1354 : i32 to index
    %c22_934 = arith.constant 22 : index
    %1511 = memref.load %arg3[%1510, %c22_934] : memref<16x27xf32, #tpu.memory_space<smem>>
    %c22_935 = arith.constant 22 : index
    %c0_936 = arith.constant 0 : index
    %c0_937 = arith.constant 0 : index
    %1512 = vector.load %arg6[%c22_935, %c0_936, %c0_937] : memref<27x12x12xf32, #tpu.memory_space<vmem>>, vector<1x12x12xf32>
    %1513 = vector.shape_cast %1512 : vector<1x12x12xf32> to vector<12x12xf32>
    %1514 = vector.broadcast %1511 : f32 to vector<12x12xf32>
    %1515 = arith.mulf %1514, %1513 : vector<12x12xf32>
    %1516 = arith.addf %1509, %1515 : vector<12x12xf32>
    %1517 = arith.index_cast %1354 : i32 to index
    %c23_938 = arith.constant 23 : index
    %1518 = memref.load %arg3[%1517, %c23_938] : memref<16x27xf32, #tpu.memory_space<smem>>
    %c23_939 = arith.constant 23 : index
    %c0_940 = arith.constant 0 : index
    %c0_941 = arith.constant 0 : index
    %1519 = vector.load %arg6[%c23_939, %c0_940, %c0_941] : memref<27x12x12xf32, #tpu.memory_space<vmem>>, vector<1x12x12xf32>
    %1520 = vector.shape_cast %1519 : vector<1x12x12xf32> to vector<12x12xf32>
    %1521 = vector.broadcast %1518 : f32 to vector<12x12xf32>
    %1522 = arith.mulf %1521, %1520 : vector<12x12xf32>
    %1523 = arith.addf %1516, %1522 : vector<12x12xf32>
    %1524 = arith.index_cast %1354 : i32 to index
    %c24_942 = arith.constant 24 : index
    %1525 = memref.load %arg3[%1524, %c24_942] : memref<16x27xf32, #tpu.memory_space<smem>>
    %c24_943 = arith.constant 24 : index
    %c0_944 = arith.constant 0 : index
    %c0_945 = arith.constant 0 : index
    %1526 = vector.load %arg6[%c24_943, %c0_944, %c0_945] : memref<27x12x12xf32, #tpu.memory_space<vmem>>, vector<1x12x12xf32>
    %1527 = vector.shape_cast %1526 : vector<1x12x12xf32> to vector<12x12xf32>
    %1528 = vector.broadcast %1525 : f32 to vector<12x12xf32>
    %1529 = arith.mulf %1528, %1527 : vector<12x12xf32>
    %1530 = arith.addf %1523, %1529 : vector<12x12xf32>
    %1531 = arith.index_cast %1354 : i32 to index
    %c25_946 = arith.constant 25 : index
    %1532 = memref.load %arg3[%1531, %c25_946] : memref<16x27xf32, #tpu.memory_space<smem>>
    %c25_947 = arith.constant 25 : index
    %c0_948 = arith.constant 0 : index
    %c0_949 = arith.constant 0 : index
    %1533 = vector.load %arg6[%c25_947, %c0_948, %c0_949] : memref<27x12x12xf32, #tpu.memory_space<vmem>>, vector<1x12x12xf32>
    %1534 = vector.shape_cast %1533 : vector<1x12x12xf32> to vector<12x12xf32>
    %1535 = vector.broadcast %1532 : f32 to vector<12x12xf32>
    %1536 = arith.mulf %1535, %1534 : vector<12x12xf32>
    %1537 = arith.addf %1530, %1536 : vector<12x12xf32>
    %1538 = arith.index_cast %1354 : i32 to index
    %c26_950 = arith.constant 26 : index
    %1539 = memref.load %arg3[%1538, %c26_950] : memref<16x27xf32, #tpu.memory_space<smem>>
    %c26_951 = arith.constant 26 : index
    %c0_952 = arith.constant 0 : index
    %c0_953 = arith.constant 0 : index
    %1540 = vector.load %arg6[%c26_951, %c0_952, %c0_953] : memref<27x12x12xf32, #tpu.memory_space<vmem>>, vector<1x12x12xf32>
    %1541 = vector.shape_cast %1540 : vector<1x12x12xf32> to vector<12x12xf32>
    %1542 = vector.broadcast %1539 : f32 to vector<12x12xf32>
    %1543 = arith.mulf %1542, %1541 : vector<12x12xf32>
    %1544 = arith.addf %1537, %1543 : vector<12x12xf32>
    %1545 = arith.index_cast %1354 : i32 to index
    %1546 = memref.load %arg4[%1545] : memref<16xf32, #tpu.memory_space<smem>>
    %1547 = vector.broadcast %1546 : f32 to vector<12x12xf32>
    %1548 = arith.addf %1544, %1547 : vector<12x12xf32>
    %1549 = arith.negf %1548 : vector<12x12xf32>
    %1550 = math.exp %1549 : vector<12x12xf32>
    %cst_954 = arith.constant 1.000000e+00 : f32
    %1551 = vector.broadcast %cst_954 : f32 to vector<12x12xf32>
    %1552 = arith.addf %1551, %1550 : vector<12x12xf32>
    %1553 = arith.divf %1551, %1552 : vector<12x12xf32>
    %c0_955 = arith.constant 0 : index
    %c6_956 = arith.constant 6 : index
    %c0_957 = arith.constant 0 : index
    %c0_958 = arith.constant 0 : index
    %1554 = vector.load %arg5[%c0_955, %c6_956, %c0_957, %c0_958] : memref<1x8x12x12xf32, #tpu.memory_space<vmem>>, vector<1x1x12x12xf32>
    %1555 = vector.shape_cast %1554 : vector<1x1x12x12xf32> to vector<12x12xf32>
    %1556 = vector.shape_cast %1553 : vector<12x12xf32> to vector<1x1x12x12xf32>
    tpu.vector_store %arg5[%c0_955, %c6_956, %c0_957, %c0_958], %1556 {strides = array<i32>} : memref<1x8x12x12xf32, #tpu.memory_space<vmem>>, vector<1x1x12x12xf32>,
    %c7_i32 = arith.constant 7 : i32
    %1557 = arith.addi %0, %c7_i32 : i32
    %cst_959 = arith.constant 0.000000e+00 : f32
    %1558 = vector.broadcast %cst_959 : f32 to vector<12x12xf32>
    %1559 = arith.index_cast %1557 : i32 to index
    %c0_960 = arith.constant 0 : index
    %1560 = memref.load %arg3[%1559, %c0_960] : memref<16x27xf32, #tpu.memory_space<smem>>
    %c0_961 = arith.constant 0 : index
    %c0_962 = arith.constant 0 : index
    %c0_963 = arith.constant 0 : index
    %1561 = vector.load %arg6[%c0_961, %c0_962, %c0_963] : memref<27x12x12xf32, #tpu.memory_space<vmem>>, vector<1x12x12xf32>
    %1562 = vector.shape_cast %1561 : vector<1x12x12xf32> to vector<12x12xf32>
    %1563 = vector.broadcast %1560 : f32 to vector<12x12xf32>
    %1564 = arith.mulf %1563, %1562 : vector<12x12xf32>
    %1565 = arith.addf %1558, %1564 : vector<12x12xf32>
    %1566 = arith.index_cast %1557 : i32 to index
    %c1_964 = arith.constant 1 : index
    %1567 = memref.load %arg3[%1566, %c1_964] : memref<16x27xf32, #tpu.memory_space<smem>>
    %c1_965 = arith.constant 1 : index
    %c0_966 = arith.constant 0 : index
    %c0_967 = arith.constant 0 : index
    %1568 = vector.load %arg6[%c1_965, %c0_966, %c0_967] : memref<27x12x12xf32, #tpu.memory_space<vmem>>, vector<1x12x12xf32>
    %1569 = vector.shape_cast %1568 : vector<1x12x12xf32> to vector<12x12xf32>
    %1570 = vector.broadcast %1567 : f32 to vector<12x12xf32>
    %1571 = arith.mulf %1570, %1569 : vector<12x12xf32>
    %1572 = arith.addf %1565, %1571 : vector<12x12xf32>
    %1573 = arith.index_cast %1557 : i32 to index
    %c2_968 = arith.constant 2 : index
    %1574 = memref.load %arg3[%1573, %c2_968] : memref<16x27xf32, #tpu.memory_space<smem>>
    %c2_969 = arith.constant 2 : index
    %c0_970 = arith.constant 0 : index
    %c0_971 = arith.constant 0 : index
    %1575 = vector.load %arg6[%c2_969, %c0_970, %c0_971] : memref<27x12x12xf32, #tpu.memory_space<vmem>>, vector<1x12x12xf32>
    %1576 = vector.shape_cast %1575 : vector<1x12x12xf32> to vector<12x12xf32>
    %1577 = vector.broadcast %1574 : f32 to vector<12x12xf32>
    %1578 = arith.mulf %1577, %1576 : vector<12x12xf32>
    %1579 = arith.addf %1572, %1578 : vector<12x12xf32>
    %1580 = arith.index_cast %1557 : i32 to index
    %c3_972 = arith.constant 3 : index
    %1581 = memref.load %arg3[%1580, %c3_972] : memref<16x27xf32, #tpu.memory_space<smem>>
    %c3_973 = arith.constant 3 : index
    %c0_974 = arith.constant 0 : index
    %c0_975 = arith.constant 0 : index
    %1582 = vector.load %arg6[%c3_973, %c0_974, %c0_975] : memref<27x12x12xf32, #tpu.memory_space<vmem>>, vector<1x12x12xf32>
    %1583 = vector.shape_cast %1582 : vector<1x12x12xf32> to vector<12x12xf32>
    %1584 = vector.broadcast %1581 : f32 to vector<12x12xf32>
    %1585 = arith.mulf %1584, %1583 : vector<12x12xf32>
    %1586 = arith.addf %1579, %1585 : vector<12x12xf32>
    %1587 = arith.index_cast %1557 : i32 to index
    %c4_976 = arith.constant 4 : index
    %1588 = memref.load %arg3[%1587, %c4_976] : memref<16x27xf32, #tpu.memory_space<smem>>
    %c4_977 = arith.constant 4 : index
    %c0_978 = arith.constant 0 : index
    %c0_979 = arith.constant 0 : index
    %1589 = vector.load %arg6[%c4_977, %c0_978, %c0_979] : memref<27x12x12xf32, #tpu.memory_space<vmem>>, vector<1x12x12xf32>
    %1590 = vector.shape_cast %1589 : vector<1x12x12xf32> to vector<12x12xf32>
    %1591 = vector.broadcast %1588 : f32 to vector<12x12xf32>
    %1592 = arith.mulf %1591, %1590 : vector<12x12xf32>
    %1593 = arith.addf %1586, %1592 : vector<12x12xf32>
    %1594 = arith.index_cast %1557 : i32 to index
    %c5_980 = arith.constant 5 : index
    %1595 = memref.load %arg3[%1594, %c5_980] : memref<16x27xf32, #tpu.memory_space<smem>>
    %c5_981 = arith.constant 5 : index
    %c0_982 = arith.constant 0 : index
    %c0_983 = arith.constant 0 : index
    %1596 = vector.load %arg6[%c5_981, %c0_982, %c0_983] : memref<27x12x12xf32, #tpu.memory_space<vmem>>, vector<1x12x12xf32>
    %1597 = vector.shape_cast %1596 : vector<1x12x12xf32> to vector<12x12xf32>
    %1598 = vector.broadcast %1595 : f32 to vector<12x12xf32>
    %1599 = arith.mulf %1598, %1597 : vector<12x12xf32>
    %1600 = arith.addf %1593, %1599 : vector<12x12xf32>
    %1601 = arith.index_cast %1557 : i32 to index
    %c6_984 = arith.constant 6 : index
    %1602 = memref.load %arg3[%1601, %c6_984] : memref<16x27xf32, #tpu.memory_space<smem>>
    %c6_985 = arith.constant 6 : index
    %c0_986 = arith.constant 0 : index
    %c0_987 = arith.constant 0 : index
    %1603 = vector.load %arg6[%c6_985, %c0_986, %c0_987] : memref<27x12x12xf32, #tpu.memory_space<vmem>>, vector<1x12x12xf32>
    %1604 = vector.shape_cast %1603 : vector<1x12x12xf32> to vector<12x12xf32>
    %1605 = vector.broadcast %1602 : f32 to vector<12x12xf32>
    %1606 = arith.mulf %1605, %1604 : vector<12x12xf32>
    %1607 = arith.addf %1600, %1606 : vector<12x12xf32>
    %1608 = arith.index_cast %1557 : i32 to index
    %c7_988 = arith.constant 7 : index
    %1609 = memref.load %arg3[%1608, %c7_988] : memref<16x27xf32, #tpu.memory_space<smem>>
    %c7_989 = arith.constant 7 : index
    %c0_990 = arith.constant 0 : index
    %c0_991 = arith.constant 0 : index
    %1610 = vector.load %arg6[%c7_989, %c0_990, %c0_991] : memref<27x12x12xf32, #tpu.memory_space<vmem>>, vector<1x12x12xf32>
    %1611 = vector.shape_cast %1610 : vector<1x12x12xf32> to vector<12x12xf32>
    %1612 = vector.broadcast %1609 : f32 to vector<12x12xf32>
    %1613 = arith.mulf %1612, %1611 : vector<12x12xf32>
    %1614 = arith.addf %1607, %1613 : vector<12x12xf32>
    %1615 = arith.index_cast %1557 : i32 to index
    %c8_992 = arith.constant 8 : index
    %1616 = memref.load %arg3[%1615, %c8_992] : memref<16x27xf32, #tpu.memory_space<smem>>
    %c8_993 = arith.constant 8 : index
    %c0_994 = arith.constant 0 : index
    %c0_995 = arith.constant 0 : index
    %1617 = vector.load %arg6[%c8_993, %c0_994, %c0_995] : memref<27x12x12xf32, #tpu.memory_space<vmem>>, vector<1x12x12xf32>
    %1618 = vector.shape_cast %1617 : vector<1x12x12xf32> to vector<12x12xf32>
    %1619 = vector.broadcast %1616 : f32 to vector<12x12xf32>
    %1620 = arith.mulf %1619, %1618 : vector<12x12xf32>
    %1621 = arith.addf %1614, %1620 : vector<12x12xf32>
    %1622 = arith.index_cast %1557 : i32 to index
    %c9_996 = arith.constant 9 : index
    %1623 = memref.load %arg3[%1622, %c9_996] : memref<16x27xf32, #tpu.memory_space<smem>>
    %c9_997 = arith.constant 9 : index
    %c0_998 = arith.constant 0 : index
    %c0_999 = arith.constant 0 : index
    %1624 = vector.load %arg6[%c9_997, %c0_998, %c0_999] : memref<27x12x12xf32, #tpu.memory_space<vmem>>, vector<1x12x12xf32>
    %1625 = vector.shape_cast %1624 : vector<1x12x12xf32> to vector<12x12xf32>
    %1626 = vector.broadcast %1623 : f32 to vector<12x12xf32>
    %1627 = arith.mulf %1626, %1625 : vector<12x12xf32>
    %1628 = arith.addf %1621, %1627 : vector<12x12xf32>
    %1629 = arith.index_cast %1557 : i32 to index
    %c10_1000 = arith.constant 10 : index
    %1630 = memref.load %arg3[%1629, %c10_1000] : memref<16x27xf32, #tpu.memory_space<smem>>
    %c10_1001 = arith.constant 10 : index
    %c0_1002 = arith.constant 0 : index
    %c0_1003 = arith.constant 0 : index
    %1631 = vector.load %arg6[%c10_1001, %c0_1002, %c0_1003] : memref<27x12x12xf32, #tpu.memory_space<vmem>>, vector<1x12x12xf32>
    %1632 = vector.shape_cast %1631 : vector<1x12x12xf32> to vector<12x12xf32>
    %1633 = vector.broadcast %1630 : f32 to vector<12x12xf32>
    %1634 = arith.mulf %1633, %1632 : vector<12x12xf32>
    %1635 = arith.addf %1628, %1634 : vector<12x12xf32>
    %1636 = arith.index_cast %1557 : i32 to index
    %c11_1004 = arith.constant 11 : index
    %1637 = memref.load %arg3[%1636, %c11_1004] : memref<16x27xf32, #tpu.memory_space<smem>>
    %c11_1005 = arith.constant 11 : index
    %c0_1006 = arith.constant 0 : index
    %c0_1007 = arith.constant 0 : index
    %1638 = vector.load %arg6[%c11_1005, %c0_1006, %c0_1007] : memref<27x12x12xf32, #tpu.memory_space<vmem>>, vector<1x12x12xf32>
    %1639 = vector.shape_cast %1638 : vector<1x12x12xf32> to vector<12x12xf32>
    %1640 = vector.broadcast %1637 : f32 to vector<12x12xf32>
    %1641 = arith.mulf %1640, %1639 : vector<12x12xf32>
    %1642 = arith.addf %1635, %1641 : vector<12x12xf32>
    %1643 = arith.index_cast %1557 : i32 to index
    %c12_1008 = arith.constant 12 : index
    %1644 = memref.load %arg3[%1643, %c12_1008] : memref<16x27xf32, #tpu.memory_space<smem>>
    %c12_1009 = arith.constant 12 : index
    %c0_1010 = arith.constant 0 : index
    %c0_1011 = arith.constant 0 : index
    %1645 = vector.load %arg6[%c12_1009, %c0_1010, %c0_1011] : memref<27x12x12xf32, #tpu.memory_space<vmem>>, vector<1x12x12xf32>
    %1646 = vector.shape_cast %1645 : vector<1x12x12xf32> to vector<12x12xf32>
    %1647 = vector.broadcast %1644 : f32 to vector<12x12xf32>
    %1648 = arith.mulf %1647, %1646 : vector<12x12xf32>
    %1649 = arith.addf %1642, %1648 : vector<12x12xf32>
    %1650 = arith.index_cast %1557 : i32 to index
    %c13_1012 = arith.constant 13 : index
    %1651 = memref.load %arg3[%1650, %c13_1012] : memref<16x27xf32, #tpu.memory_space<smem>>
    %c13_1013 = arith.constant 13 : index
    %c0_1014 = arith.constant 0 : index
    %c0_1015 = arith.constant 0 : index
    %1652 = vector.load %arg6[%c13_1013, %c0_1014, %c0_1015] : memref<27x12x12xf32, #tpu.memory_space<vmem>>, vector<1x12x12xf32>
    %1653 = vector.shape_cast %1652 : vector<1x12x12xf32> to vector<12x12xf32>
    %1654 = vector.broadcast %1651 : f32 to vector<12x12xf32>
    %1655 = arith.mulf %1654, %1653 : vector<12x12xf32>
    %1656 = arith.addf %1649, %1655 : vector<12x12xf32>
    %1657 = arith.index_cast %1557 : i32 to index
    %c14_1016 = arith.constant 14 : index
    %1658 = memref.load %arg3[%1657, %c14_1016] : memref<16x27xf32, #tpu.memory_space<smem>>
    %c14_1017 = arith.constant 14 : index
    %c0_1018 = arith.constant 0 : index
    %c0_1019 = arith.constant 0 : index
    %1659 = vector.load %arg6[%c14_1017, %c0_1018, %c0_1019] : memref<27x12x12xf32, #tpu.memory_space<vmem>>, vector<1x12x12xf32>
    %1660 = vector.shape_cast %1659 : vector<1x12x12xf32> to vector<12x12xf32>
    %1661 = vector.broadcast %1658 : f32 to vector<12x12xf32>
    %1662 = arith.mulf %1661, %1660 : vector<12x12xf32>
    %1663 = arith.addf %1656, %1662 : vector<12x12xf32>
    %1664 = arith.index_cast %1557 : i32 to index
    %c15_1020 = arith.constant 15 : index
    %1665 = memref.load %arg3[%1664, %c15_1020] : memref<16x27xf32, #tpu.memory_space<smem>>
    %c15_1021 = arith.constant 15 : index
    %c0_1022 = arith.constant 0 : index
    %c0_1023 = arith.constant 0 : index
    %1666 = vector.load %arg6[%c15_1021, %c0_1022, %c0_1023] : memref<27x12x12xf32, #tpu.memory_space<vmem>>, vector<1x12x12xf32>
    %1667 = vector.shape_cast %1666 : vector<1x12x12xf32> to vector<12x12xf32>
    %1668 = vector.broadcast %1665 : f32 to vector<12x12xf32>
    %1669 = arith.mulf %1668, %1667 : vector<12x12xf32>
    %1670 = arith.addf %1663, %1669 : vector<12x12xf32>
    %1671 = arith.index_cast %1557 : i32 to index
    %c16_1024 = arith.constant 16 : index
    %1672 = memref.load %arg3[%1671, %c16_1024] : memref<16x27xf32, #tpu.memory_space<smem>>
    %c16_1025 = arith.constant 16 : index
    %c0_1026 = arith.constant 0 : index
    %c0_1027 = arith.constant 0 : index
    %1673 = vector.load %arg6[%c16_1025, %c0_1026, %c0_1027] : memref<27x12x12xf32, #tpu.memory_space<vmem>>, vector<1x12x12xf32>
    %1674 = vector.shape_cast %1673 : vector<1x12x12xf32> to vector<12x12xf32>
    %1675 = vector.broadcast %1672 : f32 to vector<12x12xf32>
    %1676 = arith.mulf %1675, %1674 : vector<12x12xf32>
    %1677 = arith.addf %1670, %1676 : vector<12x12xf32>
    %1678 = arith.index_cast %1557 : i32 to index
    %c17_1028 = arith.constant 17 : index
    %1679 = memref.load %arg3[%1678, %c17_1028] : memref<16x27xf32, #tpu.memory_space<smem>>
    %c17_1029 = arith.constant 17 : index
    %c0_1030 = arith.constant 0 : index
    %c0_1031 = arith.constant 0 : index
    %1680 = vector.load %arg6[%c17_1029, %c0_1030, %c0_1031] : memref<27x12x12xf32, #tpu.memory_space<vmem>>, vector<1x12x12xf32>
    %1681 = vector.shape_cast %1680 : vector<1x12x12xf32> to vector<12x12xf32>
    %1682 = vector.broadcast %1679 : f32 to vector<12x12xf32>
    %1683 = arith.mulf %1682, %1681 : vector<12x12xf32>
    %1684 = arith.addf %1677, %1683 : vector<12x12xf32>
    %1685 = arith.index_cast %1557 : i32 to index
    %c18_1032 = arith.constant 18 : index
    %1686 = memref.load %arg3[%1685, %c18_1032] : memref<16x27xf32, #tpu.memory_space<smem>>
    %c18_1033 = arith.constant 18 : index
    %c0_1034 = arith.constant 0 : index
    %c0_1035 = arith.constant 0 : index
    %1687 = vector.load %arg6[%c18_1033, %c0_1034, %c0_1035] : memref<27x12x12xf32, #tpu.memory_space<vmem>>, vector<1x12x12xf32>
    %1688 = vector.shape_cast %1687 : vector<1x12x12xf32> to vector<12x12xf32>
    %1689 = vector.broadcast %1686 : f32 to vector<12x12xf32>
    %1690 = arith.mulf %1689, %1688 : vector<12x12xf32>
    %1691 = arith.addf %1684, %1690 : vector<12x12xf32>
    %1692 = arith.index_cast %1557 : i32 to index
    %c19_1036 = arith.constant 19 : index
    %1693 = memref.load %arg3[%1692, %c19_1036] : memref<16x27xf32, #tpu.memory_space<smem>>
    %c19_1037 = arith.constant 19 : index
    %c0_1038 = arith.constant 0 : index
    %c0_1039 = arith.constant 0 : index
    %1694 = vector.load %arg6[%c19_1037, %c0_1038, %c0_1039] : memref<27x12x12xf32, #tpu.memory_space<vmem>>, vector<1x12x12xf32>
    %1695 = vector.shape_cast %1694 : vector<1x12x12xf32> to vector<12x12xf32>
    %1696 = vector.broadcast %1693 : f32 to vector<12x12xf32>
    %1697 = arith.mulf %1696, %1695 : vector<12x12xf32>
    %1698 = arith.addf %1691, %1697 : vector<12x12xf32>
    %1699 = arith.index_cast %1557 : i32 to index
    %c20_1040 = arith.constant 20 : index
    %1700 = memref.load %arg3[%1699, %c20_1040] : memref<16x27xf32, #tpu.memory_space<smem>>
    %c20_1041 = arith.constant 20 : index
    %c0_1042 = arith.constant 0 : index
    %c0_1043 = arith.constant 0 : index
    %1701 = vector.load %arg6[%c20_1041, %c0_1042, %c0_1043] : memref<27x12x12xf32, #tpu.memory_space<vmem>>, vector<1x12x12xf32>
    %1702 = vector.shape_cast %1701 : vector<1x12x12xf32> to vector<12x12xf32>
    %1703 = vector.broadcast %1700 : f32 to vector<12x12xf32>
    %1704 = arith.mulf %1703, %1702 : vector<12x12xf32>
    %1705 = arith.addf %1698, %1704 : vector<12x12xf32>
    %1706 = arith.index_cast %1557 : i32 to index
    %c21_1044 = arith.constant 21 : index
    %1707 = memref.load %arg3[%1706, %c21_1044] : memref<16x27xf32, #tpu.memory_space<smem>>
    %c21_1045 = arith.constant 21 : index
    %c0_1046 = arith.constant 0 : index
    %c0_1047 = arith.constant 0 : index
    %1708 = vector.load %arg6[%c21_1045, %c0_1046, %c0_1047] : memref<27x12x12xf32, #tpu.memory_space<vmem>>, vector<1x12x12xf32>
    %1709 = vector.shape_cast %1708 : vector<1x12x12xf32> to vector<12x12xf32>
    %1710 = vector.broadcast %1707 : f32 to vector<12x12xf32>
    %1711 = arith.mulf %1710, %1709 : vector<12x12xf32>
    %1712 = arith.addf %1705, %1711 : vector<12x12xf32>
    %1713 = arith.index_cast %1557 : i32 to index
    %c22_1048 = arith.constant 22 : index
    %1714 = memref.load %arg3[%1713, %c22_1048] : memref<16x27xf32, #tpu.memory_space<smem>>
    %c22_1049 = arith.constant 22 : index
    %c0_1050 = arith.constant 0 : index
    %c0_1051 = arith.constant 0 : index
    %1715 = vector.load %arg6[%c22_1049, %c0_1050, %c0_1051] : memref<27x12x12xf32, #tpu.memory_space<vmem>>, vector<1x12x12xf32>
    %1716 = vector.shape_cast %1715 : vector<1x12x12xf32> to vector<12x12xf32>
    %1717 = vector.broadcast %1714 : f32 to vector<12x12xf32>
    %1718 = arith.mulf %1717, %1716 : vector<12x12xf32>
    %1719 = arith.addf %1712, %1718 : vector<12x12xf32>
    %1720 = arith.index_cast %1557 : i32 to index
    %c23_1052 = arith.constant 23 : index
    %1721 = memref.load %arg3[%1720, %c23_1052] : memref<16x27xf32, #tpu.memory_space<smem>>
    %c23_1053 = arith.constant 23 : index
    %c0_1054 = arith.constant 0 : index
    %c0_1055 = arith.constant 0 : index
    %1722 = vector.load %arg6[%c23_1053, %c0_1054, %c0_1055] : memref<27x12x12xf32, #tpu.memory_space<vmem>>, vector<1x12x12xf32>
    %1723 = vector.shape_cast %1722 : vector<1x12x12xf32> to vector<12x12xf32>
    %1724 = vector.broadcast %1721 : f32 to vector<12x12xf32>
    %1725 = arith.mulf %1724, %1723 : vector<12x12xf32>
    %1726 = arith.addf %1719, %1725 : vector<12x12xf32>
    %1727 = arith.index_cast %1557 : i32 to index
    %c24_1056 = arith.constant 24 : index
    %1728 = memref.load %arg3[%1727, %c24_1056] : memref<16x27xf32, #tpu.memory_space<smem>>
    %c24_1057 = arith.constant 24 : index
    %c0_1058 = arith.constant 0 : index
    %c0_1059 = arith.constant 0 : index
    %1729 = vector.load %arg6[%c24_1057, %c0_1058, %c0_1059] : memref<27x12x12xf32, #tpu.memory_space<vmem>>, vector<1x12x12xf32>
    %1730 = vector.shape_cast %1729 : vector<1x12x12xf32> to vector<12x12xf32>
    %1731 = vector.broadcast %1728 : f32 to vector<12x12xf32>
    %1732 = arith.mulf %1731, %1730 : vector<12x12xf32>
    %1733 = arith.addf %1726, %1732 : vector<12x12xf32>
    %1734 = arith.index_cast %1557 : i32 to index
    %c25_1060 = arith.constant 25 : index
    %1735 = memref.load %arg3[%1734, %c25_1060] : memref<16x27xf32, #tpu.memory_space<smem>>
    %c25_1061 = arith.constant 25 : index
    %c0_1062 = arith.constant 0 : index
    %c0_1063 = arith.constant 0 : index
    %1736 = vector.load %arg6[%c25_1061, %c0_1062, %c0_1063] : memref<27x12x12xf32, #tpu.memory_space<vmem>>, vector<1x12x12xf32>
    %1737 = vector.shape_cast %1736 : vector<1x12x12xf32> to vector<12x12xf32>
    %1738 = vector.broadcast %1735 : f32 to vector<12x12xf32>
    %1739 = arith.mulf %1738, %1737 : vector<12x12xf32>
    %1740 = arith.addf %1733, %1739 : vector<12x12xf32>
    %1741 = arith.index_cast %1557 : i32 to index
    %c26_1064 = arith.constant 26 : index
    %1742 = memref.load %arg3[%1741, %c26_1064] : memref<16x27xf32, #tpu.memory_space<smem>>
    %c26_1065 = arith.constant 26 : index
    %c0_1066 = arith.constant 0 : index
    %c0_1067 = arith.constant 0 : index
    %1743 = vector.load %arg6[%c26_1065, %c0_1066, %c0_1067] : memref<27x12x12xf32, #tpu.memory_space<vmem>>, vector<1x12x12xf32>
    %1744 = vector.shape_cast %1743 : vector<1x12x12xf32> to vector<12x12xf32>
    %1745 = vector.broadcast %1742 : f32 to vector<12x12xf32>
    %1746 = arith.mulf %1745, %1744 : vector<12x12xf32>
    %1747 = arith.addf %1740, %1746 : vector<12x12xf32>
    %1748 = arith.index_cast %1557 : i32 to index
    %1749 = memref.load %arg4[%1748] : memref<16xf32, #tpu.memory_space<smem>>
    %1750 = vector.broadcast %1749 : f32 to vector<12x12xf32>
    %1751 = arith.addf %1747, %1750 : vector<12x12xf32>
    %1752 = arith.negf %1751 : vector<12x12xf32>
    %1753 = math.exp %1752 : vector<12x12xf32>
    %cst_1068 = arith.constant 1.000000e+00 : f32
    %1754 = vector.broadcast %cst_1068 : f32 to vector<12x12xf32>
    %1755 = arith.addf %1754, %1753 : vector<12x12xf32>
    %1756 = arith.divf %1754, %1755 : vector<12x12xf32>
    %c0_1069 = arith.constant 0 : index
    %c7_1070 = arith.constant 7 : index
    %c0_1071 = arith.constant 0 : index
    %c0_1072 = arith.constant 0 : index
    %1757 = vector.load %arg5[%c0_1069, %c7_1070, %c0_1071, %c0_1072] : memref<1x8x12x12xf32, #tpu.memory_space<vmem>>, vector<1x1x12x12xf32>
    %1758 = vector.shape_cast %1757 : vector<1x1x12x12xf32> to vector<12x12xf32>
    %1759 = vector.shape_cast %1756 : vector<12x12xf32> to vector<1x1x12x12xf32>
    tpu.vector_store %arg5[%c0_1069, %c7_1070, %c0_1071, %c0_1072], %1759 {strides = array<i32>} : memref<1x8x12x12xf32, #tpu.memory_space<vmem>>, vector<1x1x12x12xf32>,
    return
  }
  func.func @transform_0(%arg0: i32, %arg1: i32) -> (i32, i32, i32, i32) {
    %c0_i32 = arith.constant 0 : i32
    %c0_i32_0 = arith.constant 0 : i32
    %c0_i32_1 = arith.constant 0 : i32
    %c0_i32_2 = arith.constant 0 : i32
    return %arg0, %c0_i32, %c0_i32_0, %c0_i32_1 : i32, i32, i32, i32
  }
  func.func @transform_1(%arg0: i32, %arg1: i32) -> (i32, i32) {
    %c0_i32 = arith.constant 0 : i32
    %c0_i32_0 = arith.constant 0 : i32
    %c0_i32_1 = arith.constant 0 : i32
    return %c0_i32, %c0_i32_0 : i32, i32
  }
  func.func @transform_2(%arg0: i32, %arg1: i32) -> i32 {
    %c0_i32 = arith.constant 0 : i32
    %c0_i32_0 = arith.constant 0 : i32
    return %c0_i32 : i32
  }
  func.func @transform_3(%arg0: i32, %arg1: i32) -> (i32, i32, i32, i32) {
    %c0_i32 = arith.constant 0 : i32
    %c0_i32_0 = arith.constant 0 : i32
    %c0_i32_1 = arith.constant 0 : i32
    return %arg0, %arg1, %c0_i32, %c0_i32_0 : i32, i32, i32, i32
  }
}

</mosaic_0001>

<llo_original>
// kernel: tpu_custom_call.1
$region0: #{tpu_custom_call.1}
  #allocation0 [shape = 'u32[]', space=smem, size = 0x4, offset = 0x4, fixed_abs, tag = 'smem constant byte address 0x4 - core index']
  #allocation1 [shape = 'u32[144,128]{1,0:T(1,128)}', space=vmem, size = 0x12000, scoped, tag = 'internal scratch']
  #allocation2 [shape = 'f32[27,12,12]{2,1,0:T(8,128)}', space=vmem, size = 0x36000, scoped, tag = 'scratch operand']
  %s0 = inlined_call_operand.hbm [shape: f32[2,3,16,18], index: 0, kind: input, shape index: {}]
  %s1 = inlined_call_operand.hbm [shape: f32[16,27], index: 1, kind: input, shape index: {}]
  %s2 = inlined_call_operand.vmem [shape: f32[16], index: 2, kind: input, shape index: {}]
  %s3 = inlined_call_operand.vmem [shape: f32[2,16,12,12], index: 3, kind: output, shape index: {}]
  %s4 = sld [smem:[#allocation0]]
  $region57: #{tpu_custom_call.1} parent=0
    _
  %s6 = ssub.s32 1, %s4
  %s7 = scalar_select 0, %s6, %s4
  $region1: #{tpu_custom_call.1} parent=0
    #allocation3 [shape = 'u8[49152]{0}', space=vmem, size = 0xc000, scoped, tag = 'input window, operand 0']
    #allocation4 [shape = 's32[2]{0}', space=sflag, size = 0x8, scoped, tag = 'scoped memory for tpu_custom_call.1']
    #allocation5 [shape = 's32[2]{0}', space=sflag, size = 0x8, scoped, tag = 'scoped memory for tpu_custom_call.1']
    #allocation6 [shape = 's32[2]{0}', space=sflag, size = 0x8, scoped, tag = 'scoped memory for tpu_custom_call.1']
    #allocation7 [shape = 'u8[8192]{0}', space=smem, size = 0x2000, scoped, tag = 'input window, operand 1, single buffered']
    #allocation8 [shape = 'u8[512]{0}', space=smem, size = 0x200, scoped, tag = 'input window, operand 2, single buffered']
    %8 = vsyncpa [#allocation4], 0
    %s9 = scalar_lea.sflag [#allocation4], 1
    %10 = vsyncpa %s9, 0
    %11 = vsyncpa [#allocation5], 0
    %12 = vsyncpa [#allocation6], 0
    loop: start=0, step=1, limit=6
    $region2: #{tpu_custom_call.1} parent=1 // loop_pre_header
      _
    $region3: #{tpu_custom_call.1} parent=1 // loop_header
      %s14 = sphi 0, %s18
      %p15 = scmp.ge.s32.totalorder %s14, 6
      %s21 = sphi 0, %s33
      %s22 = sphi 0, %s29
      %s23 = sphi 0, %s21
      %s24 = sphi 0, %s22
      %s25 = sphi 0, %s23
      %s26 = sphi 0, %s24
      %s36 = sphi 0, %s38
      %s39 = sphi 0, %s36
      %s40 = sphi 0, %s39
      %s56 = sphi 0, %s40
      %s60 = sphi 0, %s60
      %s62 = sphi 0, %s60
      %s63 = sphi 0, %s62
      %s77 = sphi 0, %s63
      %s81 = sphi 0, %s81
      %s83 = sphi 0, %s81
      %s84 = sphi 0, %s83
      %s98 = sphi 0, %s84
      %s106 = sphi 0, %s108
      %s109 = sphi 0, %s106
      %s110 = sphi 0, %s109
      %s126 = sphi 0, %s110
    $region4: #{tpu_custom_call.1} parent=1 // loop_header_branch
      %17 = sbr.rel (%p15) target = $region8
    $region5: #{tpu_custom_call.1} parent=1 // loop_body
      %s19 = ssub.s32 %s14, 1
      %s20 = ssub.s32 %s14, 2
      %s27 = sadd.s32 1, %s22
      %p28 = scmp.ge.s32.totalorder %s27, 2
      %s29 = scalar_select %p28, 0, %s27
      %s30 = sadd.s32 1, %s21
      %s31 = scalar_select %p28, %s30, %s21
      %p32 = scmp.ge.s32.totalorder %s31, 2
      %s33 = scalar_select %p32, 0, %s31
      %s34 = ssub.s32 %s21, %s33
      %p35 = scmp.eq.s32.totalorder %s34, 0
      %s37 = sadd.s32 %s36, 1
      %s38 = scalar_select %p35, %s36, %s37
      %p41 = pneg %p35
      %p42 = scmp.eq.s32.totalorder %s14, 3
      %p43 = por %p41, %p42
      %p44 = scmp.ne.s32.totalorder %s36, %s39
      %p45 = scmp.eq.s32.totalorder %s14, 0
      %p46 = por %p44, %p45
      %p47 = scmp.ne.s32.totalorder %s36, %s39
      %p48 = scmp.eq.s32.totalorder %s19, 3
      %p49 = por %p47, %p48
      %p50 = scmp.ne.s32.totalorder %s39, %s40
      %p51 = scmp.eq.s32.totalorder %s19, 0
      %p52 = por %p50, %p51
      %p53 = scmp.ne.s32.totalorder %s39, %s40
      %p54 = scmp.eq.s32.totalorder %s20, 3
      %p55 = por %p53, %p54
      %p57 = scmp.ne.s32.totalorder %s40, %s56
      %p58 = scmp.eq.s32.totalorder %s20, 0
      %p59 = por %p57, %p58
      %s61 = sadd.s32 %s60, 1
      %p64 = scmp.eq.s32.totalorder %s14, 3
      %p65 = scmp.ne.s32.totalorder %s60, %s62
      %p66 = scmp.eq.s32.totalorder %s14, 0
      %p67 = por %p65, %p66
      %p68 = scmp.ne.s32.totalorder %s60, %s62
      %p69 = scmp.eq.s32.totalorder %s19, 3
      %p70 = por %p68, %p69
      %p71 = scmp.ne.s32.totalorder %s62, %s63
      %p72 = scmp.eq.s32.totalorder %s19, 0
      %p73 = por %p71, %p72
      %p74 = scmp.ne.s32.totalorder %s62, %s63
      %p75 = scmp.eq.s32.totalorder %s20, 3
      %p76 = por %p74, %p75
      %p78 = scmp.ne.s32.totalorder %s63, %s77
      %p79 = scmp.eq.s32.totalorder %s20, 0
      %p80 = por %p78, %p79
      %s82 = sadd.s32 %s81, 1
      %p85 = scmp.eq.s32.totalorder %s14, 3
      %p86 = scmp.ne.s32.totalorder %s81, %s83
      %p87 = scmp.eq.s32.totalorder %s14, 0
      %p88 = por %p86, %p87
      %p89 = scmp.ne.s32.totalorder %s81, %s83
      %p90 = scmp.eq.s32.totalorder %s19, 3
      %p91 = por %p89, %p90
      %p92 = scmp.ne.s32.totalorder %s83, %s84
      %p93 = scmp.eq.s32.totalorder %s19, 0
      %p94 = por %p92, %p93
      %p95 = scmp.ne.s32.totalorder %s83, %s84
      %p96 = scmp.eq.s32.totalorder %s20, 3
      %p97 = por %p95, %p96
      %p99 = scmp.ne.s32.totalorder %s84, %s98
      %p100 = scmp.eq.s32.totalorder %s20, 0
      %p101 = por %p99, %p100
      %s102 = ssub.s32 %s21, %s33
      %s103 = ssub.s32 %s22, %s29
      %s104 = sor.u32 %s102, %s103
      %p105 = scmp.eq.s32.totalorder %s104, 0
      %s107 = sadd.s32 %s106, 1
      %s108 = scalar_select %p105, %s106, %s107
      %p111 = pneg %p105
      %p112 = scmp.eq.s32.totalorder %s14, 3
      %p113 = por %p111, %p112
      %p114 = scmp.ne.s32.totalorder %s106, %s109
      %p115 = scmp.eq.s32.totalorder %s14, 0
      %p116 = por %p114, %p115
      %p117 = scmp.ne.s32.totalorder %s106, %s109
      %p118 = scmp.eq.s32.totalorder %s19, 3
      %p119 = por %p117, %p118
      %p120 = scmp.ne.s32.totalorder %s109, %s110
      %p121 = scmp.eq.s32.totalorder %s19, 0
      %p122 = por %p120, %p121
      %p123 = scmp.ne.s32.totalorder %s109, %s110
      %p124 = scmp.eq.s32.totalorder %s20, 3
      %p125 = por %p123, %p124
      %p127 = scmp.ne.s32.totalorder %s110, %s126
      %p128 = scmp.eq.s32.totalorder %s20, 0
      %p129 = por %p127, %p128
      %p130 = scmp.le.s32.totalorder 1, %s14
      %p131 = scmp.lt.s32.totalorder %s14, 5
      %p132 = pnand %p130, %p131
      %p133 = pneg %p132
      // Predicated region
      $region9: #{tpu_custom_call.1} parent=5 // pred_check
        _
      $region10: #{tpu_custom_call.1} parent=5 // pred_check_branch
        %135 = sbr.rel (%p132) target = $region12
      $region11: #{tpu_custom_call.1} parent=5 // pred_region
        %s136 = ssub.s32 %s14, 1
        // Predicated region
        $region13: #{tpu_custom_call.1} parent=11 // pred_check
          %p137 = pneg %p73
        $region14: #{tpu_custom_call.1} parent=11 // pred_check_branch
          %139 = sbr.rel (%p137) target = $region16
        $region15: #{tpu_custom_call.1} parent=11 // pred_region
          %s141 = ssub.s32 256, 256
          %142 = vsyncadd [#allocation5], %s141
          %147 = dma.hbm_to_smem %s1, 256, [#allocation7], [#allocation5], 128, 128, 8
        $region16: #{tpu_custom_call.1} parent=11 // pred_fallthru
          _
        // Predicated region
        $region17: #{tpu_custom_call.1} parent=11 // pred_check
          %p148 = pneg %p94
        $region18: #{tpu_custom_call.1} parent=11 // pred_check_branch
          %150 = sbr.rel (%p148) target = $region20
        $region19: #{tpu_custom_call.1} parent=11 // pred_region
          %s152 = ssub.s32 16, 16
          %153 = vsyncadd [#allocation6], %s152
          %s155 = sshll.u32 %s2, 4
          %s156 = int_to_ptr.vmem [resolvable:$true] %s155
          %158 = dma.vmem_to_smem %s156, 16, [#allocation8], [#allocation6]
        $region20: #{tpu_custom_call.1} parent=11 // pred_fallthru
          _
      $region12: #{tpu_custom_call.1} parent=5 // pred_fallthru
        _
      %p159 = scmp.lt.s32.totalorder %s14, 4
      // Predicated region
      $region21: #{tpu_custom_call.1} parent=5 // pred_check
        %p160 = pneg %p159
      $region22: #{tpu_custom_call.1} parent=5 // pred_check_branch
        %162 = sbr.rel (%p160) target = $region24
      $region23: #{tpu_custom_call.1} parent=5 // pred_region
        // Predicated region
        $region25: #{tpu_custom_call.1} parent=23 // pred_check
          %p163 = pneg %p46
        $region26: #{tpu_custom_call.1} parent=23 // pred_check_branch
          %165 = sbr.rel (%p163) target = $region28
        $region27: #{tpu_custom_call.1} parent=23 // pred_region
          %s166 = sand.u32 %s36, 1
          %s167 = scalar_lea.sflag [#allocation4], %s166
          %s168 = sand.u32 %s36, 1
          %s169 = smul.addr %s168, 48
          %s170 = scalar_lea.vmem [#allocation3], %s169
          %s172 = ssub.s32 768, 768
          %173 = vsyncadd %s167, %s172
          %s174 = smul.addr %s21, 6
          %s175 = smul.addr %s174, 128
          %s176 = scalar_lea.hbm %s0, %s175
          %s177 = sshll.u32 %s170, 4
          %s178 = int_to_ptr.vmem [resolvable:$true] %s177
          %183 = dma.hbm_to_vmem [thread:$0]  %s176, 768, %s178, %s167, 128, 128, 8
        $region28: #{tpu_custom_call.1} parent=23 // pred_fallthru
          _
      $region24: #{tpu_custom_call.1} parent=5 // pred_fallthru
        _
      %p184 = scmp.le.s32.totalorder 1, %s14
      %p185 = scmp.lt.s32.totalorder %s14, 5
      %p186 = pnand %p184, %p185
      %p187 = pneg %p186
      // Predicated region
      $region29: #{tpu_custom_call.1} parent=5 // pred_check
        _
      $region30: #{tpu_custom_call.1} parent=5 // pred_check_branch
        %189 = sbr.rel (%p186) target = $region32
      $region31: #{tpu_custom_call.1} parent=5 // pred_region
        %s190 = ssub.s32 %s14, 1
        %s191 = sand.u32 %s39, 1
        %s192 = scalar_lea.sflag [#allocation4], %s191
        %s193 = sand.u32 %s39, 1
        %s194 = smul.addr %s193, 48
        %s195 = scalar_lea.vmem [#allocation3], %s194
        // Predicated region
        $region33: #{tpu_custom_call.1} parent=31 // pred_check
          %p196 = pneg %p52
        $region34: #{tpu_custom_call.1} parent=31 // pred_check_branch
          %198 = sbr.rel (%p196) target = $region36
        $region35: #{tpu_custom_call.1} parent=31 // pred_region
          %199 = dma.done %s192, 768
        $region36: #{tpu_custom_call.1} parent=31 // pred_fallthru
          _
        // Predicated region
        $region37: #{tpu_custom_call.1} parent=31 // pred_check
          %p200 = pneg %p73
        $region38: #{tpu_custom_call.1} parent=31 // pred_check_branch
          %202 = sbr.rel (%p200) target = $region40
        $region39: #{tpu_custom_call.1} parent=31 // pred_region
          %203 = dma.done [#allocation5], 256
        $region40: #{tpu_custom_call.1} parent=31 // pred_fallthru
          _
        // Predicated region
        $region41: #{tpu_custom_call.1} parent=31 // pred_check
          %p204 = pneg %p94
        $region42: #{tpu_custom_call.1} parent=31 // pred_check_branch
          %206 = sbr.rel (%p204) target = $region44
        $region43: #{tpu_custom_call.1} parent=31 // pred_region
          %207 = dma.done [#allocation6], 16
        $region44: #{tpu_custom_call.1} parent=31 // pred_fallthru
          _
        %208 = sfence
        %s209 = sand.u32 %s39, 1
        %s210 = scalar_lea.sflag [#allocation4], %s209
        %s211 = sand.u32 %s39, 1
        %s212 = smul.addr %s211, 48
        %s213 = scalar_lea.vmem [#allocation3], %s212
        %p214 = pneg %p52
        %p215 = pneg %p49
        %p216 = pneg %p73
        %p217 = pneg %p70
        %p218 = pneg %p94
        %p219 = pneg %p91
        %p220 = pneg %p122
        %p221 = pneg %p119
        %s222 = smul.u32 8, %s24
        %p223 = scmp.lt.s32.totalorder %s23, 1
        %s224 = scalar_select %p223, %s23, 1
        %p225 = scmp.lt.s32.totalorder %s222, 15
        %s226 = scalar_select %p225, %s222, 15
        %s227 = smul.addr %s226, 2
        %s228 = smul.addr %s224, 32
        %s229 = sadd.s32 %s227, %s228
        %s230 = smul.addr %s229, 8
        %s231 = scalar_lea.vmem %s3, %s230
        %s232 = smul.u32 8, %s24
        %p233 = scmp.lt.s32.totalorder %s23, 1
        %s234 = scalar_select %p233, %s23, 1
        %p235 = scmp.lt.s32.totalorder %s232, 15
        %s236 = scalar_select %p235, %s232, 15
        %s237 = smul.addr %s236, 2
        %s238 = smul.addr %s234, 32
        %s239 = sadd.s32 %s237, %s238
        %s240 = smul.addr %s239, 8
        %s241 = scalar_lea.vmem %s3, %s240
        %s242 = smul.u32 8, %s24
        %s243 = smul.u32 %s24, 8
        %v244 = vld [vmem:[%s195] sm:$0xff]
        %v245 = vld [vmem:[%s195 + $0x8] sm:$0xf]
        %vm246 = vcmask 97280
        %247 = vst.msk [vmem:[#allocation2] sm:$0xff] %vm246, %v244
        %vm248 = vcmask 93184
        %249 = vst.msk [vmem:[#allocation2 + $0x8] sm:$0xf] %vm248, %v245
        %v250 = vld [vmem:[%s195] sm:$0xff]
        %v251 = vld [vmem:[%s195 + $0x8] sm:$0xf]
        %254 = vrot.lane.b32.xlu0 %v250, 125
        %v255 = vpop.permute.xlu0 %254
        %256 = vrot.lane.b32.xlu0 %v251, 125
        %v257 = vpop.permute.xlu0 %256
        %s260 = scalar_lea.vmem [#allocation2], 16
        %261 = vst.msk [vmem:[%s260] sm:$0xff] %vm246, %v255
        %262 = vst.msk [vmem:[%s260 + $0x8] sm:$0xf] %vm248, %v257
        %v263 = vld [vmem:[%s195] sm:$0xff]
        %v264 = vld [vmem:[%s195 + $0x8] sm:$0xf]
        %267 = vrot.lane.b32.xlu0 %v263, 122
        %v268 = vpop.permute.xlu0 %267
        %269 = vrot.lane.b32.xlu0 %v264, 122
        %v270 = vpop.permute.xlu0 %269
        %s273 = scalar_lea.vmem [#allocation2], 32
        %274 = vst.msk [vmem:[%s273] sm:$0xff] %vm246, %v268
        %275 = vst.msk [vmem:[%s273 + $0x8] sm:$0xf] %vm248, %v270
        %v276 = vld [vmem:[%s195 + $0x2] sm:$0xff]
        %v277 = vld [vmem:[%s195 + $0xa] sm:$0xf]
        %s278 = scalar_lea.vmem [#allocation2], 48
        %279 = vst.msk [vmem:[%s278] sm:$0xff] %vm246, %v276
        %280 = vst.msk [vmem:[%s278 + $0x8] sm:$0xf] %vm248, %v277
        %v281 = vld [vmem:[%s195 + $0x2] sm:$0xff]
        %v282 = vld [vmem:[%s195 + $0xa] sm:$0xf]
        %285 = vrot.lane.b32.xlu0 %v281, 125
        %v286 = vpop.permute.xlu0 %285
        %287 = vrot.lane.b32.xlu0 %v282, 125
        %v288 = vpop.permute.xlu0 %287
        %s291 = scalar_lea.vmem [#allocation2], 64
        %292 = vst.msk [vmem:[%s291] sm:$0xff] %vm246, %v286
        %293 = vst.msk [vmem:[%s291 + $0x8] sm:$0xf] %vm248, %v288
        %v294 = vld [vmem:[%s195 + $0x2] sm:$0xff]
        %v295 = vld [vmem:[%s195 + $0xa] sm:$0xf]
        %298 = vrot.lane.b32.xlu0 %v294, 122
        %v299 = vpop.permute.xlu0 %298
        %300 = vrot.lane.b32.xlu0 %v295, 122
        %v301 = vpop.permute.xlu0 %300
        %s304 = scalar_lea.vmem [#allocation2], 80
        %305 = vst.msk [vmem:[%s304] sm:$0xff] %vm246, %v299
        %306 = vst.msk [vmem:[%s304 + $0x8] sm:$0xf] %vm248, %v301
        %v307 = vld [vmem:[%s195 + $0x4] sm:$0xff]
        %v308 = vld [vmem:[%s195 + $0xc] sm:$0xf]
        %s309 = scalar_lea.vmem [#allocation2], 96
        %310 = vst.msk [vmem:[%s309] sm:$0xff] %vm246, %v307
        %311 = vst.msk [vmem:[%s309 + $0x8] sm:$0xf] %vm248, %v308
        %v312 = vld [vmem:[%s195 + $0x4] sm:$0xff]
        %v313 = vld [vmem:[%s195 + $0xc] sm:$0xf]
        %316 = vrot.lane.b32.xlu0 %v312, 125
        %v317 = vpop.permute.xlu0 %316
        %318 = vrot.lane.b32.xlu0 %v313, 125
        %v319 = vpop.permute.xlu0 %318
        %s322 = scalar_lea.vmem [#allocation2], 112
        %323 = vst.msk [vmem:[%s322] sm:$0xff] %vm246, %v317
        %324 = vst.msk [vmem:[%s322 + $0x8] sm:$0xf] %vm248, %v319
        %v325 = vld [vmem:[%s195 + $0x4] sm:$0xff]
        %v326 = vld [vmem:[%s195 + $0xc] sm:$0xf]
        %329 = vrot.lane.b32.xlu0 %v325, 122
        %v330 = vpop.permute.xlu0 %329
        %331 = vrot.lane.b32.xlu0 %v326, 122
        %v332 = vpop.permute.xlu0 %331
        %s335 = scalar_lea.vmem [#allocation2], 128
        %336 = vst.msk [vmem:[%s335] sm:$0xff] %vm246, %v330
        %337 = vst.msk [vmem:[%s335 + $0x8] sm:$0xf] %vm248, %v332
        %s338 = scalar_lea.vmem %s195, 16 [#allocation3]
        %v339 = vld [vmem:[%s338] sm:$0xff]
        %v340 = vld [vmem:[%s338 + $0x8] sm:$0xf]
        %s341 = scalar_lea.vmem [#allocation2], 144
        %342 = vst.msk [vmem:[%s341] sm:$0xff] %vm246, %v339
        %343 = vst.msk [vmem:[%s341 + $0x8] sm:$0xf] %vm248, %v340
        %v344 = vld [vmem:[%s338] sm:$0xff]
        %v345 = vld [vmem:[%s338 + $0x8] sm:$0xf]
        %348 = vrot.lane.b32.xlu0 %v344, 125
        %v349 = vpop.permute.xlu0 %348
        %350 = vrot.lane.b32.xlu0 %v345, 125
        %v351 = vpop.permute.xlu0 %350
        %s354 = scalar_lea.vmem [#allocation2], 160
        %355 = vst.msk [vmem:[%s354] sm:$0xff] %vm246, %v349
        %356 = vst.msk [vmem:[%s354 + $0x8] sm:$0xf] %vm248, %v351
        %v357 = vld [vmem:[%s338] sm:$0xff]
        %v358 = vld [vmem:[%s338 + $0x8] sm:$0xf]
        %361 = vrot.lane.b32.xlu0 %v357, 122
        %v362 = vpop.permute.xlu0 %361
        %363 = vrot.lane.b32.xlu0 %v358, 122
        %v364 = vpop.permute.xlu0 %363
        %s367 = scalar_lea.vmem [#allocation2], 176
        %368 = vst.msk [vmem:[%s367] sm:$0xff] %vm246, %v362
        %369 = vst.msk [vmem:[%s367 + $0x8] sm:$0xf] %vm248, %v364
        %v370 = vld [vmem:[%s338 + $0x2] sm:$0xff]
        %v371 = vld [vmem:[%s338 + $0xa] sm:$0xf]
        %s372 = scalar_lea.vmem [#allocation2], 192
        %373 = vst.msk [vmem:[%s372] sm:$0xff] %vm246, %v370
        %374 = vst.msk [vmem:[%s372 + $0x8] sm:$0xf] %vm248, %v371
        %v375 = vld [vmem:[%s338 + $0x2] sm:$0xff]
        %v376 = vld [vmem:[%s338 + $0xa] sm:$0xf]
        %379 = vrot.lane.b32.xlu0 %v375, 125
        %v380 = vpop.permute.xlu0 %379
        %381 = vrot.lane.b32.xlu0 %v376, 125
        %v382 = vpop.permute.xlu0 %381
        %s385 = scalar_lea.vmem [#allocation2], 208
        %386 = vst.msk [vmem:[%s385] sm:$0xff] %vm246, %v380
        %387 = vst.msk [vmem:[%s385 + $0x8] sm:$0xf] %vm248, %v382
        %v388 = vld [vmem:[%s338 + $0x2] sm:$0xff]
        %v389 = vld [vmem:[%s338 + $0xa] sm:$0xf]
        %392 = vrot.lane.b32.xlu0 %v388, 122
        %v393 = vpop.permute.xlu0 %392
        %394 = vrot.lane.b32.xlu0 %v389, 122
        %v395 = vpop.permute.xlu0 %394
        %s398 = scalar_lea.vmem [#allocation2], 224
        %399 = vst.msk [vmem:[%s398] sm:$0xff] %vm246, %v393
        %400 = vst.msk [vmem:[%s398 + $0x8] sm:$0xf] %vm248, %v395
        %v401 = vld [vmem:[%s338 + $0x4] sm:$0xff]
        %v402 = vld [vmem:[%s338 + $0xc] sm:$0xf]
        %s403 = scalar_lea.vmem [#allocation2], 240
        %404 = vst.msk [vmem:[%s403] sm:$0xff] %vm246, %v401
        %405 = vst.msk [vmem:[%s403 + $0x8] sm:$0xf] %vm248, %v402
        %v406 = vld [vmem:[%s338 + $0x4] sm:$0xff]
        %v407 = vld [vmem:[%s338 + $0xc] sm:$0xf]
        %410 = vrot.lane.b32.xlu0 %v406, 125
        %v411 = vpop.permute.xlu0 %410
        %412 = vrot.lane.b32.xlu0 %v407, 125
        %v413 = vpop.permute.xlu0 %412
        %s416 = scalar_lea.vmem [#allocation2], 256
        %417 = vst.msk [vmem:[%s416] sm:$0xff] %vm246, %v411
        %418 = vst.msk [vmem:[%s416 + $0x8] sm:$0xf] %vm248, %v413
        %v419 = vld [vmem:[%s338 + $0x4] sm:$0xff]
        %v420 = vld [vmem:[%s338 + $0xc] sm:$0xf]
        %423 = vrot.lane.b32.xlu0 %v419, 122
        %v424 = vpop.permute.xlu0 %423
        %425 = vrot.lane.b32.xlu0 %v420, 122
        %v426 = vpop.permute.xlu0 %425
        %s429 = scalar_lea.vmem [#allocation2], 272
        %430 = vst.msk [vmem:[%s429] sm:$0xff] %vm246, %v424
        %431 = vst.msk [vmem:[%s429 + $0x8] sm:$0xf] %vm248, %v426
        %s432 = scalar_lea.vmem %s195, 32 [#allocation3]
        %v433 = vld [vmem:[%s432] sm:$0xff]
        %v434 = vld [vmem:[%s432 + $0x8] sm:$0xf]
        %s435 = scalar_lea.vmem [#allocation2], 288
        %436 = vst.msk [vmem:[%s435] sm:$0xff] %vm246, %v433
        %437 = vst.msk [vmem:[%s435 + $0x8] sm:$0xf] %vm248, %v434
        %v438 = vld [vmem:[%s432] sm:$0xff]
        %v439 = vld [vmem:[%s432 + $0x8] sm:$0xf]
        %442 = vrot.lane.b32.xlu0 %v438, 125
        %v443 = vpop.permute.xlu0 %442
        %444 = vrot.lane.b32.xlu0 %v439, 125
        %v445 = vpop.permute.xlu0 %444
        %s448 = scalar_lea.vmem [#allocation2], 304
        %449 = vst.msk [vmem:[%s448] sm:$0xff] %vm246, %v443
        %450 = vst.msk [vmem:[%s448 + $0x8] sm:$0xf] %vm248, %v445
        %v451 = vld [vmem:[%s432] sm:$0xff]
        %v452 = vld [vmem:[%s432 + $0x8] sm:$0xf]
        %455 = vrot.lane.b32.xlu0 %v451, 122
        %v456 = vpop.permute.xlu0 %455
        %457 = vrot.lane.b32.xlu0 %v452, 122
        %v458 = vpop.permute.xlu0 %457
        %s461 = scalar_lea.vmem [#allocation2], 320
        %462 = vst.msk [vmem:[%s461] sm:$0xff] %vm246, %v456
        %463 = vst.msk [vmem:[%s461 + $0x8] sm:$0xf] %vm248, %v458
        %v464 = vld [vmem:[%s432 + $0x2] sm:$0xff]
        %v465 = vld [vmem:[%s432 + $0xa] sm:$0xf]
        %s466 = scalar_lea.vmem [#allocation2], 336
        %467 = vst.msk [vmem:[%s466] sm:$0xff] %vm246, %v464
        %468 = vst.msk [vmem:[%s466 + $0x8] sm:$0xf] %vm248, %v465
        %v469 = vld [vmem:[%s432 + $0x2] sm:$0xff]
        %v470 = vld [vmem:[%s432 + $0xa] sm:$0xf]
        %473 = vrot.lane.b32.xlu0 %v469, 125
        %v474 = vpop.permute.xlu0 %473
        %475 = vrot.lane.b32.xlu0 %v470, 125
        %v476 = vpop.permute.xlu0 %475
        %s479 = scalar_lea.vmem [#allocation2], 352
        %480 = vst.msk [vmem:[%s479] sm:$0xff] %vm246, %v474
        %481 = vst.msk [vmem:[%s479 + $0x8] sm:$0xf] %vm248, %v476
        %v482 = vld [vmem:[%s432 + $0x2] sm:$0xff]
        %v483 = vld [vmem:[%s432 + $0xa] sm:$0xf]
        %486 = vrot.lane.b32.xlu0 %v482, 122
        %v487 = vpop.permute.xlu0 %486
        %488 = vrot.lane.b32.xlu0 %v483, 122
        %v489 = vpop.permute.xlu0 %488
        %s492 = scalar_lea.vmem [#allocation2], 368
        %493 = vst.msk [vmem:[%s492] sm:$0xff] %vm246, %v487
        %494 = vst.msk [vmem:[%s492 + $0x8] sm:$0xf] %vm248, %v489
        %v495 = vld [vmem:[%s432 + $0x4] sm:$0xff]
        %v496 = vld [vmem:[%s432 + $0xc] sm:$0xf]
        %s497 = scalar_lea.vmem [#allocation2], 384
        %498 = vst.msk [vmem:[%s497] sm:$0xff] %vm246, %v495
        %499 = vst.msk [vmem:[%s497 + $0x8] sm:$0xf] %vm248, %v496
        %v500 = vld [vmem:[%s432 + $0x4] sm:$0xff]
        %v501 = vld [vmem:[%s432 + $0xc] sm:$0xf]
        %504 = vrot.lane.b32.xlu0 %v500, 125
        %v505 = vpop.permute.xlu0 %504
        %506 = vrot.lane.b32.xlu0 %v501, 125
        %v507 = vpop.permute.xlu0 %506
        %s510 = scalar_lea.vmem [#allocation2], 400
        %511 = vst.msk [vmem:[%s510] sm:$0xff] %vm246, %v505
        %512 = vst.msk [vmem:[%s510 + $0x8] sm:$0xf] %vm248, %v507
        %v513 = vld [vmem:[%s432 + $0x4] sm:$0xff]
        %v514 = vld [vmem:[%s432 + $0xc] sm:$0xf]
        %517 = vrot.lane.b32.xlu0 %v513, 122
        %v518 = vpop.permute.xlu0 %517
        %519 = vrot.lane.b32.xlu0 %v514, 122
        %v520 = vpop.permute.xlu0 %519
        %s523 = scalar_lea.vmem [#allocation2], 416
        %524 = vst.msk [vmem:[%s523] sm:$0xff] %vm246, %v518
        %525 = vst.msk [vmem:[%s523 + $0x8] sm:$0xf] %vm248, %v520
        %s526 = smul.u32 %s243, 128
        %s527 = sld [smem:[#allocation7 + %s526]]
        %v528 = vld [vmem:[#allocation2] sm:$0xff]
        %v529 = vld [vmem:[#allocation2 + $0x8] sm:$0xf]
        %v530 = vstv %s527
        %v531 = vmul.f32 %v530, %v528
        %v532 = vmul.f32 %v530, %v529
        %v533 = vadd.f32 %v531, 0.0
        %v534 = vadd.f32 %v532, 0.0
        %s535 = sadd.s32 %s526, 1
        %s536 = sld [smem:[#allocation7 + %s535]]
        %v537 = vld [vmem:[%s260] sm:$0xff]
        %v538 = vld [vmem:[%s260 + $0x8] sm:$0xf]
        %v539 = vstv %s536
        %v540 = vmul.f32 %v539, %v537
        %v541 = vmul.f32 %v539, %v538
        %v542 = vadd.f32 %v533, %v540
        %v543 = vadd.f32 %v534, %v541
        %s544 = sadd.s32 %s526, 2
        %s545 = sld [smem:[#allocation7 + %s544]]
        %v546 = vld [vmem:[%s273] sm:$0xff]
        %v547 = vld [vmem:[%s273 + $0x8] sm:$0xf]
        %v548 = vstv %s545
        %v549 = vmul.f32 %v548, %v546
        %v550 = vmul.f32 %v548, %v547
        %v551 = vadd.f32 %v542, %v549
        %v552 = vadd.f32 %v543, %v550
        %s553 = sadd.s32 %s526, 3
        %s554 = sld [smem:[#allocation7 + %s553]]
        %v555 = vld [vmem:[%s278] sm:$0xff]
        %v556 = vld [vmem:[%s278 + $0x8] sm:$0xf]
        %v557 = vstv %s554
        %v558 = vmul.f32 %v557, %v555
        %v559 = vmul.f32 %v557, %v556
        %v560 = vadd.f32 %v551, %v558
        %v561 = vadd.f32 %v552, %v559
        %s562 = sadd.s32 %s526, 4
        %s563 = sld [smem:[#allocation7 + %s562]]
        %v564 = vld [vmem:[%s291] sm:$0xff]
        %v565 = vld [vmem:[%s291 + $0x8] sm:$0xf]
        %v566 = vstv %s563
        %v567 = vmul.f32 %v566, %v564
        %v568 = vmul.f32 %v566, %v565
        %v569 = vadd.f32 %v560, %v567
        %v570 = vadd.f32 %v561, %v568
        %s571 = sadd.s32 %s526, 5
        %s572 = sld [smem:[#allocation7 + %s571]]
        %v573 = vld [vmem:[%s304] sm:$0xff]
        %v574 = vld [vmem:[%s304 + $0x8] sm:$0xf]
        %v575 = vstv %s572
        %v576 = vmul.f32 %v575, %v573
        %v577 = vmul.f32 %v575, %v574
        %v578 = vadd.f32 %v569, %v576
        %v579 = vadd.f32 %v570, %v577
        %s580 = sadd.s32 %s526, 6
        %s581 = sld [smem:[#allocation7 + %s580]]
        %v582 = vld [vmem:[%s309] sm:$0xff]
        %v583 = vld [vmem:[%s309 + $0x8] sm:$0xf]
        %v584 = vstv %s581
        %v585 = vmul.f32 %v584, %v582
        %v586 = vmul.f32 %v584, %v583
        %v587 = vadd.f32 %v578, %v585
        %v588 = vadd.f32 %v579, %v586
        %s589 = sadd.s32 %s526, 7
        %s590 = sld [smem:[#allocation7 + %s589]]
        %v591 = vld [vmem:[%s322] sm:$0xff]
        %v592 = vld [vmem:[%s322 + $0x8] sm:$0xf]
        %v593 = vstv %s590
        %v594 = vmul.f32 %v593, %v591
        %v595 = vmul.f32 %v593, %v592
        %v596 = vadd.f32 %v587, %v594
        %v597 = vadd.f32 %v588, %v595
        %s598 = sadd.s32 %s526, 8
        %s599 = sld [smem:[#allocation7 + %s598]]
        %v600 = vld [vmem:[%s335] sm:$0xff]
        %v601 = vld [vmem:[%s335 + $0x8] sm:$0xf]
        %v602 = vstv %s599
        %v603 = vmul.f32 %v602, %v600
        %v604 = vmul.f32 %v602, %v601
        %v605 = vadd.f32 %v596, %v603
        %v606 = vadd.f32 %v597, %v604
        %s607 = sadd.s32 %s526, 9
        %s608 = sld [smem:[#allocation7 + %s607]]
        %v609 = vld [vmem:[%s341] sm:$0xff]
        %v610 = vld [vmem:[%s341 + $0x8] sm:$0xf]
        %v611 = vstv %s608
        %v612 = vmul.f32 %v611, %v609
        %v613 = vmul.f32 %v611, %v610
        %v614 = vadd.f32 %v605, %v612
        %v615 = vadd.f32 %v606, %v613
        %s616 = sadd.s32 %s526, 10
        %s617 = sld [smem:[#allocation7 + %s616]]
        %v618 = vld [vmem:[%s354] sm:$0xff]
        %v619 = vld [vmem:[%s354 + $0x8] sm:$0xf]
        %v620 = vstv %s617
        %v621 = vmul.f32 %v620, %v618
        %v622 = vmul.f32 %v620, %v619
        %v623 = vadd.f32 %v614, %v621
        %v624 = vadd.f32 %v615, %v622
        %s625 = sadd.s32 %s526, 11
        %s626 = sld [smem:[#allocation7 + %s625]]
        %v627 = vld [vmem:[%s367] sm:$0xff]
        %v628 = vld [vmem:[%s367 + $0x8] sm:$0xf]
        %v629 = vstv %s626
        %v630 = vmul.f32 %v629, %v627
        %v631 = vmul.f32 %v629, %v628
        %v632 = vadd.f32 %v623, %v630
        %v633 = vadd.f32 %v624, %v631
        %s634 = sadd.s32 %s526, 12
        %s635 = sld [smem:[#allocation7 + %s634]]
        %v636 = vld [vmem:[%s372] sm:$0xff]
        %v637 = vld [vmem:[%s372 + $0x8] sm:$0xf]
        %v638 = vstv %s635
        %v639 = vmul.f32 %v638, %v636
        %v640 = vmul.f32 %v638, %v637
        %v641 = vadd.f32 %v632, %v639
        %v642 = vadd.f32 %v633, %v640
        %s643 = sadd.s32 %s526, 13
        %s644 = sld [smem:[#allocation7 + %s643]]
        %v645 = vld [vmem:[%s385] sm:$0xff]
        %v646 = vld [vmem:[%s385 + $0x8] sm:$0xf]
        %v647 = vstv %s644
        %v648 = vmul.f32 %v647, %v645
        %v649 = vmul.f32 %v647, %v646
        %v650 = vadd.f32 %v641, %v648
        %v651 = vadd.f32 %v642, %v649
        %s652 = sadd.s32 %s526, 14
        %s653 = sld [smem:[#allocation7 + %s652]]
        %v654 = vld [vmem:[%s398] sm:$0xff]
        %v655 = vld [vmem:[%s398 + $0x8] sm:$0xf]
        %v656 = vstv %s653
        %v657 = vmul.f32 %v656, %v654
        %v658 = vmul.f32 %v656, %v655
        %v659 = vadd.f32 %v650, %v657
        %v660 = vadd.f32 %v651, %v658
        %s661 = sadd.s32 %s526, 15
        %s662 = sld [smem:[#allocation7 + %s661]]
        %v663 = vld [vmem:[%s403] sm:$0xff]
        %v664 = vld [vmem:[%s403 + $0x8] sm:$0xf]
        %v665 = vstv %s662
        %v666 = vmul.f32 %v665, %v663
        %v667 = vmul.f32 %v665, %v664
        %v668 = vadd.f32 %v659, %v666
        %v669 = vadd.f32 %v660, %v667
        %s670 = sadd.s32 %s526, 16
        %s671 = sld [smem:[#allocation7 + %s670]]
        %v672 = vld [vmem:[%s416] sm:$0xff]
        %v673 = vld [vmem:[%s416 + $0x8] sm:$0xf]
        %v674 = vstv %s671
        %v675 = vmul.f32 %v674, %v672
        %v676 = vmul.f32 %v674, %v673
        %v677 = vadd.f32 %v668, %v675
        %v678 = vadd.f32 %v669, %v676
        %s679 = sadd.s32 %s526, 17
        %s680 = sld [smem:[#allocation7 + %s679]]
        %v681 = vld [vmem:[%s429] sm:$0xff]
        %v682 = vld [vmem:[%s429 + $0x8] sm:$0xf]
        %v683 = vstv %s680
        %v684 = vmul.f32 %v683, %v681
        %v685 = vmul.f32 %v683, %v682
        %v686 = vadd.f32 %v677, %v684
        %v687 = vadd.f32 %v678, %v685
        %s688 = sadd.s32 %s526, 18
        %s689 = sld [smem:[#allocation7 + %s688]]
        %v690 = vld [vmem:[%s435] sm:$0xff]
        %v691 = vld [vmem:[%s435 + $0x8] sm:$0xf]
        %v692 = vstv %s689
        %v693 = vmul.f32 %v692, %v690
        %v694 = vmul.f32 %v692, %v691
        %v695 = vadd.f32 %v686, %v693
        %v696 = vadd.f32 %v687, %v694
        %s697 = sadd.s32 %s526, 19
        %s698 = sld [smem:[#allocation7 + %s697]]
        %v699 = vld [vmem:[%s448] sm:$0xff]
        %v700 = vld [vmem:[%s448 + $0x8] sm:$0xf]
        %v701 = vstv %s698
        %v702 = vmul.f32 %v701, %v699
        %v703 = vmul.f32 %v701, %v700
        %v704 = vadd.f32 %v695, %v702
        %v705 = vadd.f32 %v696, %v703
        %s706 = sadd.s32 %s526, 20
        %s707 = sld [smem:[#allocation7 + %s706]]
        %v708 = vld [vmem:[%s461] sm:$0xff]
        %v709 = vld [vmem:[%s461 + $0x8] sm:$0xf]
        %v710 = vstv %s707
        %v711 = vmul.f32 %v710, %v708
        %v712 = vmul.f32 %v710, %v709
        %v713 = vadd.f32 %v704, %v711
        %v714 = vadd.f32 %v705, %v712
        %s715 = sadd.s32 %s526, 21
        %s716 = sld [smem:[#allocation7 + %s715]]
        %v717 = vld [vmem:[%s466] sm:$0xff]
        %v718 = vld [vmem:[%s466 + $0x8] sm:$0xf]
        %v719 = vstv %s716
        %v720 = vmul.f32 %v719, %v717
        %v721 = vmul.f32 %v719, %v718
        %v722 = vadd.f32 %v713, %v720
        %v723 = vadd.f32 %v714, %v721
        %s724 = sadd.s32 %s526, 22
        %s725 = sld [smem:[#allocation7 + %s724]]
        %v726 = vld [vmem:[%s479] sm:$0xff]
        %v727 = vld [vmem:[%s479 + $0x8] sm:$0xf]
        %v728 = vstv %s725
        %v729 = vmul.f32 %v728, %v726
        %v730 = vmul.f32 %v728, %v727
        %v731 = vadd.f32 %v722, %v729
        %v732 = vadd.f32 %v723, %v730
        %s733 = sadd.s32 %s526, 23
        %s734 = sld [smem:[#allocation7 + %s733]]
        %v735 = vld [vmem:[%s492] sm:$0xff]
        %v736 = vld [vmem:[%s492 + $0x8] sm:$0xf]
        %v737 = vstv %s734
        %v738 = vmul.f32 %v737, %v735
        %v739 = vmul.f32 %v737, %v736
        %v740 = vadd.f32 %v731, %v738
        %v741 = vadd.f32 %v732, %v739
        %s742 = sadd.s32 %s526, 24
        %s743 = sld [smem:[#allocation7 + %s742]]
        %v744 = vld [vmem:[%s497] sm:$0xff]
        %v745 = vld [vmem:[%s497 + $0x8] sm:$0xf]
        %v746 = vstv %s743
        %v747 = vmul.f32 %v746, %v744
        %v748 = vmul.f32 %v746, %v745
        %v749 = vadd.f32 %v740, %v747
        %v750 = vadd.f32 %v741, %v748
        %s751 = sadd.s32 %s526, 25
        %s752 = sld [smem:[#allocation7 + %s751]]
        %v753 = vld [vmem:[%s510] sm:$0xff]
        %v754 = vld [vmem:[%s510 + $0x8] sm:$0xf]
        %v755 = vstv %s752
        %v756 = vmul.f32 %v755, %v753
        %v757 = vmul.f32 %v755, %v754
        %v758 = vadd.f32 %v749, %v756
        %v759 = vadd.f32 %v750, %v757
        %s760 = sadd.s32 %s526, 26
        %s761 = sld [smem:[#allocation7 + %s760]]
        %v762 = vld [vmem:[%s523] sm:$0xff]
        %v763 = vld [vmem:[%s523 + $0x8] sm:$0xf]
        %v764 = vstv %s761
        %v765 = vmul.f32 %v764, %v762
        %v766 = vmul.f32 %v764, %v763
        %v767 = vadd.f32 %v758, %v765
        %v768 = vadd.f32 %v759, %v766
        %s769 = sld [smem:[#allocation8 + %s243]]
        %v770 = vstv %s769
        %v771 = vadd.f32 %v767, %v770
        %v772 = vadd.f32 %v768, %v770
        %v773 = vxor.u32 %v771, 2147483648
        %v774 = vxor.u32 %v772, 2147483648
        %v775 = vmul.f32 %v773, 1.442695
        %v776 = vpow.pop %v775
        %v777 = vmul.f32 %v774, 1.442695
        %v778 = vpow.pop %v777
        %v779 = vadd.f32 %v776, 1.0
        %v780 = vadd.f32 %v778, 1.0
        %v781 = vrcp.pop %v779
        %v782 = vmul.f32 1.0, %v781
        %v783 = vrcp.pop %v780
        %v784 = vmul.f32 1.0, %v783
        %785 = vst.msk [vmem:[%s241] sm:$0xff] %vm246, %v782
        %786 = vst.msk [vmem:[%s241 + $0x8] sm:$0xf] %vm248, %v784
        %s787 = sadd.s32 %s243, 1
        %s788 = smul.u32 %s787, 128
        %s789 = sld [smem:[#allocation7 + %s788]]
        %v790 = vld [vmem:[#allocation2] sm:$0xff]
        %v791 = vld [vmem:[#allocation2 + $0x8] sm:$0xf]
        %v792 = vstv %s789
        %v793 = vmul.f32 %v792, %v790
        %v794 = vmul.f32 %v792, %v791
        %v795 = vadd.f32 %v793, 0.0
        %v796 = vadd.f32 %v794, 0.0
        %s797 = sadd.s32 %s788, 1
        %s798 = sld [smem:[#allocation7 + %s797]]
        %v799 = vld [vmem:[%s260] sm:$0xff]
        %v800 = vld [vmem:[%s260 + $0x8] sm:$0xf]
        %v801 = vstv %s798
        %v802 = vmul.f32 %v801, %v799
        %v803 = vmul.f32 %v801, %v800
        %v804 = vadd.f32 %v795, %v802
        %v805 = vadd.f32 %v796, %v803
        %s806 = sadd.s32 %s788, 2
        %s807 = sld [smem:[#allocation7 + %s806]]
        %v808 = vld [vmem:[%s273] sm:$0xff]
        %v809 = vld [vmem:[%s273 + $0x8] sm:$0xf]
        %v810 = vstv %s807
        %v811 = vmul.f32 %v810, %v808
        %v812 = vmul.f32 %v810, %v809
        %v813 = vadd.f32 %v804, %v811
        %v814 = vadd.f32 %v805, %v812
        %s815 = sadd.s32 %s788, 3
        %s816 = sld [smem:[#allocation7 + %s815]]
        %v817 = vld [vmem:[%s278] sm:$0xff]
        %v818 = vld [vmem:[%s278 + $0x8] sm:$0xf]
        %v819 = vstv %s816
        %v820 = vmul.f32 %v819, %v817
        %v821 = vmul.f32 %v819, %v818
        %v822 = vadd.f32 %v813, %v820
        %v823 = vadd.f32 %v814, %v821
        %s824 = sadd.s32 %s788, 4
        %s825 = sld [smem:[#allocation7 + %s824]]
        %v826 = vld [vmem:[%s291] sm:$0xff]
        %v827 = vld [vmem:[%s291 + $0x8] sm:$0xf]
        %v828 = vstv %s825
        %v829 = vmul.f32 %v828, %v826
        %v830 = vmul.f32 %v828, %v827
        %v831 = vadd.f32 %v822, %v829
        %v832 = vadd.f32 %v823, %v830
        %s833 = sadd.s32 %s788, 5
        %s834 = sld [smem:[#allocation7 + %s833]]
        %v835 = vld [vmem:[%s304] sm:$0xff]
        %v836 = vld [vmem:[%s304 + $0x8] sm:$0xf]
        %v837 = vstv %s834
        %v838 = vmul.f32 %v837, %v835
        %v839 = vmul.f32 %v837, %v836
        %v840 = vadd.f32 %v831, %v838
        %v841 = vadd.f32 %v832, %v839
        %s842 = sadd.s32 %s788, 6
        %s843 = sld [smem:[#allocation7 + %s842]]
        %v844 = vld [vmem:[%s309] sm:$0xff]
        %v845 = vld [vmem:[%s309 + $0x8] sm:$0xf]
        %v846 = vstv %s843
        %v847 = vmul.f32 %v846, %v844
        %v848 = vmul.f32 %v846, %v845
        %v849 = vadd.f32 %v840, %v847
        %v850 = vadd.f32 %v841, %v848
        %s851 = sadd.s32 %s788, 7
        %s852 = sld [smem:[#allocation7 + %s851]]
        %v853 = vld [vmem:[%s322] sm:$0xff]
        %v854 = vld [vmem:[%s322 + $0x8] sm:$0xf]
        %v855 = vstv %s852
        %v856 = vmul.f32 %v855, %v853
        %v857 = vmul.f32 %v855, %v854
        %v858 = vadd.f32 %v849, %v856
        %v859 = vadd.f32 %v850, %v857
        %s860 = sadd.s32 %s788, 8
        %s861 = sld [smem:[#allocation7 + %s860]]
        %v862 = vld [vmem:[%s335] sm:$0xff]
        %v863 = vld [vmem:[%s335 + $0x8] sm:$0xf]
        %v864 = vstv %s861
        %v865 = vmul.f32 %v864, %v862
        %v866 = vmul.f32 %v864, %v863
        %v867 = vadd.f32 %v858, %v865
        %v868 = vadd.f32 %v859, %v866
        %s869 = sadd.s32 %s788, 9
        %s870 = sld [smem:[#allocation7 + %s869]]
        %v871 = vld [vmem:[%s341] sm:$0xff]
        %v872 = vld [vmem:[%s341 + $0x8] sm:$0xf]
        %v873 = vstv %s870
        %v874 = vmul.f32 %v873, %v871
        %v875 = vmul.f32 %v873, %v872
        %v876 = vadd.f32 %v867, %v874
        %v877 = vadd.f32 %v868, %v875
        %s878 = sadd.s32 %s788, 10
        %s879 = sld [smem:[#allocation7 + %s878]]
        %v880 = vld [vmem:[%s354] sm:$0xff]
        %v881 = vld [vmem:[%s354 + $0x8] sm:$0xf]
        %v882 = vstv %s879
        %v883 = vmul.f32 %v882, %v880
        %v884 = vmul.f32 %v882, %v881
        %v885 = vadd.f32 %v876, %v883
        %v886 = vadd.f32 %v877, %v884
        %s887 = sadd.s32 %s788, 11
        %s888 = sld [smem:[#allocation7 + %s887]]
        %v889 = vld [vmem:[%s367] sm:$0xff]
        %v890 = vld [vmem:[%s367 + $0x8] sm:$0xf]
        %v891 = vstv %s888
        %v892 = vmul.f32 %v891, %v889
        %v893 = vmul.f32 %v891, %v890
        %v894 = vadd.f32 %v885, %v892
        %v895 = vadd.f32 %v886, %v893
        %s896 = sadd.s32 %s788, 12
        %s897 = sld [smem:[#allocation7 + %s896]]
        %v898 = vld [vmem:[%s372] sm:$0xff]
        %v899 = vld [vmem:[%s372 + $0x8] sm:$0xf]
        %v900 = vstv %s897
        %v901 = vmul.f32 %v900, %v898
        %v902 = vmul.f32 %v900, %v899
        %v903 = vadd.f32 %v894, %v901
        %v904 = vadd.f32 %v895, %v902
        %s905 = sadd.s32 %s788, 13
        %s906 = sld [smem:[#allocation7 + %s905]]
        %v907 = vld [vmem:[%s385] sm:$0xff]
        %v908 = vld [vmem:[%s385 + $0x8] sm:$0xf]
        %v909 = vstv %s906
        %v910 = vmul.f32 %v909, %v907
        %v911 = vmul.f32 %v909, %v908
        %v912 = vadd.f32 %v903, %v910
        %v913 = vadd.f32 %v904, %v911
        %s914 = sadd.s32 %s788, 14
        %s915 = sld [smem:[#allocation7 + %s914]]
        %v916 = vld [vmem:[%s398] sm:$0xff]
        %v917 = vld [vmem:[%s398 + $0x8] sm:$0xf]
        %v918 = vstv %s915
        %v919 = vmul.f32 %v918, %v916
        %v920 = vmul.f32 %v918, %v917
        %v921 = vadd.f32 %v912, %v919
        %v922 = vadd.f32 %v913, %v920
        %s923 = sadd.s32 %s788, 15
        %s924 = sld [smem:[#allocation7 + %s923]]
        %v925 = vld [vmem:[%s403] sm:$0xff]
        %v926 = vld [vmem:[%s403 + $0x8] sm:$0xf]
        %v927 = vstv %s924
        %v928 = vmul.f32 %v927, %v925
        %v929 = vmul.f32 %v927, %v926
        %v930 = vadd.f32 %v921, %v928
        %v931 = vadd.f32 %v922, %v929
        %s932 = sadd.s32 %s788, 16
        %s933 = sld [smem:[#allocation7 + %s932]]
        %v934 = vld [vmem:[%s416] sm:$0xff]
        %v935 = vld [vmem:[%s416 + $0x8] sm:$0xf]
        %v936 = vstv %s933
        %v937 = vmul.f32 %v936, %v934
        %v938 = vmul.f32 %v936, %v935
        %v939 = vadd.f32 %v930, %v937
        %v940 = vadd.f32 %v931, %v938
        %s941 = sadd.s32 %s788, 17
        %s942 = sld [smem:[#allocation7 + %s941]]
        %v943 = vld [vmem:[%s429] sm:$0xff]
        %v944 = vld [vmem:[%s429 + $0x8] sm:$0xf]
        %v945 = vstv %s942
        %v946 = vmul.f32 %v945, %v943
        %v947 = vmul.f32 %v945, %v944
        %v948 = vadd.f32 %v939, %v946
        %v949 = vadd.f32 %v940, %v947
        %s950 = sadd.s32 %s788, 18
        %s951 = sld [smem:[#allocation7 + %s950]]
        %v952 = vld [vmem:[%s435] sm:$0xff]
        %v953 = vld [vmem:[%s435 + $0x8] sm:$0xf]
        %v954 = vstv %s951
        %v955 = vmul.f32 %v954, %v952
        %v956 = vmul.f32 %v954, %v953
        %v957 = vadd.f32 %v948, %v955
        %v958 = vadd.f32 %v949, %v956
        %s959 = sadd.s32 %s788, 19
        %s960 = sld [smem:[#allocation7 + %s959]]
        %v961 = vld [vmem:[%s448] sm:$0xff]
        %v962 = vld [vmem:[%s448 + $0x8] sm:$0xf]
        %v963 = vstv %s960
        %v964 = vmul.f32 %v963, %v961
        %v965 = vmul.f32 %v963, %v962
        %v966 = vadd.f32 %v957, %v964
        %v967 = vadd.f32 %v958, %v965
        %s968 = sadd.s32 %s788, 20
        %s969 = sld [smem:[#allocation7 + %s968]]
        %v970 = vld [vmem:[%s461] sm:$0xff]
        %v971 = vld [vmem:[%s461 + $0x8] sm:$0xf]
        %v972 = vstv %s969
        %v973 = vmul.f32 %v972, %v970
        %v974 = vmul.f32 %v972, %v971
        %v975 = vadd.f32 %v966, %v973
        %v976 = vadd.f32 %v967, %v974
        %s977 = sadd.s32 %s788, 21
        %s978 = sld [smem:[#allocation7 + %s977]]
        %v979 = vld [vmem:[%s466] sm:$0xff]
        %v980 = vld [vmem:[%s466 + $0x8] sm:$0xf]
        %v981 = vstv %s978
        %v982 = vmul.f32 %v981, %v979
        %v983 = vmul.f32 %v981, %v980
        %v984 = vadd.f32 %v975, %v982
        %v985 = vadd.f32 %v976, %v983
        %s986 = sadd.s32 %s788, 22
        %s987 = sld [smem:[#allocation7 + %s986]]
        %v988 = vld [vmem:[%s479] sm:$0xff]
        %v989 = vld [vmem:[%s479 + $0x8] sm:$0xf]
        %v990 = vstv %s987
        %v991 = vmul.f32 %v990, %v988
        %v992 = vmul.f32 %v990, %v989
        %v993 = vadd.f32 %v984, %v991
        %v994 = vadd.f32 %v985, %v992
        %s995 = sadd.s32 %s788, 23
        %s996 = sld [smem:[#allocation7 + %s995]]
        %v997 = vld [vmem:[%s492] sm:$0xff]
        %v998 = vld [vmem:[%s492 + $0x8] sm:$0xf]
        %v999 = vstv %s996
        %v1000 = vmul.f32 %v999, %v997
        %v1001 = vmul.f32 %v999, %v998
        %v1002 = vadd.f32 %v993, %v1000
        %v1003 = vadd.f32 %v994, %v1001
        %s1004 = sadd.s32 %s788, 24
        %s1005 = sld [smem:[#allocation7 + %s1004]]
        %v1006 = vld [vmem:[%s497] sm:$0xff]
        %v1007 = vld [vmem:[%s497 + $0x8] sm:$0xf]
        %v1008 = vstv %s1005
        %v1009 = vmul.f32 %v1008, %v1006
        %v1010 = vmul.f32 %v1008, %v1007
        %v1011 = vadd.f32 %v1002, %v1009
        %v1012 = vadd.f32 %v1003, %v1010
        %s1013 = sadd.s32 %s788, 25
        %s1014 = sld [smem:[#allocation7 + %s1013]]
        %v1015 = vld [vmem:[%s510] sm:$0xff]
        %v1016 = vld [vmem:[%s510 + $0x8] sm:$0xf]
        %v1017 = vstv %s1014
        %v1018 = vmul.f32 %v1017, %v1015
        %v1019 = vmul.f32 %v1017, %v1016
        %v1020 = vadd.f32 %v1011, %v1018
        %v1021 = vadd.f32 %v1012, %v1019
        %s1022 = sadd.s32 %s788, 26
        %s1023 = sld [smem:[#allocation7 + %s1022]]
        %v1024 = vld [vmem:[%s523] sm:$0xff]
        %v1025 = vld [vmem:[%s523 + $0x8] sm:$0xf]
        %v1026 = vstv %s1023
        %v1027 = vmul.f32 %v1026, %v1024
        %v1028 = vmul.f32 %v1026, %v1025
        %v1029 = vadd.f32 %v1020, %v1027
        %v1030 = vadd.f32 %v1021, %v1028
        %s1031 = sld [smem:[#allocation8 + %s787]]
        %v1032 = vstv %s1031
        %v1033 = vadd.f32 %v1029, %v1032
        %v1034 = vadd.f32 %v1030, %v1032
        %v1035 = vxor.u32 %v1033, 2147483648
        %v1036 = vxor.u32 %v1034, 2147483648
        %v1037 = vmul.f32 %v1035, 1.442695
        %v1038 = vpow.pop %v1037
        %v1039 = vmul.f32 %v1036, 1.442695
        %v1040 = vpow.pop %v1039
        %v1041 = vadd.f32 %v1038, 1.0
        %v1042 = vadd.f32 %v1040, 1.0
        %v1043 = vrcp.pop %v1041
        %v1044 = vmul.f32 1.0, %v1043
        %v1045 = vrcp.pop %v1042
        %v1046 = vmul.f32 1.0, %v1045
        %s1047 = scalar_lea.vmem %s241, 16
        %1048 = vst.msk [vmem:[%s1047] sm:$0xff] %vm246, %v1044
        %1049 = vst.msk [vmem:[%s1047 + $0x8] sm:$0xf] %vm248, %v1046
        %s1050 = sadd.s32 %s243, 2
        %s1051 = smul.u32 %s1050, 128
        %s1052 = sld [smem:[#allocation7 + %s1051]]
        %v1053 = vld [vmem:[#allocation2] sm:$0xff]
        %v1054 = vld [vmem:[#allocation2 + $0x8] sm:$0xf]
        %v1055 = vstv %s1052
        %v1056 = vmul.f32 %v1055, %v1053
        %v1057 = vmul.f32 %v1055, %v1054
        %v1058 = vadd.f32 %v1056, 0.0
        %v1059 = vadd.f32 %v1057, 0.0
        %s1060 = sadd.s32 %s1051, 1
        %s1061 = sld [smem:[#allocation7 + %s1060]]
        %v1062 = vld [vmem:[%s260] sm:$0xff]
        %v1063 = vld [vmem:[%s260 + $0x8] sm:$0xf]
        %v1064 = vstv %s1061
        %v1065 = vmul.f32 %v1064, %v1062
        %v1066 = vmul.f32 %v1064, %v1063
        %v1067 = vadd.f32 %v1058, %v1065
        %v1068 = vadd.f32 %v1059, %v1066
        %s1069 = sadd.s32 %s1051, 2
        %s1070 = sld [smem:[#allocation7 + %s1069]]
        %v1071 = vld [vmem:[%s273] sm:$0xff]
        %v1072 = vld [vmem:[%s273 + $0x8] sm:$0xf]
        %v1073 = vstv %s1070
        %v1074 = vmul.f32 %v1073, %v1071
        %v1075 = vmul.f32 %v1073, %v1072
        %v1076 = vadd.f32 %v1067, %v1074
        %v1077 = vadd.f32 %v1068, %v1075
        %s1078 = sadd.s32 %s1051, 3
        %s1079 = sld [smem:[#allocation7 + %s1078]]
        %v1080 = vld [vmem:[%s278] sm:$0xff]
        %v1081 = vld [vmem:[%s278 + $0x8] sm:$0xf]
        %v1082 = vstv %s1079
        %v1083 = vmul.f32 %v1082, %v1080
        %v1084 = vmul.f32 %v1082, %v1081
        %v1085 = vadd.f32 %v1076, %v1083
        %v1086 = vadd.f32 %v1077, %v1084
        %s1087 = sadd.s32 %s1051, 4
        %s1088 = sld [smem:[#allocation7 + %s1087]]
        %v1089 = vld [vmem:[%s291] sm:$0xff]
        %v1090 = vld [vmem:[%s291 + $0x8] sm:$0xf]
        %v1091 = vstv %s1088
        %v1092 = vmul.f32 %v1091, %v1089
        %v1093 = vmul.f32 %v1091, %v1090
        %v1094 = vadd.f32 %v1085, %v1092
        %v1095 = vadd.f32 %v1086, %v1093
        %s1096 = sadd.s32 %s1051, 5
        %s1097 = sld [smem:[#allocation7 + %s1096]]
        %v1098 = vld [vmem:[%s304] sm:$0xff]
        %v1099 = vld [vmem:[%s304 + $0x8] sm:$0xf]
        %v1100 = vstv %s1097
        %v1101 = vmul.f32 %v1100, %v1098
        %v1102 = vmul.f32 %v1100, %v1099
        %v1103 = vadd.f32 %v1094, %v1101
        %v1104 = vadd.f32 %v1095, %v1102
        %s1105 = sadd.s32 %s1051, 6
        %s1106 = sld [smem:[#allocation7 + %s1105]]
        %v1107 = vld [vmem:[%s309] sm:$0xff]
        %v1108 = vld [vmem:[%s309 + $0x8] sm:$0xf]
        %v1109 = vstv %s1106
        %v1110 = vmul.f32 %v1109, %v1107
        %v1111 = vmul.f32 %v1109, %v1108
        %v1112 = vadd.f32 %v1103, %v1110
        %v1113 = vadd.f32 %v1104, %v1111
        %s1114 = sadd.s32 %s1051, 7
        %s1115 = sld [smem:[#allocation7 + %s1114]]
        %v1116 = vld [vmem:[%s322] sm:$0xff]
        %v1117 = vld [vmem:[%s322 + $0x8] sm:$0xf]
        %v1118 = vstv %s1115
        %v1119 = vmul.f32 %v1118, %v1116
        %v1120 = vmul.f32 %v1118, %v1117
        %v1121 = vadd.f32 %v1112, %v1119
        %v1122 = vadd.f32 %v1113, %v1120
        %s1123 = sadd.s32 %s1051, 8
        %s1124 = sld [smem:[#allocation7 + %s1123]]
        %v1125 = vld [vmem:[%s335] sm:$0xff]
        %v1126 = vld [vmem:[%s335 + $0x8] sm:$0xf]
        %v1127 = vstv %s1124
        %v1128 = vmul.f32 %v1127, %v1125
        %v1129 = vmul.f32 %v1127, %v1126
        %v1130 = vadd.f32 %v1121, %v1128
        %v1131 = vadd.f32 %v1122, %v1129
        %s1132 = sadd.s32 %s1051, 9
        %s1133 = sld [smem:[#allocation7 + %s1132]]
        %v1134 = vld [vmem:[%s341] sm:$0xff]
        %v1135 = vld [vmem:[%s341 + $0x8] sm:$0xf]
        %v1136 = vstv %s1133
        %v1137 = vmul.f32 %v1136, %v1134
        %v1138 = vmul.f32 %v1136, %v1135
        %v1139 = vadd.f32 %v1130, %v1137
        %v1140 = vadd.f32 %v1131, %v1138
        %s1141 = sadd.s32 %s1051, 10
        %s1142 = sld [smem:[#allocation7 + %s1141]]
        %v1143 = vld [vmem:[%s354] sm:$0xff]
        %v1144 = vld [vmem:[%s354 + $0x8] sm:$0xf]
        %v1145 = vstv %s1142
        %v1146 = vmul.f32 %v1145, %v1143
        %v1147 = vmul.f32 %v1145, %v1144
        %v1148 = vadd.f32 %v1139, %v1146
        %v1149 = vadd.f32 %v1140, %v1147
        %s1150 = sadd.s32 %s1051, 11
        %s1151 = sld [smem:[#allocation7 + %s1150]]
        %v1152 = vld [vmem:[%s367] sm:$0xff]
        %v1153 = vld [vmem:[%s367 + $0x8] sm:$0xf]
        %v1154 = vstv %s1151
        %v1155 = vmul.f32 %v1154, %v1152
        %v1156 = vmul.f32 %v1154, %v1153
        %v1157 = vadd.f32 %v1148, %v1155
        %v1158 = vadd.f32 %v1149, %v1156
        %s1159 = sadd.s32 %s1051, 12
        %s1160 = sld [smem:[#allocation7 + %s1159]]
        %v1161 = vld [vmem:[%s372] sm:$0xff]
        %v1162 = vld [vmem:[%s372 + $0x8] sm:$0xf]
        %v1163 = vstv %s1160
        %v1164 = vmul.f32 %v1163, %v1161
        %v1165 = vmul.f32 %v1163, %v1162
        %v1166 = vadd.f32 %v1157, %v1164
        %v1167 = vadd.f32 %v1158, %v1165
        %s1168 = sadd.s32 %s1051, 13
        %s1169 = sld [smem:[#allocation7 + %s1168]]
        %v1170 = vld [vmem:[%s385] sm:$0xff]
        %v1171 = vld [vmem:[%s385 + $0x8] sm:$0xf]
        %v1172 = vstv %s1169
        %v1173 = vmul.f32 %v1172, %v1170
        %v1174 = vmul.f32 %v1172, %v1171
        %v1175 = vadd.f32 %v1166, %v1173
        %v1176 = vadd.f32 %v1167, %v1174
        %s1177 = sadd.s32 %s1051, 14
        %s1178 = sld [smem:[#allocation7 + %s1177]]
        %v1179 = vld [vmem:[%s398] sm:$0xff]
        %v1180 = vld [vmem:[%s398 + $0x8] sm:$0xf]
        %v1181 = vstv %s1178
        %v1182 = vmul.f32 %v1181, %v1179
        %v1183 = vmul.f32 %v1181, %v1180
        %v1184 = vadd.f32 %v1175, %v1182
        %v1185 = vadd.f32 %v1176, %v1183
        %s1186 = sadd.s32 %s1051, 15
        %s1187 = sld [smem:[#allocation7 + %s1186]]
        %v1188 = vld [vmem:[%s403] sm:$0xff]
        %v1189 = vld [vmem:[%s403 + $0x8] sm:$0xf]
        %v1190 = vstv %s1187
        %v1191 = vmul.f32 %v1190, %v1188
        %v1192 = vmul.f32 %v1190, %v1189
        %v1193 = vadd.f32 %v1184, %v1191
        %v1194 = vadd.f32 %v1185, %v1192
        %s1195 = sadd.s32 %s1051, 16
        %s1196 = sld [smem:[#allocation7 + %s1195]]
        %v1197 = vld [vmem:[%s416] sm:$0xff]
        %v1198 = vld [vmem:[%s416 + $0x8] sm:$0xf]
        %v1199 = vstv %s1196
        %v1200 = vmul.f32 %v1199, %v1197
        %v1201 = vmul.f32 %v1199, %v1198
        %v1202 = vadd.f32 %v1193, %v1200
        %v1203 = vadd.f32 %v1194, %v1201
        %s1204 = sadd.s32 %s1051, 17
        %s1205 = sld [smem:[#allocation7 + %s1204]]
        %v1206 = vld [vmem:[%s429] sm:$0xff]
        %v1207 = vld [vmem:[%s429 + $0x8] sm:$0xf]
        %v1208 = vstv %s1205
        %v1209 = vmul.f32 %v1208, %v1206
        %v1210 = vmul.f32 %v1208, %v1207
        %v1211 = vadd.f32 %v1202, %v1209
        %v1212 = vadd.f32 %v1203, %v1210
        %s1213 = sadd.s32 %s1051, 18
        %s1214 = sld [smem:[#allocation7 + %s1213]]
        %v1215 = vld [vmem:[%s435] sm:$0xff]
        %v1216 = vld [vmem:[%s435 + $0x8] sm:$0xf]
        %v1217 = vstv %s1214
        %v1218 = vmul.f32 %v1217, %v1215
        %v1219 = vmul.f32 %v1217, %v1216
        %v1220 = vadd.f32 %v1211, %v1218
        %v1221 = vadd.f32 %v1212, %v1219
        %s1222 = sadd.s32 %s1051, 19
        %s1223 = sld [smem:[#allocation7 + %s1222]]
        %v1224 = vld [vmem:[%s448] sm:$0xff]
        %v1225 = vld [vmem:[%s448 + $0x8] sm:$0xf]
        %v1226 = vstv %s1223
        %v1227 = vmul.f32 %v1226, %v1224
        %v1228 = vmul.f32 %v1226, %v1225
        %v1229 = vadd.f32 %v1220, %v1227
        %v1230 = vadd.f32 %v1221, %v1228
        %s1231 = sadd.s32 %s1051, 20
        %s1232 = sld [smem:[#allocation7 + %s1231]]
        %v1233 = vld [vmem:[%s461] sm:$0xff]
        %v1234 = vld [vmem:[%s461 + $0x8] sm:$0xf]
        %v1235 = vstv %s1232
        %v1236 = vmul.f32 %v1235, %v1233
        %v1237 = vmul.f32 %v1235, %v1234
        %v1238 = vadd.f32 %v1229, %v1236
        %v1239 = vadd.f32 %v1230, %v1237
        %s1240 = sadd.s32 %s1051, 21
        %s1241 = sld [smem:[#allocation7 + %s1240]]
        %v1242 = vld [vmem:[%s466] sm:$0xff]
        %v1243 = vld [vmem:[%s466 + $0x8] sm:$0xf]
        %v1244 = vstv %s1241
        %v1245 = vmul.f32 %v1244, %v1242
        %v1246 = vmul.f32 %v1244, %v1243
        %v1247 = vadd.f32 %v1238, %v1245
        %v1248 = vadd.f32 %v1239, %v1246
        %s1249 = sadd.s32 %s1051, 22
        %s1250 = sld [smem:[#allocation7 + %s1249]]
        %v1251 = vld [vmem:[%s479] sm:$0xff]
        %v1252 = vld [vmem:[%s479 + $0x8] sm:$0xf]
        %v1253 = vstv %s1250
        %v1254 = vmul.f32 %v1253, %v1251
        %v1255 = vmul.f32 %v1253, %v1252
        %v1256 = vadd.f32 %v1247, %v1254
        %v1257 = vadd.f32 %v1248, %v1255
        %s1258 = sadd.s32 %s1051, 23
        %s1259 = sld [smem:[#allocation7 + %s1258]]
        %v1260 = vld [vmem:[%s492] sm:$0xff]
        %v1261 = vld [vmem:[%s492 + $0x8] sm:$0xf]
        %v1262 = vstv %s1259
        %v1263 = vmul.f32 %v1262, %v1260
        %v1264 = vmul.f32 %v1262, %v1261
        %v1265 = vadd.f32 %v1256, %v1263
        %v1266 = vadd.f32 %v1257, %v1264
        %s1267 = sadd.s32 %s1051, 24
        %s1268 = sld [smem:[#allocation7 + %s1267]]
        %v1269 = vld [vmem:[%s497] sm:$0xff]
        %v1270 = vld [vmem:[%s497 + $0x8] sm:$0xf]
        %v1271 = vstv %s1268
        %v1272 = vmul.f32 %v1271, %v1269
        %v1273 = vmul.f32 %v1271, %v1270
        %v1274 = vadd.f32 %v1265, %v1272
        %v1275 = vadd.f32 %v1266, %v1273
        %s1276 = sadd.s32 %s1051, 25
        %s1277 = sld [smem:[#allocation7 + %s1276]]
        %v1278 = vld [vmem:[%s510] sm:$0xff]
        %v1279 = vld [vmem:[%s510 + $0x8] sm:$0xf]
        %v1280 = vstv %s1277
        %v1281 = vmul.f32 %v1280, %v1278
        %v1282 = vmul.f32 %v1280, %v1279
        %v1283 = vadd.f32 %v1274, %v1281
        %v1284 = vadd.f32 %v1275, %v1282
        %s1285 = sadd.s32 %s1051, 26
        %s1286 = sld [smem:[#allocation7 + %s1285]]
        %v1287 = vld [vmem:[%s523] sm:$0xff]
        %v1288 = vld [vmem:[%s523 + $0x8] sm:$0xf]
        %v1289 = vstv %s1286
        %v1290 = vmul.f32 %v1289, %v1287
        %v1291 = vmul.f32 %v1289, %v1288
        %v1292 = vadd.f32 %v1283, %v1290
        %v1293 = vadd.f32 %v1284, %v1291
        %s1294 = sld [smem:[#allocation8 + %s1050]]
        %v1295 = vstv %s1294
        %v1296 = vadd.f32 %v1292, %v1295
        %v1297 = vadd.f32 %v1293, %v1295
        %v1298 = vxor.u32 %v1296, 2147483648
        %v1299 = vxor.u32 %v1297, 2147483648
        %v1300 = vmul.f32 %v1298, 1.442695
        %v1301 = vpow.pop %v1300
        %v1302 = vmul.f32 %v1299, 1.442695
        %v1303 = vpow.pop %v1302
        %v1304 = vadd.f32 %v1301, 1.0
        %v1305 = vadd.f32 %v1303, 1.0
        %v1306 = vrcp.pop %v1304
        %v1307 = vmul.f32 1.0, %v1306
        %v1308 = vrcp.pop %v1305
        %v1309 = vmul.f32 1.0, %v1308
        %s1310 = scalar_lea.vmem %s241, 32
        %1311 = vst.msk [vmem:[%s1310] sm:$0xff] %vm246, %v1307
        %1312 = vst.msk [vmem:[%s1310 + $0x8] sm:$0xf] %vm248, %v1309
        %s1313 = sadd.s32 %s243, 3
        %s1314 = smul.u32 %s1313, 128
        %s1315 = sld [smem:[#allocation7 + %s1314]]
        %v1316 = vld [vmem:[#allocation2] sm:$0xff]
        %v1317 = vld [vmem:[#allocation2 + $0x8] sm:$0xf]
        %v1318 = vstv %s1315
        %v1319 = vmul.f32 %v1318, %v1316
        %v1320 = vmul.f32 %v1318, %v1317
        %v1321 = vadd.f32 %v1319, 0.0
        %v1322 = vadd.f32 %v1320, 0.0
        %s1323 = sadd.s32 %s1314, 1
        %s1324 = sld [smem:[#allocation7 + %s1323]]
        %v1325 = vld [vmem:[%s260] sm:$0xff]
        %v1326 = vld [vmem:[%s260 + $0x8] sm:$0xf]
        %v1327 = vstv %s1324
        %v1328 = vmul.f32 %v1327, %v1325
        %v1329 = vmul.f32 %v1327, %v1326
        %v1330 = vadd.f32 %v1321, %v1328
        %v1331 = vadd.f32 %v1322, %v1329
        %s1332 = sadd.s32 %s1314, 2
        %s1333 = sld [smem:[#allocation7 + %s1332]]
        %v1334 = vld [vmem:[%s273] sm:$0xff]
        %v1335 = vld [vmem:[%s273 + $0x8] sm:$0xf]
        %v1336 = vstv %s1333
        %v1337 = vmul.f32 %v1336, %v1334
        %v1338 = vmul.f32 %v1336, %v1335
        %v1339 = vadd.f32 %v1330, %v1337
        %v1340 = vadd.f32 %v1331, %v1338
        %s1341 = sadd.s32 %s1314, 3
        %s1342 = sld [smem:[#allocation7 + %s1341]]
        %v1343 = vld [vmem:[%s278] sm:$0xff]
        %v1344 = vld [vmem:[%s278 + $0x8] sm:$0xf]
        %v1345 = vstv %s1342
        %v1346 = vmul.f32 %v1345, %v1343
        %v1347 = vmul.f32 %v1345, %v1344
        %v1348 = vadd.f32 %v1339, %v1346
        %v1349 = vadd.f32 %v1340, %v1347
        %s1350 = sadd.s32 %s1314, 4
        %s1351 = sld [smem:[#allocation7 + %s1350]]
        %v1352 = vld [vmem:[%s291] sm:$0xff]
        %v1353 = vld [vmem:[%s291 + $0x8] sm:$0xf]
        %v1354 = vstv %s1351
        %v1355 = vmul.f32 %v1354, %v1352
        %v1356 = vmul.f32 %v1354, %v1353
        %v1357 = vadd.f32 %v1348, %v1355
        %v1358 = vadd.f32 %v1349, %v1356
        %s1359 = sadd.s32 %s1314, 5
        %s1360 = sld [smem:[#allocation7 + %s1359]]
        %v1361 = vld [vmem:[%s304] sm:$0xff]
        %v1362 = vld [vmem:[%s304 + $0x8] sm:$0xf]
        %v1363 = vstv %s1360
        %v1364 = vmul.f32 %v1363, %v1361
        %v1365 = vmul.f32 %v1363, %v1362
        %v1366 = vadd.f32 %v1357, %v1364
        %v1367 = vadd.f32 %v1358, %v1365
        %s1368 = sadd.s32 %s1314, 6
        %s1369 = sld [smem:[#allocation7 + %s1368]]
        %v1370 = vld [vmem:[%s309] sm:$0xff]
        %v1371 = vld [vmem:[%s309 + $0x8] sm:$0xf]
        %v1372 = vstv %s1369
        %v1373 = vmul.f32 %v1372, %v1370
        %v1374 = vmul.f32 %v1372, %v1371
        %v1375 = vadd.f32 %v1366, %v1373
        %v1376 = vadd.f32 %v1367, %v1374
        %s1377 = sadd.s32 %s1314, 7
        %s1378 = sld [smem:[#allocation7 + %s1377]]
        %v1379 = vld [vmem:[%s322] sm:$0xff]
        %v1380 = vld [vmem:[%s322 + $0x8] sm:$0xf]
        %v1381 = vstv %s1378
        %v1382 = vmul.f32 %v1381, %v1379
        %v1383 = vmul.f32 %v1381, %v1380
        %v1384 = vadd.f32 %v1375, %v1382
        %v1385 = vadd.f32 %v1376, %v1383
        %s1386 = sadd.s32 %s1314, 8
        %s1387 = sld [smem:[#allocation7 + %s1386]]
        %v1388 = vld [vmem:[%s335] sm:$0xff]
        %v1389 = vld [vmem:[%s335 + $0x8] sm:$0xf]
        %v1390 = vstv %s1387
        %v1391 = vmul.f32 %v1390, %v1388
        %v1392 = vmul.f32 %v1390, %v1389
        %v1393 = vadd.f32 %v1384, %v1391
        %v1394 = vadd.f32 %v1385, %v1392
        %s1395 = sadd.s32 %s1314, 9
        %s1396 = sld [smem:[#allocation7 + %s1395]]
        %v1397 = vld [vmem:[%s341] sm:$0xff]
        %v1398 = vld [vmem:[%s341 + $0x8] sm:$0xf]
        %v1399 = vstv %s1396
        %v1400 = vmul.f32 %v1399, %v1397
        %v1401 = vmul.f32 %v1399, %v1398
        %v1402 = vadd.f32 %v1393, %v1400
        %v1403 = vadd.f32 %v1394, %v1401
        %s1404 = sadd.s32 %s1314, 10
        %s1405 = sld [smem:[#allocation7 + %s1404]]
        %v1406 = vld [vmem:[%s354] sm:$0xff]
        %v1407 = vld [vmem:[%s354 + $0x8] sm:$0xf]
        %v1408 = vstv %s1405
        %v1409 = vmul.f32 %v1408, %v1406
        %v1410 = vmul.f32 %v1408, %v1407
        %v1411 = vadd.f32 %v1402, %v1409
        %v1412 = vadd.f32 %v1403, %v1410
        %s1413 = sadd.s32 %s1314, 11
        %s1414 = sld [smem:[#allocation7 + %s1413]]
        %v1415 = vld [vmem:[%s367] sm:$0xff]
        %v1416 = vld [vmem:[%s367 + $0x8] sm:$0xf]
        %v1417 = vstv %s1414
        %v1418 = vmul.f32 %v1417, %v1415
        %v1419 = vmul.f32 %v1417, %v1416
        %v1420 = vadd.f32 %v1411, %v1418
        %v1421 = vadd.f32 %v1412, %v1419
        %s1422 = sadd.s32 %s1314, 12
        %s1423 = sld [smem:[#allocation7 + %s1422]]
        %v1424 = vld [vmem:[%s372] sm:$0xff]
        %v1425 = vld [vmem:[%s372 + $0x8] sm:$0xf]
        %v1426 = vstv %s1423
        %v1427 = vmul.f32 %v1426, %v1424
        %v1428 = vmul.f32 %v1426, %v1425
        %v1429 = vadd.f32 %v1420, %v1427
        %v1430 = vadd.f32 %v1421, %v1428
        %s1431 = sadd.s32 %s1314, 13
        %s1432 = sld [smem:[#allocation7 + %s1431]]
        %v1433 = vld [vmem:[%s385] sm:$0xff]
        %v1434 = vld [vmem:[%s385 + $0x8] sm:$0xf]
        %v1435 = vstv %s1432
        %v1436 = vmul.f32 %v1435, %v1433
        %v1437 = vmul.f32 %v1435, %v1434
        %v1438 = vadd.f32 %v1429, %v1436
        %v1439 = vadd.f32 %v1430, %v1437
        %s1440 = sadd.s32 %s1314, 14
        %s1441 = sld [smem:[#allocation7 + %s1440]]
        %v1442 = vld [vmem:[%s398] sm:$0xff]
        %v1443 = vld [vmem:[%s398 + $0x8] sm:$0xf]
        %v1444 = vstv %s1441
        %v1445 = vmul.f32 %v1444, %v1442
        %v1446 = vmul.f32 %v1444, %v1443
        %v1447 = vadd.f32 %v1438, %v1445
        %v1448 = vadd.f32 %v1439, %v1446
        %s1449 = sadd.s32 %s1314, 15
        %s1450 = sld [smem:[#allocation7 + %s1449]]
        %v1451 = vld [vmem:[%s403] sm:$0xff]
        %v1452 = vld [vmem:[%s403 + $0x8] sm:$0xf]
        %v1453 = vstv %s1450
        %v1454 = vmul.f32 %v1453, %v1451
        %v1455 = vmul.f32 %v1453, %v1452
        %v1456 = vadd.f32 %v1447, %v1454
        %v1457 = vadd.f32 %v1448, %v1455
        %s1458 = sadd.s32 %s1314, 16
        %s1459 = sld [smem:[#allocation7 + %s1458]]
        %v1460 = vld [vmem:[%s416] sm:$0xff]
        %v1461 = vld [vmem:[%s416 + $0x8] sm:$0xf]
        %v1462 = vstv %s1459
        %v1463 = vmul.f32 %v1462, %v1460
        %v1464 = vmul.f32 %v1462, %v1461
        %v1465 = vadd.f32 %v1456, %v1463
        %v1466 = vadd.f32 %v1457, %v1464
        %s1467 = sadd.s32 %s1314, 17
        %s1468 = sld [smem:[#allocation7 + %s1467]]
        %v1469 = vld [vmem:[%s429] sm:$0xff]
        %v1470 = vld [vmem:[%s429 + $0x8] sm:$0xf]
        %v1471 = vstv %s1468
        %v1472 = vmul.f32 %v1471, %v1469
        %v1473 = vmul.f32 %v1471, %v1470
        %v1474 = vadd.f32 %v1465, %v1472
        %v1475 = vadd.f32 %v1466, %v1473
        %s1476 = sadd.s32 %s1314, 18
        %s1477 = sld [smem:[#allocation7 + %s1476]]
        %v1478 = vld [vmem:[%s435] sm:$0xff]
        %v1479 = vld [vmem:[%s435 + $0x8] sm:$0xf]
        %v1480 = vstv %s1477
        %v1481 = vmul.f32 %v1480, %v1478
        %v1482 = vmul.f32 %v1480, %v1479
        %v1483 = vadd.f32 %v1474, %v1481
        %v1484 = vadd.f32 %v1475, %v1482
        %s1485 = sadd.s32 %s1314, 19
        %s1486 = sld [smem:[#allocation7 + %s1485]]
        %v1487 = vld [vmem:[%s448] sm:$0xff]
        %v1488 = vld [vmem:[%s448 + $0x8] sm:$0xf]
        %v1489 = vstv %s1486
        %v1490 = vmul.f32 %v1489, %v1487
        %v1491 = vmul.f32 %v1489, %v1488
        %v1492 = vadd.f32 %v1483, %v1490
        %v1493 = vadd.f32 %v1484, %v1491
        %s1494 = sadd.s32 %s1314, 20
        %s1495 = sld [smem:[#allocation7 + %s1494]]
        %v1496 = vld [vmem:[%s461] sm:$0xff]
        %v1497 = vld [vmem:[%s461 + $0x8] sm:$0xf]
        %v1498 = vstv %s1495
        %v1499 = vmul.f32 %v1498, %v1496
        %v1500 = vmul.f32 %v1498, %v1497
        %v1501 = vadd.f32 %v1492, %v1499
        %v1502 = vadd.f32 %v1493, %v1500
        %s1503 = sadd.s32 %s1314, 21
        %s1504 = sld [smem:[#allocation7 + %s1503]]
        %v1505 = vld [vmem:[%s466] sm:$0xff]
        %v1506 = vld [vmem:[%s466 + $0x8] sm:$0xf]
        %v1507 = vstv %s1504
        %v1508 = vmul.f32 %v1507, %v1505
        %v1509 = vmul.f32 %v1507, %v1506
        %v1510 = vadd.f32 %v1501, %v1508
        %v1511 = vadd.f32 %v1502, %v1509
        %s1512 = sadd.s32 %s1314, 22
        %s1513 = sld [smem:[#allocation7 + %s1512]]
        %v1514 = vld [vmem:[%s479] sm:$0xff]
        %v1515 = vld [vmem:[%s479 + $0x8] sm:$0xf]
        %v1516 = vstv %s1513
        %v1517 = vmul.f32 %v1516, %v1514
        %v1518 = vmul.f32 %v1516, %v1515
        %v1519 = vadd.f32 %v1510, %v1517
        %v1520 = vadd.f32 %v1511, %v1518
        %s1521 = sadd.s32 %s1314, 23
        %s1522 = sld [smem:[#allocation7 + %s1521]]
        %v1523 = vld [vmem:[%s492] sm:$0xff]
        %v1524 = vld [vmem:[%s492 + $0x8] sm:$0xf]
        %v1525 = vstv %s1522
        %v1526 = vmul.f32 %v1525, %v1523
        %v1527 = vmul.f32 %v1525, %v1524
        %v1528 = vadd.f32 %v1519, %v1526
        %v1529 = vadd.f32 %v1520, %v1527
        %s1530 = sadd.s32 %s1314, 24
        %s1531 = sld [smem:[#allocation7 + %s1530]]
        %v1532 = vld [vmem:[%s497] sm:$0xff]
        %v1533 = vld [vmem:[%s497 + $0x8] sm:$0xf]
        %v1534 = vstv %s1531
        %v1535 = vmul.f32 %v1534, %v1532
        %v1536 = vmul.f32 %v1534, %v1533
        %v1537 = vadd.f32 %v1528, %v1535
        %v1538 = vadd.f32 %v1529, %v1536
        %s1539 = sadd.s32 %s1314, 25
        %s1540 = sld [smem:[#allocation7 + %s1539]]
        %v1541 = vld [vmem:[%s510] sm:$0xff]
        %v1542 = vld [vmem:[%s510 + $0x8] sm:$0xf]
        %v1543 = vstv %s1540
        %v1544 = vmul.f32 %v1543, %v1541
        %v1545 = vmul.f32 %v1543, %v1542
        %v1546 = vadd.f32 %v1537, %v1544
        %v1547 = vadd.f32 %v1538, %v1545
        %s1548 = sadd.s32 %s1314, 26
        %s1549 = sld [smem:[#allocation7 + %s1548]]
        %v1550 = vld [vmem:[%s523] sm:$0xff]
        %v1551 = vld [vmem:[%s523 + $0x8] sm:$0xf]
        %v1552 = vstv %s1549
        %v1553 = vmul.f32 %v1552, %v1550
        %v1554 = vmul.f32 %v1552, %v1551
        %v1555 = vadd.f32 %v1546, %v1553
        %v1556 = vadd.f32 %v1547, %v1554
        %s1557 = sld [smem:[#allocation8 + %s1313]]
        %v1558 = vstv %s1557
        %v1559 = vadd.f32 %v1555, %v1558
        %v1560 = vadd.f32 %v1556, %v1558
        %v1561 = vxor.u32 %v1559, 2147483648
        %v1562 = vxor.u32 %v1560, 2147483648
        %v1563 = vmul.f32 %v1561, 1.442695
        %v1564 = vpow.pop %v1563
        %v1565 = vmul.f32 %v1562, 1.442695
        %v1566 = vpow.pop %v1565
        %v1567 = vadd.f32 %v1564, 1.0
        %v1568 = vadd.f32 %v1566, 1.0
        %v1569 = vrcp.pop %v1567
        %v1570 = vmul.f32 1.0, %v1569
        %v1571 = vrcp.pop %v1568
        %v1572 = vmul.f32 1.0, %v1571
        %s1573 = scalar_lea.vmem %s241, 48
        %1574 = vst.msk [vmem:[%s1573] sm:$0xff] %vm246, %v1570
        %1575 = vst.msk [vmem:[%s1573 + $0x8] sm:$0xf] %vm248, %v1572
        %s1576 = sadd.s32 %s243, 4
        %s1577 = smul.u32 %s1576, 128
        %s1578 = sld [smem:[#allocation7 + %s1577]]
        %v1579 = vld [vmem:[#allocation2] sm:$0xff]
        %v1580 = vld [vmem:[#allocation2 + $0x8] sm:$0xf]
        %v1581 = vstv %s1578
        %v1582 = vmul.f32 %v1581, %v1579
        %v1583 = vmul.f32 %v1581, %v1580
        %v1584 = vadd.f32 %v1582, 0.0
        %v1585 = vadd.f32 %v1583, 0.0
        %s1586 = sadd.s32 %s1577, 1
        %s1587 = sld [smem:[#allocation7 + %s1586]]
        %v1588 = vld [vmem:[%s260] sm:$0xff]
        %v1589 = vld [vmem:[%s260 + $0x8] sm:$0xf]
        %v1590 = vstv %s1587
        %v1591 = vmul.f32 %v1590, %v1588
        %v1592 = vmul.f32 %v1590, %v1589
        %v1593 = vadd.f32 %v1584, %v1591
        %v1594 = vadd.f32 %v1585, %v1592
        %s1595 = sadd.s32 %s1577, 2
        %s1596 = sld [smem:[#allocation7 + %s1595]]
        %v1597 = vld [vmem:[%s273] sm:$0xff]
        %v1598 = vld [vmem:[%s273 + $0x8] sm:$0xf]
        %v1599 = vstv %s1596
        %v1600 = vmul.f32 %v1599, %v1597
        %v1601 = vmul.f32 %v1599, %v1598
        %v1602 = vadd.f32 %v1593, %v1600
        %v1603 = vadd.f32 %v1594, %v1601
        %s1604 = sadd.s32 %s1577, 3
        %s1605 = sld [smem:[#allocation7 + %s1604]]
        %v1606 = vld [vmem:[%s278] sm:$0xff]
        %v1607 = vld [vmem:[%s278 + $0x8] sm:$0xf]
        %v1608 = vstv %s1605
        %v1609 = vmul.f32 %v1608, %v1606
        %v1610 = vmul.f32 %v1608, %v1607
        %v1611 = vadd.f32 %v1602, %v1609
        %v1612 = vadd.f32 %v1603, %v1610
        %s1613 = sadd.s32 %s1577, 4
        %s1614 = sld [smem:[#allocation7 + %s1613]]
        %v1615 = vld [vmem:[%s291] sm:$0xff]
        %v1616 = vld [vmem:[%s291 + $0x8] sm:$0xf]
        %v1617 = vstv %s1614
        %v1618 = vmul.f32 %v1617, %v1615
        %v1619 = vmul.f32 %v1617, %v1616
        %v1620 = vadd.f32 %v1611, %v1618
        %v1621 = vadd.f32 %v1612, %v1619
        %s1622 = sadd.s32 %s1577, 5
        %s1623 = sld [smem:[#allocation7 + %s1622]]
        %v1624 = vld [vmem:[%s304] sm:$0xff]
        %v1625 = vld [vmem:[%s304 + $0x8] sm:$0xf]
        %v1626 = vstv %s1623
        %v1627 = vmul.f32 %v1626, %v1624
        %v1628 = vmul.f32 %v1626, %v1625
        %v1629 = vadd.f32 %v1620, %v1627
        %v1630 = vadd.f32 %v1621, %v1628
        %s1631 = sadd.s32 %s1577, 6
        %s1632 = sld [smem:[#allocation7 + %s1631]]
        %v1633 = vld [vmem:[%s309] sm:$0xff]
        %v1634 = vld [vmem:[%s309 + $0x8] sm:$0xf]
        %v1635 = vstv %s1632
        %v1636 = vmul.f32 %v1635, %v1633
        %v1637 = vmul.f32 %v1635, %v1634
        %v1638 = vadd.f32 %v1629, %v1636
        %v1639 = vadd.f32 %v1630, %v1637
        %s1640 = sadd.s32 %s1577, 7
        %s1641 = sld [smem:[#allocation7 + %s1640]]
        %v1642 = vld [vmem:[%s322] sm:$0xff]
        %v1643 = vld [vmem:[%s322 + $0x8] sm:$0xf]
        %v1644 = vstv %s1641
        %v1645 = vmul.f32 %v1644, %v1642
        %v1646 = vmul.f32 %v1644, %v1643
        %v1647 = vadd.f32 %v1638, %v1645
        %v1648 = vadd.f32 %v1639, %v1646
        %s1649 = sadd.s32 %s1577, 8
        %s1650 = sld [smem:[#allocation7 + %s1649]]
        %v1651 = vld [vmem:[%s335] sm:$0xff]
        %v1652 = vld [vmem:[%s335 + $0x8] sm:$0xf]
        %v1653 = vstv %s1650
        %v1654 = vmul.f32 %v1653, %v1651
        %v1655 = vmul.f32 %v1653, %v1652
        %v1656 = vadd.f32 %v1647, %v1654
        %v1657 = vadd.f32 %v1648, %v1655
        %s1658 = sadd.s32 %s1577, 9
        %s1659 = sld [smem:[#allocation7 + %s1658]]
        %v1660 = vld [vmem:[%s341] sm:$0xff]
        %v1661 = vld [vmem:[%s341 + $0x8] sm:$0xf]
        %v1662 = vstv %s1659
        %v1663 = vmul.f32 %v1662, %v1660
        %v1664 = vmul.f32 %v1662, %v1661
        %v1665 = vadd.f32 %v1656, %v1663
        %v1666 = vadd.f32 %v1657, %v1664
        %s1667 = sadd.s32 %s1577, 10
        %s1668 = sld [smem:[#allocation7 + %s1667]]
        %v1669 = vld [vmem:[%s354] sm:$0xff]
        %v1670 = vld [vmem:[%s354 + $0x8] sm:$0xf]
        %v1671 = vstv %s1668
        %v1672 = vmul.f32 %v1671, %v1669
        %v1673 = vmul.f32 %v1671, %v1670
        %v1674 = vadd.f32 %v1665, %v1672
        %v1675 = vadd.f32 %v1666, %v1673
        %s1676 = sadd.s32 %s1577, 11
        %s1677 = sld [smem:[#allocation7 + %s1676]]
        %v1678 = vld [vmem:[%s367] sm:$0xff]
        %v1679 = vld [vmem:[%s367 + $0x8] sm:$0xf]
        %v1680 = vstv %s1677
        %v1681 = vmul.f32 %v1680, %v1678
        %v1682 = vmul.f32 %v1680, %v1679
        %v1683 = vadd.f32 %v1674, %v1681
        %v1684 = vadd.f32 %v1675, %v1682
        %s1685 = sadd.s32 %s1577, 12
        %s1686 = sld [smem:[#allocation7 + %s1685]]
        %v1687 = vld [vmem:[%s372] sm:$0xff]
        %v1688 = vld [vmem:[%s372 + $0x8] sm:$0xf]
        %v1689 = vstv %s1686
        %v1690 = vmul.f32 %v1689, %v1687
        %v1691 = vmul.f32 %v1689, %v1688
        %v1692 = vadd.f32 %v1683, %v1690
        %v1693 = vadd.f32 %v1684, %v1691
        %s1694 = sadd.s32 %s1577, 13
        %s1695 = sld [smem:[#allocation7 + %s1694]]
        %v1696 = vld [vmem:[%s385] sm:$0xff]
        %v1697 = vld [vmem:[%s385 + $0x8] sm:$0xf]
        %v1698 = vstv %s1695
        %v1699 = vmul.f32 %v1698, %v1696
        %v1700 = vmul.f32 %v1698, %v1697
        %v1701 = vadd.f32 %v1692, %v1699
        %v1702 = vadd.f32 %v1693, %v1700
        %s1703 = sadd.s32 %s1577, 14
        %s1704 = sld [smem:[#allocation7 + %s1703]]
        %v1705 = vld [vmem:[%s398] sm:$0xff]
        %v1706 = vld [vmem:[%s398 + $0x8] sm:$0xf]
        %v1707 = vstv %s1704
        %v1708 = vmul.f32 %v1707, %v1705
        %v1709 = vmul.f32 %v1707, %v1706
        %v1710 = vadd.f32 %v1701, %v1708
        %v1711 = vadd.f32 %v1702, %v1709
        %s1712 = sadd.s32 %s1577, 15
        %s1713 = sld [smem:[#allocation7 + %s1712]]
        %v1714 = vld [vmem:[%s403] sm:$0xff]
        %v1715 = vld [vmem:[%s403 + $0x8] sm:$0xf]
        %v1716 = vstv %s1713
        %v1717 = vmul.f32 %v1716, %v1714
        %v1718 = vmul.f32 %v1716, %v1715
        %v1719 = vadd.f32 %v1710, %v1717
        %v1720 = vadd.f32 %v1711, %v1718
        %s1721 = sadd.s32 %s1577, 16
        %s1722 = sld [smem:[#allocation7 + %s1721]]
        %v1723 = vld [vmem:[%s416] sm:$0xff]
        %v1724 = vld [vmem:[%s416 + $0x8] sm:$0xf]
        %v1725 = vstv %s1722
        %v1726 = vmul.f32 %v1725, %v1723
        %v1727 = vmul.f32 %v1725, %v1724
        %v1728 = vadd.f32 %v1719, %v1726
        %v1729 = vadd.f32 %v1720, %v1727
        %s1730 = sadd.s32 %s1577, 17
        %s1731 = sld [smem:[#allocation7 + %s1730]]
        %v1732 = vld [vmem:[%s429] sm:$0xff]
        %v1733 = vld [vmem:[%s429 + $0x8] sm:$0xf]
        %v1734 = vstv %s1731
        %v1735 = vmul.f32 %v1734, %v1732
        %v1736 = vmul.f32 %v1734, %v1733
        %v1737 = vadd.f32 %v1728, %v1735
        %v1738 = vadd.f32 %v1729, %v1736
        %s1739 = sadd.s32 %s1577, 18
        %s1740 = sld [smem:[#allocation7 + %s1739]]
        %v1741 = vld [vmem:[%s435] sm:$0xff]
        %v1742 = vld [vmem:[%s435 + $0x8] sm:$0xf]
        %v1743 = vstv %s1740
        %v1744 = vmul.f32 %v1743, %v1741
        %v1745 = vmul.f32 %v1743, %v1742
        %v1746 = vadd.f32 %v1737, %v1744
        %v1747 = vadd.f32 %v1738, %v1745
        %s1748 = sadd.s32 %s1577, 19
        %s1749 = sld [smem:[#allocation7 + %s1748]]
        %v1750 = vld [vmem:[%s448] sm:$0xff]
        %v1751 = vld [vmem:[%s448 + $0x8] sm:$0xf]
        %v1752 = vstv %s1749
        %v1753 = vmul.f32 %v1752, %v1750
        %v1754 = vmul.f32 %v1752, %v1751
        %v1755 = vadd.f32 %v1746, %v1753
        %v1756 = vadd.f32 %v1747, %v1754
        %s1757 = sadd.s32 %s1577, 20
        %s1758 = sld [smem:[#allocation7 + %s1757]]
        %v1759 = vld [vmem:[%s461] sm:$0xff]
        %v1760 = vld [vmem:[%s461 + $0x8] sm:$0xf]
        %v1761 = vstv %s1758
        %v1762 = vmul.f32 %v1761, %v1759
        %v1763 = vmul.f32 %v1761, %v1760
        %v1764 = vadd.f32 %v1755, %v1762
        %v1765 = vadd.f32 %v1756, %v1763
        %s1766 = sadd.s32 %s1577, 21
        %s1767 = sld [smem:[#allocation7 + %s1766]]
        %v1768 = vld [vmem:[%s466] sm:$0xff]
        %v1769 = vld [vmem:[%s466 + $0x8] sm:$0xf]
        %v1770 = vstv %s1767
        %v1771 = vmul.f32 %v1770, %v1768
        %v1772 = vmul.f32 %v1770, %v1769
        %v1773 = vadd.f32 %v1764, %v1771
        %v1774 = vadd.f32 %v1765, %v1772
        %s1775 = sadd.s32 %s1577, 22
        %s1776 = sld [smem:[#allocation7 + %s1775]]
        %v1777 = vld [vmem:[%s479] sm:$0xff]
        %v1778 = vld [vmem:[%s479 + $0x8] sm:$0xf]
        %v1779 = vstv %s1776
        %v1780 = vmul.f32 %v1779, %v1777
        %v1781 = vmul.f32 %v1779, %v1778
        %v1782 = vadd.f32 %v1773, %v1780
        %v1783 = vadd.f32 %v1774, %v1781
        %s1784 = sadd.s32 %s1577, 23
        %s1785 = sld [smem:[#allocation7 + %s1784]]
        %v1786 = vld [vmem:[%s492] sm:$0xff]
        %v1787 = vld [vmem:[%s492 + $0x8] sm:$0xf]
        %v1788 = vstv %s1785
        %v1789 = vmul.f32 %v1788, %v1786
        %v1790 = vmul.f32 %v1788, %v1787
        %v1791 = vadd.f32 %v1782, %v1789
        %v1792 = vadd.f32 %v1783, %v1790
        %s1793 = sadd.s32 %s1577, 24
        %s1794 = sld [smem:[#allocation7 + %s1793]]
        %v1795 = vld [vmem:[%s497] sm:$0xff]
        %v1796 = vld [vmem:[%s497 + $0x8] sm:$0xf]
        %v1797 = vstv %s1794
        %v1798 = vmul.f32 %v1797, %v1795
        %v1799 = vmul.f32 %v1797, %v1796
        %v1800 = vadd.f32 %v1791, %v1798
        %v1801 = vadd.f32 %v1792, %v1799
        %s1802 = sadd.s32 %s1577, 25
        %s1803 = sld [smem:[#allocation7 + %s1802]]
        %v1804 = vld [vmem:[%s510] sm:$0xff]
        %v1805 = vld [vmem:[%s510 + $0x8] sm:$0xf]
        %v1806 = vstv %s1803
        %v1807 = vmul.f32 %v1806, %v1804
        %v1808 = vmul.f32 %v1806, %v1805
        %v1809 = vadd.f32 %v1800, %v1807
        %v1810 = vadd.f32 %v1801, %v1808
        %s1811 = sadd.s32 %s1577, 26
        %s1812 = sld [smem:[#allocation7 + %s1811]]
        %v1813 = vld [vmem:[%s523] sm:$0xff]
        %v1814 = vld [vmem:[%s523 + $0x8] sm:$0xf]
        %v1815 = vstv %s1812
        %v1816 = vmul.f32 %v1815, %v1813
        %v1817 = vmul.f32 %v1815, %v1814
        %v1818 = vadd.f32 %v1809, %v1816
        %v1819 = vadd.f32 %v1810, %v1817
        %s1820 = sld [smem:[#allocation8 + %s1576]]
        %v1821 = vstv %s1820
        %v1822 = vadd.f32 %v1818, %v1821
        %v1823 = vadd.f32 %v1819, %v1821
        %v1824 = vxor.u32 %v1822, 2147483648
        %v1825 = vxor.u32 %v1823, 2147483648
        %v1826 = vmul.f32 %v1824, 1.442695
        %v1827 = vpow.pop %v1826
        %v1828 = vmul.f32 %v1825, 1.442695
        %v1829 = vpow.pop %v1828
        %v1830 = vadd.f32 %v1827, 1.0
        %v1831 = vadd.f32 %v1829, 1.0
        %v1832 = vrcp.pop %v1830
        %v1833 = vmul.f32 1.0, %v1832
        %v1834 = vrcp.pop %v1831
        %v1835 = vmul.f32 1.0, %v1834
        %s1836 = scalar_lea.vmem %s241, 64
        %1837 = vst.msk [vmem:[%s1836] sm:$0xff] %vm246, %v1833
        %1838 = vst.msk [vmem:[%s1836 + $0x8] sm:$0xf] %vm248, %v1835
        %s1839 = sadd.s32 %s243, 5
        %s1840 = smul.u32 %s1839, 128
        %s1841 = sld [smem:[#allocation7 + %s1840]]
        %v1842 = vld [vmem:[#allocation2] sm:$0xff]
        %v1843 = vld [vmem:[#allocation2 + $0x8] sm:$0xf]
        %v1844 = vstv %s1841
        %v1845 = vmul.f32 %v1844, %v1842
        %v1846 = vmul.f32 %v1844, %v1843
        %v1847 = vadd.f32 %v1845, 0.0
        %v1848 = vadd.f32 %v1846, 0.0
        %s1849 = sadd.s32 %s1840, 1
        %s1850 = sld [smem:[#allocation7 + %s1849]]
        %v1851 = vld [vmem:[%s260] sm:$0xff]
        %v1852 = vld [vmem:[%s260 + $0x8] sm:$0xf]
        %v1853 = vstv %s1850
        %v1854 = vmul.f32 %v1853, %v1851
        %v1855 = vmul.f32 %v1853, %v1852
        %v1856 = vadd.f32 %v1847, %v1854
        %v1857 = vadd.f32 %v1848, %v1855
        %s1858 = sadd.s32 %s1840, 2
        %s1859 = sld [smem:[#allocation7 + %s1858]]
        %v1860 = vld [vmem:[%s273] sm:$0xff]
        %v1861 = vld [vmem:[%s273 + $0x8] sm:$0xf]
        %v1862 = vstv %s1859
        %v1863 = vmul.f32 %v1862, %v1860
        %v1864 = vmul.f32 %v1862, %v1861
        %v1865 = vadd.f32 %v1856, %v1863
        %v1866 = vadd.f32 %v1857, %v1864
        %s1867 = sadd.s32 %s1840, 3
        %s1868 = sld [smem:[#allocation7 + %s1867]]
        %v1869 = vld [vmem:[%s278] sm:$0xff]
        %v1870 = vld [vmem:[%s278 + $0x8] sm:$0xf]
        %v1871 = vstv %s1868
        %v1872 = vmul.f32 %v1871, %v1869
        %v1873 = vmul.f32 %v1871, %v1870
        %v1874 = vadd.f32 %v1865, %v1872
        %v1875 = vadd.f32 %v1866, %v1873
        %s1876 = sadd.s32 %s1840, 4
        %s1877 = sld [smem:[#allocation7 + %s1876]]
        %v1878 = vld [vmem:[%s291] sm:$0xff]
        %v1879 = vld [vmem:[%s291 + $0x8] sm:$0xf]
        %v1880 = vstv %s1877
        %v1881 = vmul.f32 %v1880, %v1878
        %v1882 = vmul.f32 %v1880, %v1879
        %v1883 = vadd.f32 %v1874, %v1881
        %v1884 = vadd.f32 %v1875, %v1882
        %s1885 = sadd.s32 %s1840, 5
        %s1886 = sld [smem:[#allocation7 + %s1885]]
        %v1887 = vld [vmem:[%s304] sm:$0xff]
        %v1888 = vld [vmem:[%s304 + $0x8] sm:$0xf]
        %v1889 = vstv %s1886
        %v1890 = vmul.f32 %v1889, %v1887
        %v1891 = vmul.f32 %v1889, %v1888
        %v1892 = vadd.f32 %v1883, %v1890
        %v1893 = vadd.f32 %v1884, %v1891
        %s1894 = sadd.s32 %s1840, 6
        %s1895 = sld [smem:[#allocation7 + %s1894]]
        %v1896 = vld [vmem:[%s309] sm:$0xff]
        %v1897 = vld [vmem:[%s309 + $0x8] sm:$0xf]
        %v1898 = vstv %s1895
        %v1899 = vmul.f32 %v1898, %v1896
        %v1900 = vmul.f32 %v1898, %v1897
        %v1901 = vadd.f32 %v1892, %v1899
        %v1902 = vadd.f32 %v1893, %v1900
        %s1903 = sadd.s32 %s1840, 7
        %s1904 = sld [smem:[#allocation7 + %s1903]]
        %v1905 = vld [vmem:[%s322] sm:$0xff]
        %v1906 = vld [vmem:[%s322 + $0x8] sm:$0xf]
        %v1907 = vstv %s1904
        %v1908 = vmul.f32 %v1907, %v1905
        %v1909 = vmul.f32 %v1907, %v1906
        %v1910 = vadd.f32 %v1901, %v1908
        %v1911 = vadd.f32 %v1902, %v1909
        %s1912 = sadd.s32 %s1840, 8
        %s1913 = sld [smem:[#allocation7 + %s1912]]
        %v1914 = vld [vmem:[%s335] sm:$0xff]
        %v1915 = vld [vmem:[%s335 + $0x8] sm:$0xf]
        %v1916 = vstv %s1913
        %v1917 = vmul.f32 %v1916, %v1914
        %v1918 = vmul.f32 %v1916, %v1915
        %v1919 = vadd.f32 %v1910, %v1917
        %v1920 = vadd.f32 %v1911, %v1918
        %s1921 = sadd.s32 %s1840, 9
        %s1922 = sld [smem:[#allocation7 + %s1921]]
        %v1923 = vld [vmem:[%s341] sm:$0xff]
        %v1924 = vld [vmem:[%s341 + $0x8] sm:$0xf]
        %v1925 = vstv %s1922
        %v1926 = vmul.f32 %v1925, %v1923
        %v1927 = vmul.f32 %v1925, %v1924
        %v1928 = vadd.f32 %v1919, %v1926
        %v1929 = vadd.f32 %v1920, %v1927
        %s1930 = sadd.s32 %s1840, 10
        %s1931 = sld [smem:[#allocation7 + %s1930]]
        %v1932 = vld [vmem:[%s354] sm:$0xff]
        %v1933 = vld [vmem:[%s354 + $0x8] sm:$0xf]
        %v1934 = vstv %s1931
        %v1935 = vmul.f32 %v1934, %v1932
        %v1936 = vmul.f32 %v1934, %v1933
        %v1937 = vadd.f32 %v1928, %v1935
        %v1938 = vadd.f32 %v1929, %v1936
        %s1939 = sadd.s32 %s1840, 11
        %s1940 = sld [smem:[#allocation7 + %s1939]]
        %v1941 = vld [vmem:[%s367] sm:$0xff]
        %v1942 = vld [vmem:[%s367 + $0x8] sm:$0xf]
        %v1943 = vstv %s1940
        %v1944 = vmul.f32 %v1943, %v1941
        %v1945 = vmul.f32 %v1943, %v1942
        %v1946 = vadd.f32 %v1937, %v1944
        %v1947 = vadd.f32 %v1938, %v1945
        %s1948 = sadd.s32 %s1840, 12
        %s1949 = sld [smem:[#allocation7 + %s1948]]
        %v1950 = vld [vmem:[%s372] sm:$0xff]
        %v1951 = vld [vmem:[%s372 + $0x8] sm:$0xf]
        %v1952 = vstv %s1949
        %v1953 = vmul.f32 %v1952, %v1950
        %v1954 = vmul.f32 %v1952, %v1951
        %v1955 = vadd.f32 %v1946, %v1953
        %v1956 = vadd.f32 %v1947, %v1954
        %s1957 = sadd.s32 %s1840, 13
        %s1958 = sld [smem:[#allocation7 + %s1957]]
        %v1959 = vld [vmem:[%s385] sm:$0xff]
        %v1960 = vld [vmem:[%s385 + $0x8] sm:$0xf]
        %v1961 = vstv %s1958
        %v1962 = vmul.f32 %v1961, %v1959
        %v1963 = vmul.f32 %v1961, %v1960
        %v1964 = vadd.f32 %v1955, %v1962
        %v1965 = vadd.f32 %v1956, %v1963
        %s1966 = sadd.s32 %s1840, 14
        %s1967 = sld [smem:[#allocation7 + %s1966]]
        %v1968 = vld [vmem:[%s398] sm:$0xff]
        %v1969 = vld [vmem:[%s398 + $0x8] sm:$0xf]
        %v1970 = vstv %s1967
        %v1971 = vmul.f32 %v1970, %v1968
        %v1972 = vmul.f32 %v1970, %v1969
        %v1973 = vadd.f32 %v1964, %v1971
        %v1974 = vadd.f32 %v1965, %v1972
        %s1975 = sadd.s32 %s1840, 15
        %s1976 = sld [smem:[#allocation7 + %s1975]]
        %v1977 = vld [vmem:[%s403] sm:$0xff]
        %v1978 = vld [vmem:[%s403 + $0x8] sm:$0xf]
        %v1979 = vstv %s1976
        %v1980 = vmul.f32 %v1979, %v1977
        %v1981 = vmul.f32 %v1979, %v1978
        %v1982 = vadd.f32 %v1973, %v1980
        %v1983 = vadd.f32 %v1974, %v1981
        %s1984 = sadd.s32 %s1840, 16
        %s1985 = sld [smem:[#allocation7 + %s1984]]
        %v1986 = vld [vmem:[%s416] sm:$0xff]
        %v1987 = vld [vmem:[%s416 + $0x8] sm:$0xf]
        %v1988 = vstv %s1985
        %v1989 = vmul.f32 %v1988, %v1986
        %v1990 = vmul.f32 %v1988, %v1987
        %v1991 = vadd.f32 %v1982, %v1989
        %v1992 = vadd.f32 %v1983, %v1990
        %s1993 = sadd.s32 %s1840, 17
        %s1994 = sld [smem:[#allocation7 + %s1993]]
        %v1995 = vld [vmem:[%s429] sm:$0xff]
        %v1996 = vld [vmem:[%s429 + $0x8] sm:$0xf]
        %v1997 = vstv %s1994
        %v1998 = vmul.f32 %v1997, %v1995
        %v1999 = vmul.f32 %v1997, %v1996
        %v2000 = vadd.f32 %v1991, %v1998
        %v2001 = vadd.f32 %v1992, %v1999
        %s2002 = sadd.s32 %s1840, 18
        %s2003 = sld [smem:[#allocation7 + %s2002]]
        %v2004 = vld [vmem:[%s435] sm:$0xff]
        %v2005 = vld [vmem:[%s435 + $0x8] sm:$0xf]
        %v2006 = vstv %s2003
        %v2007 = vmul.f32 %v2006, %v2004
        %v2008 = vmul.f32 %v2006, %v2005
        %v2009 = vadd.f32 %v2000, %v2007
        %v2010 = vadd.f32 %v2001, %v2008
        %s2011 = sadd.s32 %s1840, 19
        %s2012 = sld [smem:[#allocation7 + %s2011]]
        %v2013 = vld [vmem:[%s448] sm:$0xff]
        %v2014 = vld [vmem:[%s448 + $0x8] sm:$0xf]
        %v2015 = vstv %s2012
        %v2016 = vmul.f32 %v2015, %v2013
        %v2017 = vmul.f32 %v2015, %v2014
        %v2018 = vadd.f32 %v2009, %v2016
        %v2019 = vadd.f32 %v2010, %v2017
        %s2020 = sadd.s32 %s1840, 20
        %s2021 = sld [smem:[#allocation7 + %s2020]]
        %v2022 = vld [vmem:[%s461] sm:$0xff]
        %v2023 = vld [vmem:[%s461 + $0x8] sm:$0xf]
        %v2024 = vstv %s2021
        %v2025 = vmul.f32 %v2024, %v2022
        %v2026 = vmul.f32 %v2024, %v2023
        %v2027 = vadd.f32 %v2018, %v2025
        %v2028 = vadd.f32 %v2019, %v2026
        %s2029 = sadd.s32 %s1840, 21
        %s2030 = sld [smem:[#allocation7 + %s2029]]
        %v2031 = vld [vmem:[%s466] sm:$0xff]
        %v2032 = vld [vmem:[%s466 + $0x8] sm:$0xf]
        %v2033 = vstv %s2030
        %v2034 = vmul.f32 %v2033, %v2031
        %v2035 = vmul.f32 %v2033, %v2032
        %v2036 = vadd.f32 %v2027, %v2034
        %v2037 = vadd.f32 %v2028, %v2035
        %s2038 = sadd.s32 %s1840, 22
        %s2039 = sld [smem:[#allocation7 + %s2038]]
        %v2040 = vld [vmem:[%s479] sm:$0xff]
        %v2041 = vld [vmem:[%s479 + $0x8] sm:$0xf]
        %v2042 = vstv %s2039
        %v2043 = vmul.f32 %v2042, %v2040
        %v2044 = vmul.f32 %v2042, %v2041
        %v2045 = vadd.f32 %v2036, %v2043
        %v2046 = vadd.f32 %v2037, %v2044
        %s2047 = sadd.s32 %s1840, 23
        %s2048 = sld [smem:[#allocation7 + %s2047]]
        %v2049 = vld [vmem:[%s492] sm:$0xff]
        %v2050 = vld [vmem:[%s492 + $0x8] sm:$0xf]
        %v2051 = vstv %s2048
        %v2052 = vmul.f32 %v2051, %v2049
        %v2053 = vmul.f32 %v2051, %v2050
        %v2054 = vadd.f32 %v2045, %v2052
        %v2055 = vadd.f32 %v2046, %v2053
        %s2056 = sadd.s32 %s1840, 24
        %s2057 = sld [smem:[#allocation7 + %s2056]]
        %v2058 = vld [vmem:[%s497] sm:$0xff]
        %v2059 = vld [vmem:[%s497 + $0x8] sm:$0xf]
        %v2060 = vstv %s2057
        %v2061 = vmul.f32 %v2060, %v2058
        %v2062 = vmul.f32 %v2060, %v2059
        %v2063 = vadd.f32 %v2054, %v2061
        %v2064 = vadd.f32 %v2055, %v2062
        %s2065 = sadd.s32 %s1840, 25
        %s2066 = sld [smem:[#allocation7 + %s2065]]
        %v2067 = vld [vmem:[%s510] sm:$0xff]
        %v2068 = vld [vmem:[%s510 + $0x8] sm:$0xf]
        %v2069 = vstv %s2066
        %v2070 = vmul.f32 %v2069, %v2067
        %v2071 = vmul.f32 %v2069, %v2068
        %v2072 = vadd.f32 %v2063, %v2070
        %v2073 = vadd.f32 %v2064, %v2071
        %s2074 = sadd.s32 %s1840, 26
        %s2075 = sld [smem:[#allocation7 + %s2074]]
        %v2076 = vld [vmem:[%s523] sm:$0xff]
        %v2077 = vld [vmem:[%s523 + $0x8] sm:$0xf]
        %v2078 = vstv %s2075
        %v2079 = vmul.f32 %v2078, %v2076
        %v2080 = vmul.f32 %v2078, %v2077
        %v2081 = vadd.f32 %v2072, %v2079
        %v2082 = vadd.f32 %v2073, %v2080
        %s2083 = sld [smem:[#allocation8 + %s1839]]
        %v2084 = vstv %s2083
        %v2085 = vadd.f32 %v2081, %v2084
        %v2086 = vadd.f32 %v2082, %v2084
        %v2087 = vxor.u32 %v2085, 2147483648
        %v2088 = vxor.u32 %v2086, 2147483648
        %v2089 = vmul.f32 %v2087, 1.442695
        %v2090 = vpow.pop %v2089
        %v2091 = vmul.f32 %v2088, 1.442695
        %v2092 = vpow.pop %v2091
        %v2093 = vadd.f32 %v2090, 1.0
        %v2094 = vadd.f32 %v2092, 1.0
        %v2095 = vrcp.pop %v2093
        %v2096 = vmul.f32 1.0, %v2095
        %v2097 = vrcp.pop %v2094
        %v2098 = vmul.f32 1.0, %v2097
        %s2099 = scalar_lea.vmem %s241, 80
        %2100 = vst.msk [vmem:[%s2099] sm:$0xff] %vm246, %v2096
        %2101 = vst.msk [vmem:[%s2099 + $0x8] sm:$0xf] %vm248, %v2098
        %s2102 = sadd.s32 %s243, 6
        %s2103 = smul.u32 %s2102, 128
        %s2104 = sld [smem:[#allocation7 + %s2103]]
        %v2105 = vld [vmem:[#allocation2] sm:$0xff]
        %v2106 = vld [vmem:[#allocation2 + $0x8] sm:$0xf]
        %v2107 = vstv %s2104
        %v2108 = vmul.f32 %v2107, %v2105
        %v2109 = vmul.f32 %v2107, %v2106
        %v2110 = vadd.f32 %v2108, 0.0
        %v2111 = vadd.f32 %v2109, 0.0
        %s2112 = sadd.s32 %s2103, 1
        %s2113 = sld [smem:[#allocation7 + %s2112]]
        %v2114 = vld [vmem:[%s260] sm:$0xff]
        %v2115 = vld [vmem:[%s260 + $0x8] sm:$0xf]
        %v2116 = vstv %s2113
        %v2117 = vmul.f32 %v2116, %v2114
        %v2118 = vmul.f32 %v2116, %v2115
        %v2119 = vadd.f32 %v2110, %v2117
        %v2120 = vadd.f32 %v2111, %v2118
        %s2121 = sadd.s32 %s2103, 2
        %s2122 = sld [smem:[#allocation7 + %s2121]]
        %v2123 = vld [vmem:[%s273] sm:$0xff]
        %v2124 = vld [vmem:[%s273 + $0x8] sm:$0xf]
        %v2125 = vstv %s2122
        %v2126 = vmul.f32 %v2125, %v2123
        %v2127 = vmul.f32 %v2125, %v2124
        %v2128 = vadd.f32 %v2119, %v2126
        %v2129 = vadd.f32 %v2120, %v2127
        %s2130 = sadd.s32 %s2103, 3
        %s2131 = sld [smem:[#allocation7 + %s2130]]
        %v2132 = vld [vmem:[%s278] sm:$0xff]
        %v2133 = vld [vmem:[%s278 + $0x8] sm:$0xf]
        %v2134 = vstv %s2131
        %v2135 = vmul.f32 %v2134, %v2132
        %v2136 = vmul.f32 %v2134, %v2133
        %v2137 = vadd.f32 %v2128, %v2135
        %v2138 = vadd.f32 %v2129, %v2136
        %s2139 = sadd.s32 %s2103, 4
        %s2140 = sld [smem:[#allocation7 + %s2139]]
        %v2141 = vld [vmem:[%s291] sm:$0xff]
        %v2142 = vld [vmem:[%s291 + $0x8] sm:$0xf]
        %v2143 = vstv %s2140
        %v2144 = vmul.f32 %v2143, %v2141
        %v2145 = vmul.f32 %v2143, %v2142
        %v2146 = vadd.f32 %v2137, %v2144
        %v2147 = vadd.f32 %v2138, %v2145
        %s2148 = sadd.s32 %s2103, 5
        %s2149 = sld [smem:[#allocation7 + %s2148]]
        %v2150 = vld [vmem:[%s304] sm:$0xff]
        %v2151 = vld [vmem:[%s304 + $0x8] sm:$0xf]
        %v2152 = vstv %s2149
        %v2153 = vmul.f32 %v2152, %v2150
        %v2154 = vmul.f32 %v2152, %v2151
        %v2155 = vadd.f32 %v2146, %v2153
        %v2156 = vadd.f32 %v2147, %v2154
        %s2157 = sadd.s32 %s2103, 6
        %s2158 = sld [smem:[#allocation7 + %s2157]]
        %v2159 = vld [vmem:[%s309] sm:$0xff]
        %v2160 = vld [vmem:[%s309 + $0x8] sm:$0xf]
        %v2161 = vstv %s2158
        %v2162 = vmul.f32 %v2161, %v2159
        %v2163 = vmul.f32 %v2161, %v2160
        %v2164 = vadd.f32 %v2155, %v2162
        %v2165 = vadd.f32 %v2156, %v2163
        %s2166 = sadd.s32 %s2103, 7
        %s2167 = sld [smem:[#allocation7 + %s2166]]
        %v2168 = vld [vmem:[%s322] sm:$0xff]
        %v2169 = vld [vmem:[%s322 + $0x8] sm:$0xf]
        %v2170 = vstv %s2167
        %v2171 = vmul.f32 %v2170, %v2168
        %v2172 = vmul.f32 %v2170, %v2169
        %v2173 = vadd.f32 %v2164, %v2171
        %v2174 = vadd.f32 %v2165, %v2172
        %s2175 = sadd.s32 %s2103, 8
        %s2176 = sld [smem:[#allocation7 + %s2175]]
        %v2177 = vld [vmem:[%s335] sm:$0xff]
        %v2178 = vld [vmem:[%s335 + $0x8] sm:$0xf]
        %v2179 = vstv %s2176
        %v2180 = vmul.f32 %v2179, %v2177
        %v2181 = vmul.f32 %v2179, %v2178
        %v2182 = vadd.f32 %v2173, %v2180
        %v2183 = vadd.f32 %v2174, %v2181
        %s2184 = sadd.s32 %s2103, 9
        %s2185 = sld [smem:[#allocation7 + %s2184]]
        %v2186 = vld [vmem:[%s341] sm:$0xff]
        %v2187 = vld [vmem:[%s341 + $0x8] sm:$0xf]
        %v2188 = vstv %s2185
        %v2189 = vmul.f32 %v2188, %v2186
        %v2190 = vmul.f32 %v2188, %v2187
        %v2191 = vadd.f32 %v2182, %v2189
        %v2192 = vadd.f32 %v2183, %v2190
        %s2193 = sadd.s32 %s2103, 10
        %s2194 = sld [smem:[#allocation7 + %s2193]]
        %v2195 = vld [vmem:[%s354] sm:$0xff]
        %v2196 = vld [vmem:[%s354 + $0x8] sm:$0xf]
        %v2197 = vstv %s2194
        %v2198 = vmul.f32 %v2197, %v2195
        %v2199 = vmul.f32 %v2197, %v2196
        %v2200 = vadd.f32 %v2191, %v2198
        %v2201 = vadd.f32 %v2192, %v2199
        %s2202 = sadd.s32 %s2103, 11
        %s2203 = sld [smem:[#allocation7 + %s2202]]
        %v2204 = vld [vmem:[%s367] sm:$0xff]
        %v2205 = vld [vmem:[%s367 + $0x8] sm:$0xf]
        %v2206 = vstv %s2203
        %v2207 = vmul.f32 %v2206, %v2204
        %v2208 = vmul.f32 %v2206, %v2205
        %v2209 = vadd.f32 %v2200, %v2207
        %v2210 = vadd.f32 %v2201, %v2208
        %s2211 = sadd.s32 %s2103, 12
        %s2212 = sld [smem:[#allocation7 + %s2211]]
        %v2213 = vld [vmem:[%s372] sm:$0xff]
        %v2214 = vld [vmem:[%s372 + $0x8] sm:$0xf]
        %v2215 = vstv %s2212
        %v2216 = vmul.f32 %v2215, %v2213
        %v2217 = vmul.f32 %v2215, %v2214
        %v2218 = vadd.f32 %v2209, %v2216
        %v2219 = vadd.f32 %v2210, %v2217
        %s2220 = sadd.s32 %s2103, 13
        %s2221 = sld [smem:[#allocation7 + %s2220]]
        %v2222 = vld [vmem:[%s385] sm:$0xff]
        %v2223 = vld [vmem:[%s385 + $0x8] sm:$0xf]
        %v2224 = vstv %s2221
        %v2225 = vmul.f32 %v2224, %v2222
        %v2226 = vmul.f32 %v2224, %v2223
        %v2227 = vadd.f32 %v2218, %v2225
        %v2228 = vadd.f32 %v2219, %v2226
        %s2229 = sadd.s32 %s2103, 14
        %s2230 = sld [smem:[#allocation7 + %s2229]]
        %v2231 = vld [vmem:[%s398] sm:$0xff]
        %v2232 = vld [vmem:[%s398 + $0x8] sm:$0xf]
        %v2233 = vstv %s2230
        %v2234 = vmul.f32 %v2233, %v2231
        %v2235 = vmul.f32 %v2233, %v2232
        %v2236 = vadd.f32 %v2227, %v2234
        %v2237 = vadd.f32 %v2228, %v2235
        %s2238 = sadd.s32 %s2103, 15
        %s2239 = sld [smem:[#allocation7 + %s2238]]
        %v2240 = vld [vmem:[%s403] sm:$0xff]
        %v2241 = vld [vmem:[%s403 + $0x8] sm:$0xf]
        %v2242 = vstv %s2239
        %v2243 = vmul.f32 %v2242, %v2240
        %v2244 = vmul.f32 %v2242, %v2241
        %v2245 = vadd.f32 %v2236, %v2243
        %v2246 = vadd.f32 %v2237, %v2244
        %s2247 = sadd.s32 %s2103, 16
        %s2248 = sld [smem:[#allocation7 + %s2247]]
        %v2249 = vld [vmem:[%s416] sm:$0xff]
        %v2250 = vld [vmem:[%s416 + $0x8] sm:$0xf]
        %v2251 = vstv %s2248
        %v2252 = vmul.f32 %v2251, %v2249
        %v2253 = vmul.f32 %v2251, %v2250
        %v2254 = vadd.f32 %v2245, %v2252
        %v2255 = vadd.f32 %v2246, %v2253
        %s2256 = sadd.s32 %s2103, 17
        %s2257 = sld [smem:[#allocation7 + %s2256]]
        %v2258 = vld [vmem:[%s429] sm:$0xff]
        %v2259 = vld [vmem:[%s429 + $0x8] sm:$0xf]
        %v2260 = vstv %s2257
        %v2261 = vmul.f32 %v2260, %v2258
        %v2262 = vmul.f32 %v2260, %v2259
        %v2263 = vadd.f32 %v2254, %v2261
        %v2264 = vadd.f32 %v2255, %v2262
        %s2265 = sadd.s32 %s2103, 18
        %s2266 = sld [smem:[#allocation7 + %s2265]]
        %v2267 = vld [vmem:[%s435] sm:$0xff]
        %v2268 = vld [vmem:[%s435 + $0x8] sm:$0xf]
        %v2269 = vstv %s2266
        %v2270 = vmul.f32 %v2269, %v2267
        %v2271 = vmul.f32 %v2269, %v2268
        %v2272 = vadd.f32 %v2263, %v2270
        %v2273 = vadd.f32 %v2264, %v2271
        %s2274 = sadd.s32 %s2103, 19
        %s2275 = sld [smem:[#allocation7 + %s2274]]
        %v2276 = vld [vmem:[%s448] sm:$0xff]
        %v2277 = vld [vmem:[%s448 + $0x8] sm:$0xf]
        %v2278 = vstv %s2275
        %v2279 = vmul.f32 %v2278, %v2276
        %v2280 = vmul.f32 %v2278, %v2277
        %v2281 = vadd.f32 %v2272, %v2279
        %v2282 = vadd.f32 %v2273, %v2280
        %s2283 = sadd.s32 %s2103, 20
        %s2284 = sld [smem:[#allocation7 + %s2283]]
        %v2285 = vld [vmem:[%s461] sm:$0xff]
        %v2286 = vld [vmem:[%s461 + $0x8] sm:$0xf]
        %v2287 = vstv %s2284
        %v2288 = vmul.f32 %v2287, %v2285
        %v2289 = vmul.f32 %v2287, %v2286
        %v2290 = vadd.f32 %v2281, %v2288
        %v2291 = vadd.f32 %v2282, %v2289
        %s2292 = sadd.s32 %s2103, 21
        %s2293 = sld [smem:[#allocation7 + %s2292]]
        %v2294 = vld [vmem:[%s466] sm:$0xff]
        %v2295 = vld [vmem:[%s466 + $0x8] sm:$0xf]
        %v2296 = vstv %s2293
        %v2297 = vmul.f32 %v2296, %v2294
        %v2298 = vmul.f32 %v2296, %v2295
        %v2299 = vadd.f32 %v2290, %v2297
        %v2300 = vadd.f32 %v2291, %v2298
        %s2301 = sadd.s32 %s2103, 22
        %s2302 = sld [smem:[#allocation7 + %s2301]]
        %v2303 = vld [vmem:[%s479] sm:$0xff]
        %v2304 = vld [vmem:[%s479 + $0x8] sm:$0xf]
        %v2305 = vstv %s2302
        %v2306 = vmul.f32 %v2305, %v2303
        %v2307 = vmul.f32 %v2305, %v2304
        %v2308 = vadd.f32 %v2299, %v2306
        %v2309 = vadd.f32 %v2300, %v2307
        %s2310 = sadd.s32 %s2103, 23
        %s2311 = sld [smem:[#allocation7 + %s2310]]
        %v2312 = vld [vmem:[%s492] sm:$0xff]
        %v2313 = vld [vmem:[%s492 + $0x8] sm:$0xf]
        %v2314 = vstv %s2311
        %v2315 = vmul.f32 %v2314, %v2312
        %v2316 = vmul.f32 %v2314, %v2313
        %v2317 = vadd.f32 %v2308, %v2315
        %v2318 = vadd.f32 %v2309, %v2316
        %s2319 = sadd.s32 %s2103, 24
        %s2320 = sld [smem:[#allocation7 + %s2319]]
        %v2321 = vld [vmem:[%s497] sm:$0xff]
        %v2322 = vld [vmem:[%s497 + $0x8] sm:$0xf]
        %v2323 = vstv %s2320
        %v2324 = vmul.f32 %v2323, %v2321
        %v2325 = vmul.f32 %v2323, %v2322
        %v2326 = vadd.f32 %v2317, %v2324
        %v2327 = vadd.f32 %v2318, %v2325
        %s2328 = sadd.s32 %s2103, 25
        %s2329 = sld [smem:[#allocation7 + %s2328]]
        %v2330 = vld [vmem:[%s510] sm:$0xff]
        %v2331 = vld [vmem:[%s510 + $0x8] sm:$0xf]
        %v2332 = vstv %s2329
        %v2333 = vmul.f32 %v2332, %v2330
        %v2334 = vmul.f32 %v2332, %v2331
        %v2335 = vadd.f32 %v2326, %v2333
        %v2336 = vadd.f32 %v2327, %v2334
        %s2337 = sadd.s32 %s2103, 26
        %s2338 = sld [smem:[#allocation7 + %s2337]]
        %v2339 = vld [vmem:[%s523] sm:$0xff]
        %v2340 = vld [vmem:[%s523 + $0x8] sm:$0xf]
        %v2341 = vstv %s2338
        %v2342 = vmul.f32 %v2341, %v2339
        %v2343 = vmul.f32 %v2341, %v2340
        %v2344 = vadd.f32 %v2335, %v2342
        %v2345 = vadd.f32 %v2336, %v2343
        %s2346 = sld [smem:[#allocation8 + %s2102]]
        %v2347 = vstv %s2346
        %v2348 = vadd.f32 %v2344, %v2347
        %v2349 = vadd.f32 %v2345, %v2347
        %v2350 = vxor.u32 %v2348, 2147483648
        %v2351 = vxor.u32 %v2349, 2147483648
        %v2352 = vmul.f32 %v2350, 1.442695
        %v2353 = vpow.pop %v2352
        %v2354 = vmul.f32 %v2351, 1.442695
        %v2355 = vpow.pop %v2354
        %v2356 = vadd.f32 %v2353, 1.0
        %v2357 = vadd.f32 %v2355, 1.0
        %v2358 = vrcp.pop %v2356
        %v2359 = vmul.f32 1.0, %v2358
        %v2360 = vrcp.pop %v2357
        %v2361 = vmul.f32 1.0, %v2360
        %s2362 = scalar_lea.vmem %s241, 96
        %2363 = vst.msk [vmem:[%s2362] sm:$0xff] %vm246, %v2359
        %2364 = vst.msk [vmem:[%s2362 + $0x8] sm:$0xf] %vm248, %v2361
        %s2365 = sadd.s32 %s243, 7
        %s2366 = smul.u32 %s2365, 128
        %s2367 = sld [smem:[#allocation7 + %s2366]]
        %v2368 = vld [vmem:[#allocation2] sm:$0xff]
        %v2369 = vld [vmem:[#allocation2 + $0x8] sm:$0xf]
        %v2370 = vstv %s2367
        %v2371 = vmul.f32 %v2370, %v2368
        %v2372 = vmul.f32 %v2370, %v2369
        %v2373 = vadd.f32 %v2371, 0.0
        %v2374 = vadd.f32 %v2372, 0.0
        %s2375 = sadd.s32 %s2366, 1
        %s2376 = sld [smem:[#allocation7 + %s2375]]
        %v2377 = vld [vmem:[%s260] sm:$0xff]
        %v2378 = vld [vmem:[%s260 + $0x8] sm:$0xf]
        %v2379 = vstv %s2376
        %v2380 = vmul.f32 %v2379, %v2377
        %v2381 = vmul.f32 %v2379, %v2378
        %v2382 = vadd.f32 %v2373, %v2380
        %v2383 = vadd.f32 %v2374, %v2381
        %s2384 = sadd.s32 %s2366, 2
        %s2385 = sld [smem:[#allocation7 + %s2384]]
        %v2386 = vld [vmem:[%s273] sm:$0xff]
        %v2387 = vld [vmem:[%s273 + $0x8] sm:$0xf]
        %v2388 = vstv %s2385
        %v2389 = vmul.f32 %v2388, %v2386
        %v2390 = vmul.f32 %v2388, %v2387
        %v2391 = vadd.f32 %v2382, %v2389
        %v2392 = vadd.f32 %v2383, %v2390
        %s2393 = sadd.s32 %s2366, 3
        %s2394 = sld [smem:[#allocation7 + %s2393]]
        %v2395 = vld [vmem:[%s278] sm:$0xff]
        %v2396 = vld [vmem:[%s278 + $0x8] sm:$0xf]
        %v2397 = vstv %s2394
        %v2398 = vmul.f32 %v2397, %v2395
        %v2399 = vmul.f32 %v2397, %v2396
        %v2400 = vadd.f32 %v2391, %v2398
        %v2401 = vadd.f32 %v2392, %v2399
        %s2402 = sadd.s32 %s2366, 4
        %s2403 = sld [smem:[#allocation7 + %s2402]]
        %v2404 = vld [vmem:[%s291] sm:$0xff]
        %v2405 = vld [vmem:[%s291 + $0x8] sm:$0xf]
        %v2406 = vstv %s2403
        %v2407 = vmul.f32 %v2406, %v2404
        %v2408 = vmul.f32 %v2406, %v2405
        %v2409 = vadd.f32 %v2400, %v2407
        %v2410 = vadd.f32 %v2401, %v2408
        %s2411 = sadd.s32 %s2366, 5
        %s2412 = sld [smem:[#allocation7 + %s2411]]
        %v2413 = vld [vmem:[%s304] sm:$0xff]
        %v2414 = vld [vmem:[%s304 + $0x8] sm:$0xf]
        %v2415 = vstv %s2412
        %v2416 = vmul.f32 %v2415, %v2413
        %v2417 = vmul.f32 %v2415, %v2414
        %v2418 = vadd.f32 %v2409, %v2416
        %v2419 = vadd.f32 %v2410, %v2417
        %s2420 = sadd.s32 %s2366, 6
        %s2421 = sld [smem:[#allocation7 + %s2420]]
        %v2422 = vld [vmem:[%s309] sm:$0xff]
        %v2423 = vld [vmem:[%s309 + $0x8] sm:$0xf]
        %v2424 = vstv %s2421
        %v2425 = vmul.f32 %v2424, %v2422
        %v2426 = vmul.f32 %v2424, %v2423
        %v2427 = vadd.f32 %v2418, %v2425
        %v2428 = vadd.f32 %v2419, %v2426
        %s2429 = sadd.s32 %s2366, 7
        %s2430 = sld [smem:[#allocation7 + %s2429]]
        %v2431 = vld [vmem:[%s322] sm:$0xff]
        %v2432 = vld [vmem:[%s322 + $0x8] sm:$0xf]
        %v2433 = vstv %s2430
        %v2434 = vmul.f32 %v2433, %v2431
        %v2435 = vmul.f32 %v2433, %v2432
        %v2436 = vadd.f32 %v2427, %v2434
        %v2437 = vadd.f32 %v2428, %v2435
        %s2438 = sadd.s32 %s2366, 8
        %s2439 = sld [smem:[#allocation7 + %s2438]]
        %v2440 = vld [vmem:[%s335] sm:$0xff]
        %v2441 = vld [vmem:[%s335 + $0x8] sm:$0xf]
        %v2442 = vstv %s2439
        %v2443 = vmul.f32 %v2442, %v2440
        %v2444 = vmul.f32 %v2442, %v2441
        %v2445 = vadd.f32 %v2436, %v2443
        %v2446 = vadd.f32 %v2437, %v2444
        %s2447 = sadd.s32 %s2366, 9
        %s2448 = sld [smem:[#allocation7 + %s2447]]
        %v2449 = vld [vmem:[%s341] sm:$0xff]
        %v2450 = vld [vmem:[%s341 + $0x8] sm:$0xf]
        %v2451 = vstv %s2448
        %v2452 = vmul.f32 %v2451, %v2449
        %v2453 = vmul.f32 %v2451, %v2450
        %v2454 = vadd.f32 %v2445, %v2452
        %v2455 = vadd.f32 %v2446, %v2453
        %s2456 = sadd.s32 %s2366, 10
        %s2457 = sld [smem:[#allocation7 + %s2456]]
        %v2458 = vld [vmem:[%s354] sm:$0xff]
        %v2459 = vld [vmem:[%s354 + $0x8] sm:$0xf]
        %v2460 = vstv %s2457
        %v2461 = vmul.f32 %v2460, %v2458
        %v2462 = vmul.f32 %v2460, %v2459
        %v2463 = vadd.f32 %v2454, %v2461
        %v2464 = vadd.f32 %v2455, %v2462
        %s2465 = sadd.s32 %s2366, 11
        %s2466 = sld [smem:[#allocation7 + %s2465]]
        %v2467 = vld [vmem:[%s367] sm:$0xff]
        %v2468 = vld [vmem:[%s367 + $0x8] sm:$0xf]
        %v2469 = vstv %s2466
        %v2470 = vmul.f32 %v2469, %v2467
        %v2471 = vmul.f32 %v2469, %v2468
        %v2472 = vadd.f32 %v2463, %v2470
        %v2473 = vadd.f32 %v2464, %v2471
        %s2474 = sadd.s32 %s2366, 12
        %s2475 = sld [smem:[#allocation7 + %s2474]]
        %v2476 = vld [vmem:[%s372] sm:$0xff]
        %v2477 = vld [vmem:[%s372 + $0x8] sm:$0xf]
        %v2478 = vstv %s2475
        %v2479 = vmul.f32 %v2478, %v2476
        %v2480 = vmul.f32 %v2478, %v2477
        %v2481 = vadd.f32 %v2472, %v2479
        %v2482 = vadd.f32 %v2473, %v2480
        %s2483 = sadd.s32 %s2366, 13
        %s2484 = sld [smem:[#allocation7 + %s2483]]
        %v2485 = vld [vmem:[%s385] sm:$0xff]
        %v2486 = vld [vmem:[%s385 + $0x8] sm:$0xf]
        %v2487 = vstv %s2484
        %v2488 = vmul.f32 %v2487, %v2485
        %v2489 = vmul.f32 %v2487, %v2486
        %v2490 = vadd.f32 %v2481, %v2488
        %v2491 = vadd.f32 %v2482, %v2489
        %s2492 = sadd.s32 %s2366, 14
        %s2493 = sld [smem:[#allocation7 + %s2492]]
        %v2494 = vld [vmem:[%s398] sm:$0xff]
        %v2495 = vld [vmem:[%s398 + $0x8] sm:$0xf]
        %v2496 = vstv %s2493
        %v2497 = vmul.f32 %v2496, %v2494
        %v2498 = vmul.f32 %v2496, %v2495
        %v2499 = vadd.f32 %v2490, %v2497
        %v2500 = vadd.f32 %v2491, %v2498
        %s2501 = sadd.s32 %s2366, 15
        %s2502 = sld [smem:[#allocation7 + %s2501]]
        %v2503 = vld [vmem:[%s403] sm:$0xff]
        %v2504 = vld [vmem:[%s403 + $0x8] sm:$0xf]
        %v2505 = vstv %s2502
        %v2506 = vmul.f32 %v2505, %v2503
        %v2507 = vmul.f32 %v2505, %v2504
        %v2508 = vadd.f32 %v2499, %v2506
        %v2509 = vadd.f32 %v2500, %v2507
        %s2510 = sadd.s32 %s2366, 16
        %s2511 = sld [smem:[#allocation7 + %s2510]]
        %v2512 = vld [vmem:[%s416] sm:$0xff]
        %v2513 = vld [vmem:[%s416 + $0x8] sm:$0xf]
        %v2514 = vstv %s2511
        %v2515 = vmul.f32 %v2514, %v2512
        %v2516 = vmul.f32 %v2514, %v2513
        %v2517 = vadd.f32 %v2508, %v2515
        %v2518 = vadd.f32 %v2509, %v2516
        %s2519 = sadd.s32 %s2366, 17
        %s2520 = sld [smem:[#allocation7 + %s2519]]
        %v2521 = vld [vmem:[%s429] sm:$0xff]
        %v2522 = vld [vmem:[%s429 + $0x8] sm:$0xf]
        %v2523 = vstv %s2520
        %v2524 = vmul.f32 %v2523, %v2521
        %v2525 = vmul.f32 %v2523, %v2522
        %v2526 = vadd.f32 %v2517, %v2524
        %v2527 = vadd.f32 %v2518, %v2525
        %s2528 = sadd.s32 %s2366, 18
        %s2529 = sld [smem:[#allocation7 + %s2528]]
        %v2530 = vld [vmem:[%s435] sm:$0xff]
        %v2531 = vld [vmem:[%s435 + $0x8] sm:$0xf]
        %v2532 = vstv %s2529
        %v2533 = vmul.f32 %v2532, %v2530
        %v2534 = vmul.f32 %v2532, %v2531
        %v2535 = vadd.f32 %v2526, %v2533
        %v2536 = vadd.f32 %v2527, %v2534
        %s2537 = sadd.s32 %s2366, 19
        %s2538 = sld [smem:[#allocation7 + %s2537]]
        %v2539 = vld [vmem:[%s448] sm:$0xff]
        %v2540 = vld [vmem:[%s448 + $0x8] sm:$0xf]
        %v2541 = vstv %s2538
        %v2542 = vmul.f32 %v2541, %v2539
        %v2543 = vmul.f32 %v2541, %v2540
        %v2544 = vadd.f32 %v2535, %v2542
        %v2545 = vadd.f32 %v2536, %v2543
        %s2546 = sadd.s32 %s2366, 20
        %s2547 = sld [smem:[#allocation7 + %s2546]]
        %v2548 = vld [vmem:[%s461] sm:$0xff]
        %v2549 = vld [vmem:[%s461 + $0x8] sm:$0xf]
        %v2550 = vstv %s2547
        %v2551 = vmul.f32 %v2550, %v2548
        %v2552 = vmul.f32 %v2550, %v2549
        %v2553 = vadd.f32 %v2544, %v2551
        %v2554 = vadd.f32 %v2545, %v2552
        %s2555 = sadd.s32 %s2366, 21
        %s2556 = sld [smem:[#allocation7 + %s2555]]
        %v2557 = vld [vmem:[%s466] sm:$0xff]
        %v2558 = vld [vmem:[%s466 + $0x8] sm:$0xf]
        %v2559 = vstv %s2556
        %v2560 = vmul.f32 %v2559, %v2557
        %v2561 = vmul.f32 %v2559, %v2558
        %v2562 = vadd.f32 %v2553, %v2560
        %v2563 = vadd.f32 %v2554, %v2561
        %s2564 = sadd.s32 %s2366, 22
        %s2565 = sld [smem:[#allocation7 + %s2564]]
        %v2566 = vld [vmem:[%s479] sm:$0xff]
        %v2567 = vld [vmem:[%s479 + $0x8] sm:$0xf]
        %v2568 = vstv %s2565
        %v2569 = vmul.f32 %v2568, %v2566
        %v2570 = vmul.f32 %v2568, %v2567
        %v2571 = vadd.f32 %v2562, %v2569
        %v2572 = vadd.f32 %v2563, %v2570
        %s2573 = sadd.s32 %s2366, 23
        %s2574 = sld [smem:[#allocation7 + %s2573]]
        %v2575 = vld [vmem:[%s492] sm:$0xff]
        %v2576 = vld [vmem:[%s492 + $0x8] sm:$0xf]
        %v2577 = vstv %s2574
        %v2578 = vmul.f32 %v2577, %v2575
        %v2579 = vmul.f32 %v2577, %v2576
        %v2580 = vadd.f32 %v2571, %v2578
        %v2581 = vadd.f32 %v2572, %v2579
        %s2582 = sadd.s32 %s2366, 24
        %s2583 = sld [smem:[#allocation7 + %s2582]]
        %v2584 = vld [vmem:[%s497] sm:$0xff]
        %v2585 = vld [vmem:[%s497 + $0x8] sm:$0xf]
        %v2586 = vstv %s2583
        %v2587 = vmul.f32 %v2586, %v2584
        %v2588 = vmul.f32 %v2586, %v2585
        %v2589 = vadd.f32 %v2580, %v2587
        %v2590 = vadd.f32 %v2581, %v2588
        %s2591 = sadd.s32 %s2366, 25
        %s2592 = sld [smem:[#allocation7 + %s2591]]
        %v2593 = vld [vmem:[%s510] sm:$0xff]
        %v2594 = vld [vmem:[%s510 + $0x8] sm:$0xf]
        %v2595 = vstv %s2592
        %v2596 = vmul.f32 %v2595, %v2593
        %v2597 = vmul.f32 %v2595, %v2594
        %v2598 = vadd.f32 %v2589, %v2596
        %v2599 = vadd.f32 %v2590, %v2597
        %s2600 = sadd.s32 %s2366, 26
        %s2601 = sld [smem:[#allocation7 + %s2600]]
        %v2602 = vld [vmem:[%s523] sm:$0xff]
        %v2603 = vld [vmem:[%s523 + $0x8] sm:$0xf]
        %v2604 = vstv %s2601
        %v2605 = vmul.f32 %v2604, %v2602
        %v2606 = vmul.f32 %v2604, %v2603
        %v2607 = vadd.f32 %v2598, %v2605
        %v2608 = vadd.f32 %v2599, %v2606
        %s2609 = sld [smem:[#allocation8 + %s2365]]
        %v2610 = vstv %s2609
        %v2611 = vadd.f32 %v2607, %v2610
        %v2612 = vadd.f32 %v2608, %v2610
        %v2613 = vxor.u32 %v2611, 2147483648
        %v2614 = vxor.u32 %v2612, 2147483648
        %v2615 = vmul.f32 %v2613, 1.442695
        %v2616 = vpow.pop %v2615
        %v2617 = vmul.f32 %v2614, 1.442695
        %v2618 = vpow.pop %v2617
        %v2619 = vadd.f32 %v2616, 1.0
        %v2620 = vadd.f32 %v2618, 1.0
        %v2621 = vrcp.pop %v2619
        %v2622 = vmul.f32 1.0, %v2621
        %v2623 = vrcp.pop %v2620
        %v2624 = vmul.f32 1.0, %v2623
        %s2625 = scalar_lea.vmem %s241, 112
        %2626 = vst.msk [vmem:[%s2625] sm:$0xff] %vm246, %v2622
        %2627 = vst.msk [vmem:[%s2625 + $0x8] sm:$0xf] %vm248, %v2624
        %s2628 = smul.u32 8, %s24
        %p2629 = scmp.lt.s32.totalorder %s23, 1
        %s2630 = scalar_select %p2629, %s23, 1
        %p2631 = scmp.lt.s32.totalorder %s2628, 15
        %s2632 = scalar_select %p2631, %s2628, 15
        %s2633 = smul.addr %s2632, 2
        %s2634 = smul.addr %s2630, 32
        %s2635 = sadd.s32 %s2633, %s2634
        %s2636 = smul.addr %s2635, 8
        %s2637 = scalar_lea.vmem %s3, %s2636
        // Predicated region
        $region45: #{tpu_custom_call.1} parent=31 // pred_check
          %p2638 = pneg %p119
        $region46: #{tpu_custom_call.1} parent=31 // pred_check_branch
          %2640 = sbr.rel (%p2638) target = $region48
        $region47: #{tpu_custom_call.1} parent=31 // pred_region
          %s2641 = smul.u32 8, %s24
        $region48: #{tpu_custom_call.1} parent=31 // pred_fallthru
          _
      $region32: #{tpu_custom_call.1} parent=5 // pred_fallthru
        _
      %p2642 = scmp.le.s32.totalorder 2, %s14
      // Predicated region
      $region49: #{tpu_custom_call.1} parent=5 // pred_check
        %p2643 = pneg %p2642
      $region50: #{tpu_custom_call.1} parent=5 // pred_check_branch
        %2645 = sbr.rel (%p2643) target = $region52
      $region51: #{tpu_custom_call.1} parent=5 // pred_region
        %s2646 = ssub.s32 %s14, 2
        // Predicated region
        $region53: #{tpu_custom_call.1} parent=51 // pred_check
          %p2647 = pneg %p125
        $region54: #{tpu_custom_call.1} parent=51 // pred_check_branch
          %2649 = sbr.rel (%p2647) target = $region56
        $region55: #{tpu_custom_call.1} parent=51 // pred_region
          %s2650 = smul.u32 8, %s26
          %p2651 = scmp.lt.s32.totalorder %s25, 1
          %s2652 = scalar_select %p2651, %s25, 1
          %p2653 = scmp.lt.s32.totalorder %s2650, 15
          %s2654 = scalar_select %p2653, %s2650, 15
          %s2655 = smul.addr %s2654, 2
          %s2656 = smul.addr %s2652, 32
          %s2657 = sadd.s32 %s2655, %s2656
          %s2658 = smul.addr %s2657, 8
          %s2659 = scalar_lea.vmem %s3, %s2658
        $region56: #{tpu_custom_call.1} parent=51 // pred_fallthru
          _
      $region52: #{tpu_custom_call.1} parent=5 // pred_fallthru
        _
    $region6: #{tpu_custom_call.1} parent=1 // loop_footer
      %s18 = sadd.s32 1, %s14
    $region7: #{tpu_custom_call.1} parent=1 // loop_footer_branch
      %13 = sbr.rel target = $region3
    $region8: #{tpu_custom_call.1} parent=1 // loop_exit
      _
    %2660 = vsyncpa [#allocation4], 1
    %s2661 = scalar_lea.sflag [#allocation4], 1
    %2662 = vsyncpa %s2661, 1
    %2663 = vsyncpa [#allocation5], 1
    %s2664 = scalar_lea.sflag [#allocation5], 1
    %2665 = vsyncpa %s2664, 1
    %2666 = vsyncpa [#allocation6], 1
    %s2667 = scalar_lea.sflag [#allocation6], 1
    %2668 = vsyncpa %s2667, 1

</llo_original>
